<compile_context>
chip_gen: v7x
topology: tpu7x:2x2x1
jax: 0.10.0
libtpu: 0.0.40
codegen_flags: <defaults>
</compile_context>

<pallas_src>
import math

import jax
import jax.numpy as jnp
from jax.experimental import pallas as pl
from jax.experimental.pallas import tpu as pltpu

# PAT-L ("large") hyperparameters.
PATCH_SIZE = 9
EMBED_DIM = 96
NUM_HEADS = 12
HEAD_DIM = EMBED_DIM // NUM_HEADS
FF_DIM = 256
NUM_LAYERS = 4
LN_EPS = 1e-5


def _layer_norm(x, g, b):
    mu = jnp.mean(x, axis=-1, keepdims=True)
    var = jnp.mean(jnp.square(x - mu), axis=-1, keepdims=True)
    return (x - mu) * jax.lax.rsqrt(var + LN_EPS) * g + b


def init_params(key, num_patches):
    """Deterministic synthetic parameter init (xavier-uniform weights, zero biases)."""
    ks = iter(jax.random.split(key, 20))
    L, D, F = NUM_LAYERS, EMBED_DIM, FF_DIM

    def xavier(shape):
        fan_in, fan_out = shape[-2], shape[-1]
        lim = math.sqrt(6.0 / (fan_in + fan_out))
        return jax.random.uniform(next(ks), shape, jnp.float32, minval=-lim, maxval=lim)

    return dict(
        w_pe=xavier((PATCH_SIZE, D)),
        b_pe=jnp.zeros((1, D), jnp.float32),
        pos=0.02 * jax.random.normal(next(ks), (num_patches, D), jnp.float32),
        wq=xavier((L, D, D)), bq=jnp.zeros((L, 1, D), jnp.float32),
        wk=xavier((L, D, D)), bk=jnp.zeros((L, 1, D), jnp.float32),
        wv=xavier((L, D, D)), bv=jnp.zeros((L, 1, D), jnp.float32),
        wo=xavier((L, D, D)), bo=jnp.zeros((L, 1, D), jnp.float32),
        ln1_g=jnp.ones((L, 1, D), jnp.float32), ln1_b=jnp.zeros((L, 1, D), jnp.float32),
        ln2_g=jnp.ones((L, 1, D), jnp.float32), ln2_b=jnp.zeros((L, 1, D), jnp.float32),
        w1=xavier((L, D, F)), b1=jnp.zeros((L, 1, F), jnp.float32),
        w2=xavier((L, F, D)), b2=jnp.zeros((L, 1, D), jnp.float32),
        w_head=xavier((D, 1)),                  # nn.Linear(96, 1) weight (stored transposed)
        b_head=jnp.zeros((1, 1), jnp.float32),  # nn.init.constant_(bias, 0.0)
    )


def _tpu_defaults():
    """Generation-aware tiling / VMEM-limit / softmax-dtype defaults."""
    kind = ""
    try:
        kind = jax.devices()[0].device_kind.lower()
    except Exception:  # pragma: no cover - no device info available
        pass
    big_vmem = ("v5" in kind) or ("v6" in kind)          # 128 MiB parts
    newer = ("v6" in kind) or ("v7" in kind) or ("7x" in kind)   # bf16 VPU/EUP
    max_tq = 256 if big_vmem else 128                    # conservative on v7x / unknown
    vmem_limit = (96 if big_vmem else 48) * 1024 * 1024
    softmax_dtype = jnp.bfloat16 if newer else jnp.float32
    return max_tq, vmem_limit, softmax_dtype


def _pick_q_block(P, max_tq):
    """Largest multiple-of-16 divisor of P that is <= max_tq (hard error if none)."""
    if P <= max_tq:
        return P
    best = 0
    for d in range(16, max_tq + 1, 16):
        if P % d == 0:
            best = d
    if best == 0:
        raise ValueError(
            f"num_patches={P} has no multiple-of-16 q-block <= {max_tq}; pad the input.")
    return best


def _make_kernel(num_patches, tq, softmax_dtype):
    P, D, H, hd = num_patches, EMBED_DIM, NUM_HEADS, HEAD_DIM
    QB = P // tq
    scale = 1.0 / math.sqrt(hd)
    bf16 = jnp.bfloat16
    f32 = jnp.float32
    sm_dt = softmax_dtype

    def kernel(h0_ref, wq_ref, bq_ref, wk_ref, bk_ref, wv_ref, bv_ref,
               wo_ref, bo_ref, ln1_g_ref, ln1_b_ref, ln2_g_ref, ln2_b_ref,
               w1_ref, b1_ref, w2_ref, b2_ref, w_head_ref, b_head_ref,
               out_ref, h_ref, kt_ref, v_ref):
        l = pl.program_id(1)
        qb = pl.program_id(2)

        # ---- load the (already patch+pos embedded) input once per sample ----
        @pl.when(jnp.logical_and(l == 0, qb == 0))
        def _():
            h_ref[...] = h0_ref[0]

        # ---- per-layer K / V: fused contraction-96 matmuls, once per (b, l) ----
        @pl.when(qb == 0)
        def _():
            h_bf = h_ref[...].astype(bf16)                                   # (P, D)
            k_pk = jnp.dot(h_bf, wk_ref[0], preferred_element_type=f32) + bk_ref[0]
            v_pk = jnp.dot(h_bf, wv_ref[0], preferred_element_type=f32) + bv_ref[0]
            kt_ref[...] = k_pk.T                                             # (D, P) lane-dense keys
            for h in range(H):                                               # head-split once per layer
                v_ref[h] = v_pk[:, h * hd:(h + 1) * hd].astype(bf16)

        # ---- attention + FFN for one query block (exact softmax over all keys) ----
        row0 = pl.multiple_of(qb * tq, tq)
        h_blk = h_ref[pl.ds(row0, tq), :]                                    # (tq, D) f32
        q_pk = (jnp.dot(h_blk.astype(bf16), wq_ref[0],
                        preferred_element_type=f32) + bq_ref[0]) * scale     # (tq, D) f32

        ctx_parts = []
        for h in range(H):
            q_h = q_pk[:, h * hd:(h + 1) * hd]                               # (tq, hd) f32
            kt_h = kt_ref[h * hd:(h + 1) * hd, :]                            # (hd, P) f32
            s = jnp.dot(q_h, kt_h, preferred_element_type=f32)               # (tq, P) f32
            m = jnp.max(s, axis=-1, keepdims=True)
            e = jnp.exp((s - m).astype(sm_dt))                               # bf16 on v6e/v7x
            denom = jnp.sum(e.astype(f32), axis=-1, keepdims=True)           # f32 accumulation
            prob = (e * pl.reciprocal(denom, approx=True).astype(sm_dt)).astype(bf16)
            ctx_parts.append(jnp.dot(prob, v_ref[h], preferred_element_type=f32))
        ctx = jnp.concatenate(ctx_parts, axis=-1)                            # (tq, D) f32

        attn = jnp.dot(ctx.astype(bf16), wo_ref[0],
                       preferred_element_type=f32) + bo_ref[0]               # (tq, D)
        h1 = _layer_norm(h_blk + attn, ln1_g_ref[0], ln1_b_ref[0])
        ff = jnp.dot(h1.astype(bf16), w1_ref[0], preferred_element_type=f32) + b1_ref[0]
        ff = jnp.maximum(ff, 0.0)
        ff = jnp.dot(ff.astype(bf16), w2_ref[0], preferred_element_type=f32) + b2_ref[0]
        h2 = _layer_norm(h1 + ff, ln2_g_ref[0], ln2_b_ref[0])
        h_ref[pl.ds(row0, tq), :] = h2

        # ---- mean-pool over patches + Linear(96, 1) head (last step per sample) ----
        @pl.when(jnp.logical_and(l == pl.num_programs(1) - 1, qb == QB - 1))
        def _():
            pooled = jnp.mean(h_ref[...], axis=0, keepdims=True)             # (1, D)
            logit = jnp.sum(pooled * w_head_ref[...], axis=-1, keepdims=True)
            out_ref[0] = logit + b_head_ref[...]

    return kernel


def pat_depression_forward(x, params):
    """Pallas forward of SimplePATDepressionModel. x: (B, T) float32, T % 9 == 0."""
    B, T = x.shape
    assert T % PATCH_SIZE == 0
    P = T // PATCH_SIZE
    assert P % 16 == 0, "number of patches must be a multiple of 16"
    D = EMBED_DIM
    max_tq, vmem_limit, sm_dt = _tpu_defaults()
    TQ = _pick_q_block(P, max_tq)
    QB = P // TQ
    bf16 = jnp.bfloat16
    p = params

    # Patch embedding + positional embedding in XLA (tiny K=9 matmul: bad MXU shape).
    h0 = x.reshape(B, P, PATCH_SIZE) @ p["w_pe"] + p["b_pe"] + p["pos"]      # (B, P, D) f32

    # bf16 copies of the packed matmul weights (contraction-96 / 256 shapes).
    wq = p["wq"].astype(bf16)
    wk = p["wk"].astype(bf16)
    wv = p["wv"].astype(bf16)
    wo = p["wo"].astype(bf16)
    w1 = p["w1"].astype(bf16)
    w2 = p["w2"].astype(bf16)
    w_head_row = p["w_head"].T                                               # (1, D) f32

    in_arrays = [h0, wq, p["bq"], wk, p["bk"], wv, p["bv"], wo, p["bo"],
                 p["ln1_g"], p["ln1_b"], p["ln2_g"], p["ln2_b"],
                 w1, p["b1"], w2, p["b2"], w_head_row, p["b_head"]]

    def full(a):
        nd = a.ndim
        return pl.BlockSpec(a.shape, lambda b, l, qb, nd=nd: (0,) * nd)

    def per_layer(a):
        nd = a.ndim
        return pl.BlockSpec((1,) + a.shape[1:],
                            lambda b, l, qb, nd=nd: (l,) + (0,) * (nd - 1))

    in_specs = [pl.BlockSpec((1, P, D), lambda b, l, qb: (b, 0, 0)),
                per_layer(wq), per_layer(p["bq"]),
                per_layer(wk), per_layer(p["bk"]),
                per_layer(wv), per_layer(p["bv"]),
                per_layer(wo), per_layer(p["bo"]),
                per_layer(p["ln1_g"]), per_layer(p["ln1_b"]),
                per_layer(p["ln2_g"]), per_layer(p["ln2_b"]),
                per_layer(w1), per_layer(p["b1"]),
                per_layer(w2), per_layer(p["b2"]),
                full(w_head_row), full(p["b_head"])]

    scratch_shapes = [
        pltpu.VMEM((P, D), jnp.float32),                  # residual stream h (per sample)
        pltpu.VMEM((D, P), jnp.float32),                  # K^T, lane-dense (no hd=8 padding)
        pltpu.VMEM((NUM_HEADS, P, HEAD_DIM), bf16),       # V head-major (lane-padded; small)
    ]

    out = pl.pallas_call(
        _make_kernel(P, TQ, sm_dt),
        out_shape=jax.ShapeDtypeStruct((B, 1, 1), jnp.float32),
        grid_spec=pltpu.PrefetchScalarGridSpec(
            num_scalar_prefetch=0,
            grid=(B, NUM_LAYERS, QB),                     # batch | layer | query block
            in_specs=in_specs,
            out_specs=pl.BlockSpec((1, 1, 1), lambda b, l, qb: (b, 0, 0)),
            scratch_shapes=scratch_shapes),
        compiler_params=pltpu.CompilerParams(
            dimension_semantics=("parallel", "arbitrary", "arbitrary"),
            vmem_limit_bytes=vmem_limit),
    )(*in_arrays)
    return out.reshape(B)                                 # matches logits.squeeze()


def reference_forward(x, params, mxu_dtype=jnp.float32, softmax_dtype=jnp.float32):
    """Pure-JAX reference. mxu/softmax dtypes can be set to mirror the kernel's casts."""
    B, T = x.shape
    P = T // PATCH_SIZE
    D, H, hd = EMBED_DIM, NUM_HEADS, HEAD_DIM
    f32 = jnp.float32
    c = lambda a: a.astype(mxu_dtype)
    p = params
    scale = 1.0 / math.sqrt(hd)

    h = x.reshape(B, P, PATCH_SIZE) @ p["w_pe"] + p["b_pe"] + p["pos"]
    for l in range(NUM_LAYERS):
        q = jnp.einsum("bpd,df->bpf", c(h), c(p["wq"][l]), preferred_element_type=f32) + p["bq"][l]
        k = jnp.einsum("bpd,df->bpf", c(h), c(p["wk"][l]), preferred_element_type=f32) + p["bk"][l]
        v = jnp.einsum("bpd,df->bpf", c(h), c(p["wv"][l]), preferred_element_type=f32) + p["bv"][l]
        q = q * scale
        qh = q.reshape(B, P, H, hd)
        kh = k.reshape(B, P, H, hd)
        vh = v.reshape(B, P, H, hd)
        s = jnp.einsum("bqhd,bkhd->bhqk", qh, kh, preferred_element_type=f32)   # f32 scores
        m = jnp.max(s, axis=-1, keepdims=True)
        e = jnp.exp((s - m).astype(softmax_dtype))
        den = jnp.sum(e.astype(f32), axis=-1, keepdims=True)
        a = e.astype(f32) / den
        ctx = jnp.einsum("bhqk,bkhd->bqhd", c(a), c(vh),
                         preferred_element_type=f32).reshape(B, P, D)
        attn = jnp.einsum("bpd,df->bpf", c(ctx), c(p["wo"][l]),
                          preferred_element_type=f32) + p["bo"][l]
        h = _layer_norm(h + attn, p["ln1_g"][l], p["ln1_b"][l])
        ff = jnp.einsum("bpd,df->bpf", c(h), c(p["w1"][l]), preferred_element_type=f32) + p["b1"][l]
        ff = jnp.maximum(ff, 0.0)
        ff = jnp.einsum("bpf,fd->bpd", c(ff), c(p["w2"][l]), preferred_element_type=f32) + p["b2"][l]
        h = _layer_norm(h + ff, p["ln2_g"][l], p["ln2_b"][l])
    emb = h.mean(axis=1)
    return jnp.squeeze(emb @ p["w_head"] + p["b_head"], axis=-1)


if __name__ == "__main__":
    key = jax.random.PRNGKey(0)
    k_x, k_p = jax.random.split(key)
    B, P = 2, 16
    T = P * PATCH_SIZE                      # 144-step toy series (small stand-in for 10080)
    x = jax.random.normal(k_x, (B, T), jnp.float32)
    params = init_params(k_p, P)

    out = jax.block_until_ready(pat_depression_forward(x, params))
    assert out.shape == (B,), out.shape

    _, _, sm_dt = _tpu_defaults()
    ref_matched = reference_forward(x, params, mxu_dtype=jnp.bfloat16, softmax_dtype=sm_dt)
    ref_f32 = reference_forward(x, params, mxu_dtype=jnp.float32, softmax_dtype=jnp.float32)

    err_m = float(jnp.max(jnp.abs(out - ref_matched)))
    err_f = float(jnp.max(jnp.abs(out - ref_f32)))
    tol_m = 1e-2 + 1e-2 * float(jnp.max(jnp.abs(ref_matched)))
    tol_f = 5e-2 + 5e-2 * float(jnp.max(jnp.abs(ref_f32)))
    assert err_m < tol_m, f"mismatch vs precision-matched reference: {err_m} (tol {tol_m})"
    assert err_f < tol_f, f"mismatch vs f32 reference: {err_f} (tol {tol_f})"
    print("KERNEL_OK")
</pallas_src>

<mosaic_0001>
module attributes {stable_mosaic.version = 11 : i64} {
  func.func @kernel(%arg0: i32, %arg1: i32, %arg2: i32, %arg3: memref<1x16x96xf32, #tpu.memory_space<vmem>>, %arg4: memref<1x96x96xbf16, #tpu.memory_space<vmem>>, %arg5: memref<1x1x96xf32, #tpu.memory_space<vmem>>, %arg6: memref<1x96x96xbf16, #tpu.memory_space<vmem>>, %arg7: memref<1x1x96xf32, #tpu.memory_space<vmem>>, %arg8: memref<1x96x96xbf16, #tpu.memory_space<vmem>>, %arg9: memref<1x1x96xf32, #tpu.memory_space<vmem>>, %arg10: memref<1x96x96xbf16, #tpu.memory_space<vmem>>, %arg11: memref<1x1x96xf32, #tpu.memory_space<vmem>>, %arg12: memref<1x1x96xf32, #tpu.memory_space<vmem>>, %arg13: memref<1x1x96xf32, #tpu.memory_space<vmem>>, %arg14: memref<1x1x96xf32, #tpu.memory_space<vmem>>, %arg15: memref<1x1x96xf32, #tpu.memory_space<vmem>>, %arg16: memref<1x96x256xbf16, #tpu.memory_space<vmem>>, %arg17: memref<1x1x256xf32, #tpu.memory_space<vmem>>, %arg18: memref<1x256x96xbf16, #tpu.memory_space<vmem>>, %arg19: memref<1x1x96xf32, #tpu.memory_space<vmem>>, %arg20: memref<1x96xf32, #tpu.memory_space<vmem>>, %arg21: memref<1x1xf32, #tpu.memory_space<vmem>>, %arg22: memref<1x1x1xf32, #tpu.memory_space<vmem>>, %arg23: memref<16x96xf32, #tpu.memory_space<vmem>>, %arg24: memref<96x16xf32, #tpu.memory_space<vmem>>, %arg25: memref<12x16x8xbf16, #tpu.memory_space<vmem>>) attributes {dimension_semantics = [#tpu.dimension_semantics<parallel>, #tpu.dimension_semantics<arbitrary>, #tpu.dimension_semantics<arbitrary>], iteration_bounds = array<i64: 2, 4, 1>, scalar_prefetch = 0 : i64, scratch_operands = 3 : i64, tpu.core_type = #tpu.core_type<tc>, window_params = [{transform_indices = @transform_0, window_bounds = array<i64: 1, 16, 96>}, {transform_indices = @transform_1, window_bounds = array<i64: 1, 96, 96>}, {transform_indices = @transform_2, window_bounds = array<i64: 1, 1, 96>}, {transform_indices = @transform_3, window_bounds = array<i64: 1, 96, 96>}, {transform_indices = @transform_4, window_bounds = array<i64: 1, 1, 96>}, {transform_indices = @transform_5, window_bounds = array<i64: 1, 96, 96>}, {transform_indices = @transform_6, window_bounds = array<i64: 1, 1, 96>}, {transform_indices = @transform_7, window_bounds = array<i64: 1, 96, 96>}, {transform_indices = @transform_8, window_bounds = array<i64: 1, 1, 96>}, {transform_indices = @transform_9, window_bounds = array<i64: 1, 1, 96>}, {transform_indices = @transform_10, window_bounds = array<i64: 1, 1, 96>}, {transform_indices = @transform_11, window_bounds = array<i64: 1, 1, 96>}, {transform_indices = @transform_12, window_bounds = array<i64: 1, 1, 96>}, {transform_indices = @transform_13, window_bounds = array<i64: 1, 96, 256>}, {transform_indices = @transform_14, window_bounds = array<i64: 1, 1, 256>}, {transform_indices = @transform_15, window_bounds = array<i64: 1, 256, 96>}, {transform_indices = @transform_16, window_bounds = array<i64: 1, 1, 96>}, {pipeline_mode = #tpu.pipeline_mode<synchronous>, transform_indices = @transform_17, window_bounds = array<i64: 1, 96>}, {pipeline_mode = #tpu.pipeline_mode<synchronous>, transform_indices = @transform_18, window_bounds = array<i64: 1, 1>}, {transform_indices = @transform_19, window_bounds = array<i64: 1, 1, 1>}]} {
    %c0_i32 = arith.constant 0 : i32
    %0 = arith.cmpi eq, %arg1, %c0_i32 : i32
    %c0_i32_0 = arith.constant 0 : i32
    %1 = arith.cmpi eq, %arg2, %c0_i32_0 : i32
    %2 = arith.andi %0, %1 : i1
    %3 = arith.extui %2 : i1 to i32
    %c0_i32_1 = arith.constant 0 : i32
    %4 = arith.cmpi ne, %3, %c0_i32_1 : i32
    scf.if %4 {
      %c0_145 = arith.constant 0 : index
      %c0_146 = arith.constant 0 : index
      %c0_147 = arith.constant 0 : index
      %314 = vector.load %arg3[%c0_145, %c0_146, %c0_147] : memref<1x16x96xf32, #tpu.memory_space<vmem>>, vector<1x16x96xf32>
      %315 = vector.shape_cast %314 : vector<1x16x96xf32> to vector<16x96xf32>
      %c0_148 = arith.constant 0 : index
      %c0_149 = arith.constant 0 : index
      %316 = vector.load %arg23[%c0_148, %c0_149] : memref<16x96xf32, #tpu.memory_space<vmem>>, vector<16x96xf32>
      tpu.vector_store %arg23[%c0_148, %c0_149], %315 {strides = array<i32>} : memref<16x96xf32, #tpu.memory_space<vmem>>, vector<16x96xf32>,
    } else {
    }
    %c0_i32_2 = arith.constant 0 : i32
    %5 = arith.cmpi eq, %arg2, %c0_i32_2 : i32
    %6 = arith.extui %5 : i1 to i32
    %c0_i32_3 = arith.constant 0 : i32
    %7 = arith.cmpi ne, %6, %c0_i32_3 : i32
    scf.if %7 {
      %c0_145 = arith.constant 0 : index
      %c0_146 = arith.constant 0 : index
      %314 = vector.load %arg23[%c0_145, %c0_146] : memref<16x96xf32, #tpu.memory_space<vmem>>, vector<16x96xf32>
      %315 = arith.truncf %314 : vector<16x96xf32> to vector<16x96xbf16>
      %c0_147 = arith.constant 0 : index
      %c0_148 = arith.constant 0 : index
      %c0_149 = arith.constant 0 : index
      %316 = vector.load %arg6[%c0_147, %c0_148, %c0_149] : memref<1x96x96xbf16, #tpu.memory_space<vmem>>, vector<1x96x96xbf16>
      %317 = vector.shape_cast %316 : vector<1x96x96xbf16> to vector<96x96xbf16>
      %cst_150 = arith.constant dense<0.000000e+00> : vector<16x96xf32>
      %318 = tpu.matmul %315, %317, %cst_150 {dimension_numbers = #tpu.dot_dimension_numbers<[1], [0], [0], [1], [0, 0, 1, 1], [], []>} : vector<16x96xbf16>, vector<96x96xbf16>, vector<16x96xf32> -> vector<16x96xf32>
      %c0_151 = arith.constant 0 : index
      %c0_152 = arith.constant 0 : index
      %c0_153 = arith.constant 0 : index
      %319 = vector.load %arg7[%c0_151, %c0_152, %c0_153] : memref<1x1x96xf32, #tpu.memory_space<vmem>>, vector<1x1x96xf32>
      %320 = vector.shape_cast %319 : vector<1x1x96xf32> to vector<1x96xf32>
      %321 = vector.broadcast %320 : vector<1x96xf32> to vector<16x96xf32>
      %322 = arith.addf %318, %321 : vector<16x96xf32>
      %c0_154 = arith.constant 0 : index
      %c0_155 = arith.constant 0 : index
      %c0_156 = arith.constant 0 : index
      %323 = vector.load %arg8[%c0_154, %c0_155, %c0_156] : memref<1x96x96xbf16, #tpu.memory_space<vmem>>, vector<1x96x96xbf16>
      %324 = vector.shape_cast %323 : vector<1x96x96xbf16> to vector<96x96xbf16>
      %cst_157 = arith.constant dense<0.000000e+00> : vector<16x96xf32>
      %325 = tpu.matmul %315, %324, %cst_157 {dimension_numbers = #tpu.dot_dimension_numbers<[1], [0], [0], [1], [0, 0, 1, 1], [], []>} : vector<16x96xbf16>, vector<96x96xbf16>, vector<16x96xf32> -> vector<16x96xf32>
      %c0_158 = arith.constant 0 : index
      %c0_159 = arith.constant 0 : index
      %c0_160 = arith.constant 0 : index
      %326 = vector.load %arg9[%c0_158, %c0_159, %c0_160] : memref<1x1x96xf32, #tpu.memory_space<vmem>>, vector<1x1x96xf32>
      %327 = vector.shape_cast %326 : vector<1x1x96xf32> to vector<1x96xf32>
      %328 = vector.broadcast %327 : vector<1x96xf32> to vector<16x96xf32>
      %329 = arith.addf %325, %328 : vector<16x96xf32>
      %330 = tpu.transpose %322, [1, 0] : vector<16x96xf32> -> vector<96x16xf32>
      %c0_161 = arith.constant 0 : index
      %c0_162 = arith.constant 0 : index
      %331 = vector.load %arg24[%c0_161, %c0_162] : memref<96x16xf32, #tpu.memory_space<vmem>>, vector<96x16xf32>
      tpu.vector_store %arg24[%c0_161, %c0_162], %330 {strides = array<i32>} : memref<96x16xf32, #tpu.memory_space<vmem>>, vector<96x16xf32>,
      %332 = vector.extract_strided_slice %329 {offsets = [0, 0], sizes = [16, 8], strides = [1, 1]} : vector<16x96xf32> to vector<16x8xf32>
      %333 = arith.truncf %332 : vector<16x8xf32> to vector<16x8xbf16>
      %c0_163 = arith.constant 0 : index
      %c0_164 = arith.constant 0 : index
      %c0_165 = arith.constant 0 : index
      %334 = vector.load %arg25[%c0_163, %c0_164, %c0_165] : memref<12x16x8xbf16, #tpu.memory_space<vmem>>, vector<1x16x8xbf16>
      %335 = vector.shape_cast %334 : vector<1x16x8xbf16> to vector<16x8xbf16>
      %336 = vector.shape_cast %333 : vector<16x8xbf16> to vector<1x16x8xbf16>
      tpu.vector_store %arg25[%c0_163, %c0_164, %c0_165], %336 {strides = array<i32>} : memref<12x16x8xbf16, #tpu.memory_space<vmem>>, vector<1x16x8xbf16>,
      %337 = vector.extract_strided_slice %329 {offsets = [0, 8], sizes = [16, 8], strides = [1, 1]} : vector<16x96xf32> to vector<16x8xf32>
      %338 = arith.truncf %337 : vector<16x8xf32> to vector<16x8xbf16>
      %c1_166 = arith.constant 1 : index
      %c0_167 = arith.constant 0 : index
      %c0_168 = arith.constant 0 : index
      %339 = vector.load %arg25[%c1_166, %c0_167, %c0_168] : memref<12x16x8xbf16, #tpu.memory_space<vmem>>, vector<1x16x8xbf16>
      %340 = vector.shape_cast %339 : vector<1x16x8xbf16> to vector<16x8xbf16>
      %341 = vector.shape_cast %338 : vector<16x8xbf16> to vector<1x16x8xbf16>
      tpu.vector_store %arg25[%c1_166, %c0_167, %c0_168], %341 {strides = array<i32>} : memref<12x16x8xbf16, #tpu.memory_space<vmem>>, vector<1x16x8xbf16>,
      %342 = vector.extract_strided_slice %329 {offsets = [0, 16], sizes = [16, 8], strides = [1, 1]} : vector<16x96xf32> to vector<16x8xf32>
      %343 = arith.truncf %342 : vector<16x8xf32> to vector<16x8xbf16>
      %c2_169 = arith.constant 2 : index
      %c0_170 = arith.constant 0 : index
      %c0_171 = arith.constant 0 : index
      %344 = vector.load %arg25[%c2_169, %c0_170, %c0_171] : memref<12x16x8xbf16, #tpu.memory_space<vmem>>, vector<1x16x8xbf16>
      %345 = vector.shape_cast %344 : vector<1x16x8xbf16> to vector<16x8xbf16>
      %346 = vector.shape_cast %343 : vector<16x8xbf16> to vector<1x16x8xbf16>
      tpu.vector_store %arg25[%c2_169, %c0_170, %c0_171], %346 {strides = array<i32>} : memref<12x16x8xbf16, #tpu.memory_space<vmem>>, vector<1x16x8xbf16>,
      %347 = vector.extract_strided_slice %329 {offsets = [0, 24], sizes = [16, 8], strides = [1, 1]} : vector<16x96xf32> to vector<16x8xf32>
      %348 = arith.truncf %347 : vector<16x8xf32> to vector<16x8xbf16>
      %c3_172 = arith.constant 3 : index
      %c0_173 = arith.constant 0 : index
      %c0_174 = arith.constant 0 : index
      %349 = vector.load %arg25[%c3_172, %c0_173, %c0_174] : memref<12x16x8xbf16, #tpu.memory_space<vmem>>, vector<1x16x8xbf16>
      %350 = vector.shape_cast %349 : vector<1x16x8xbf16> to vector<16x8xbf16>
      %351 = vector.shape_cast %348 : vector<16x8xbf16> to vector<1x16x8xbf16>
      tpu.vector_store %arg25[%c3_172, %c0_173, %c0_174], %351 {strides = array<i32>} : memref<12x16x8xbf16, #tpu.memory_space<vmem>>, vector<1x16x8xbf16>,
      %352 = vector.extract_strided_slice %329 {offsets = [0, 32], sizes = [16, 8], strides = [1, 1]} : vector<16x96xf32> to vector<16x8xf32>
      %353 = arith.truncf %352 : vector<16x8xf32> to vector<16x8xbf16>
      %c4_175 = arith.constant 4 : index
      %c0_176 = arith.constant 0 : index
      %c0_177 = arith.constant 0 : index
      %354 = vector.load %arg25[%c4_175, %c0_176, %c0_177] : memref<12x16x8xbf16, #tpu.memory_space<vmem>>, vector<1x16x8xbf16>
      %355 = vector.shape_cast %354 : vector<1x16x8xbf16> to vector<16x8xbf16>
      %356 = vector.shape_cast %353 : vector<16x8xbf16> to vector<1x16x8xbf16>
      tpu.vector_store %arg25[%c4_175, %c0_176, %c0_177], %356 {strides = array<i32>} : memref<12x16x8xbf16, #tpu.memory_space<vmem>>, vector<1x16x8xbf16>,
      %357 = vector.extract_strided_slice %329 {offsets = [0, 40], sizes = [16, 8], strides = [1, 1]} : vector<16x96xf32> to vector<16x8xf32>
      %358 = arith.truncf %357 : vector<16x8xf32> to vector<16x8xbf16>
      %c5_178 = arith.constant 5 : index
      %c0_179 = arith.constant 0 : index
      %c0_180 = arith.constant 0 : index
      %359 = vector.load %arg25[%c5_178, %c0_179, %c0_180] : memref<12x16x8xbf16, #tpu.memory_space<vmem>>, vector<1x16x8xbf16>
      %360 = vector.shape_cast %359 : vector<1x16x8xbf16> to vector<16x8xbf16>
      %361 = vector.shape_cast %358 : vector<16x8xbf16> to vector<1x16x8xbf16>
      tpu.vector_store %arg25[%c5_178, %c0_179, %c0_180], %361 {strides = array<i32>} : memref<12x16x8xbf16, #tpu.memory_space<vmem>>, vector<1x16x8xbf16>,
      %362 = vector.extract_strided_slice %329 {offsets = [0, 48], sizes = [16, 8], strides = [1, 1]} : vector<16x96xf32> to vector<16x8xf32>
      %363 = arith.truncf %362 : vector<16x8xf32> to vector<16x8xbf16>
      %c6_181 = arith.constant 6 : index
      %c0_182 = arith.constant 0 : index
      %c0_183 = arith.constant 0 : index
      %364 = vector.load %arg25[%c6_181, %c0_182, %c0_183] : memref<12x16x8xbf16, #tpu.memory_space<vmem>>, vector<1x16x8xbf16>
      %365 = vector.shape_cast %364 : vector<1x16x8xbf16> to vector<16x8xbf16>
      %366 = vector.shape_cast %363 : vector<16x8xbf16> to vector<1x16x8xbf16>
      tpu.vector_store %arg25[%c6_181, %c0_182, %c0_183], %366 {strides = array<i32>} : memref<12x16x8xbf16, #tpu.memory_space<vmem>>, vector<1x16x8xbf16>,
      %367 = vector.extract_strided_slice %329 {offsets = [0, 56], sizes = [16, 8], strides = [1, 1]} : vector<16x96xf32> to vector<16x8xf32>
      %368 = arith.truncf %367 : vector<16x8xf32> to vector<16x8xbf16>
      %c7_184 = arith.constant 7 : index
      %c0_185 = arith.constant 0 : index
      %c0_186 = arith.constant 0 : index
      %369 = vector.load %arg25[%c7_184, %c0_185, %c0_186] : memref<12x16x8xbf16, #tpu.memory_space<vmem>>, vector<1x16x8xbf16>
      %370 = vector.shape_cast %369 : vector<1x16x8xbf16> to vector<16x8xbf16>
      %371 = vector.shape_cast %368 : vector<16x8xbf16> to vector<1x16x8xbf16>
      tpu.vector_store %arg25[%c7_184, %c0_185, %c0_186], %371 {strides = array<i32>} : memref<12x16x8xbf16, #tpu.memory_space<vmem>>, vector<1x16x8xbf16>,
      %372 = vector.extract_strided_slice %329 {offsets = [0, 64], sizes = [16, 8], strides = [1, 1]} : vector<16x96xf32> to vector<16x8xf32>
      %373 = arith.truncf %372 : vector<16x8xf32> to vector<16x8xbf16>
      %c8_187 = arith.constant 8 : index
      %c0_188 = arith.constant 0 : index
      %c0_189 = arith.constant 0 : index
      %374 = vector.load %arg25[%c8_187, %c0_188, %c0_189] : memref<12x16x8xbf16, #tpu.memory_space<vmem>>, vector<1x16x8xbf16>
      %375 = vector.shape_cast %374 : vector<1x16x8xbf16> to vector<16x8xbf16>
      %376 = vector.shape_cast %373 : vector<16x8xbf16> to vector<1x16x8xbf16>
      tpu.vector_store %arg25[%c8_187, %c0_188, %c0_189], %376 {strides = array<i32>} : memref<12x16x8xbf16, #tpu.memory_space<vmem>>, vector<1x16x8xbf16>,
      %377 = vector.extract_strided_slice %329 {offsets = [0, 72], sizes = [16, 8], strides = [1, 1]} : vector<16x96xf32> to vector<16x8xf32>
      %378 = arith.truncf %377 : vector<16x8xf32> to vector<16x8xbf16>
      %c9_190 = arith.constant 9 : index
      %c0_191 = arith.constant 0 : index
      %c0_192 = arith.constant 0 : index
      %379 = vector.load %arg25[%c9_190, %c0_191, %c0_192] : memref<12x16x8xbf16, #tpu.memory_space<vmem>>, vector<1x16x8xbf16>
      %380 = vector.shape_cast %379 : vector<1x16x8xbf16> to vector<16x8xbf16>
      %381 = vector.shape_cast %378 : vector<16x8xbf16> to vector<1x16x8xbf16>
      tpu.vector_store %arg25[%c9_190, %c0_191, %c0_192], %381 {strides = array<i32>} : memref<12x16x8xbf16, #tpu.memory_space<vmem>>, vector<1x16x8xbf16>,
      %382 = vector.extract_strided_slice %329 {offsets = [0, 80], sizes = [16, 8], strides = [1, 1]} : vector<16x96xf32> to vector<16x8xf32>
      %383 = arith.truncf %382 : vector<16x8xf32> to vector<16x8xbf16>
      %c10_193 = arith.constant 10 : index
      %c0_194 = arith.constant 0 : index
      %c0_195 = arith.constant 0 : index
      %384 = vector.load %arg25[%c10_193, %c0_194, %c0_195] : memref<12x16x8xbf16, #tpu.memory_space<vmem>>, vector<1x16x8xbf16>
      %385 = vector.shape_cast %384 : vector<1x16x8xbf16> to vector<16x8xbf16>
      %386 = vector.shape_cast %383 : vector<16x8xbf16> to vector<1x16x8xbf16>
      tpu.vector_store %arg25[%c10_193, %c0_194, %c0_195], %386 {strides = array<i32>} : memref<12x16x8xbf16, #tpu.memory_space<vmem>>, vector<1x16x8xbf16>,
      %387 = vector.extract_strided_slice %329 {offsets = [0, 88], sizes = [16, 8], strides = [1, 1]} : vector<16x96xf32> to vector<16x8xf32>
      %388 = arith.truncf %387 : vector<16x8xf32> to vector<16x8xbf16>
      %c11_196 = arith.constant 11 : index
      %c0_197 = arith.constant 0 : index
      %c0_198 = arith.constant 0 : index
      %389 = vector.load %arg25[%c11_196, %c0_197, %c0_198] : memref<12x16x8xbf16, #tpu.memory_space<vmem>>, vector<1x16x8xbf16>
      %390 = vector.shape_cast %389 : vector<1x16x8xbf16> to vector<16x8xbf16>
      %391 = vector.shape_cast %388 : vector<16x8xbf16> to vector<1x16x8xbf16>
      tpu.vector_store %arg25[%c11_196, %c0_197, %c0_198], %391 {strides = array<i32>} : memref<12x16x8xbf16, #tpu.memory_space<vmem>>, vector<1x16x8xbf16>,
    } else {
    }
    %c16_i32 = arith.constant 16 : i32
    %8 = arith.muli %arg2, %c16_i32 : i32
    %9 = tpu.assume_multiple %8, 16 : i32
    %10 = arith.index_cast %9 : i32 to index
    %c0 = arith.constant 0 : index
    %11 = vector.load %arg23[%10, %c0] : memref<16x96xf32, #tpu.memory_space<vmem>>, vector<16x96xf32>
    %12 = arith.truncf %11 : vector<16x96xf32> to vector<16x96xbf16>
    %c0_4 = arith.constant 0 : index
    %c0_5 = arith.constant 0 : index
    %c0_6 = arith.constant 0 : index
    %13 = vector.load %arg4[%c0_4, %c0_5, %c0_6] : memref<1x96x96xbf16, #tpu.memory_space<vmem>>, vector<1x96x96xbf16>
    %14 = vector.shape_cast %13 : vector<1x96x96xbf16> to vector<96x96xbf16>
    %cst = arith.constant dense<0.000000e+00> : vector<16x96xf32>
    %15 = tpu.matmul %12, %14, %cst {dimension_numbers = #tpu.dot_dimension_numbers<[1], [0], [0], [1], [0, 0, 1, 1], [], []>} : vector<16x96xbf16>, vector<96x96xbf16>, vector<16x96xf32> -> vector<16x96xf32>
    %c0_7 = arith.constant 0 : index
    %c0_8 = arith.constant 0 : index
    %c0_9 = arith.constant 0 : index
    %16 = vector.load %arg5[%c0_7, %c0_8, %c0_9] : memref<1x1x96xf32, #tpu.memory_space<vmem>>, vector<1x1x96xf32>
    %17 = vector.shape_cast %16 : vector<1x1x96xf32> to vector<1x96xf32>
    %18 = vector.broadcast %17 : vector<1x96xf32> to vector<16x96xf32>
    %19 = arith.addf %15, %18 : vector<16x96xf32>
    %cst_10 = arith.constant 0.353553385 : f32
    %20 = vector.broadcast %cst_10 : f32 to vector<16x96xf32>
    %21 = arith.mulf %19, %20 : vector<16x96xf32>
    %22 = vector.extract_strided_slice %21 {offsets = [0, 0], sizes = [16, 8], strides = [1, 1]} : vector<16x96xf32> to vector<16x8xf32>
    %c0_11 = arith.constant 0 : index
    %c0_12 = arith.constant 0 : index
    %23 = vector.load %arg24[%c0_11, %c0_12] : memref<96x16xf32, #tpu.memory_space<vmem>>, vector<8x16xf32>
    %cst_13 = arith.constant dense<0.000000e+00> : vector<16x16xf32>
    %24 = tpu.matmul %22, %23, %cst_13 {dimension_numbers = #tpu.dot_dimension_numbers<[1], [0], [0], [1], [0, 0, 1, 1], [], []>} : vector<16x8xf32>, vector<8x16xf32>, vector<16x16xf32> -> vector<16x16xf32>
    %cst_14 = arith.constant dense<0xFF800000> : vector<16xf32>
    %25 = vector.multi_reduction <maximumf>, %24, %cst_14 [1] : vector<16x16xf32> to vector<16xf32>
    %26 = vector.shape_cast %25 : vector<16xf32> to vector<16x1xf32>
    %27 = vector.broadcast %26 : vector<16x1xf32> to vector<16x16xf32>
    %28 = arith.subf %24, %27 : vector<16x16xf32>
    %29 = math.exp %28 : vector<16x16xf32>
    %cst_15 = arith.constant dense<0.000000e+00> : vector<16xf32>
    %30 = vector.multi_reduction <add>, %29, %cst_15 [1] : vector<16x16xf32> to vector<16xf32>
    %31 = vector.shape_cast %30 : vector<16xf32> to vector<16x1xf32>
    %32 = tpu.reciprocal %31 {approx = true} : vector<16x1xf32> -> vector<16x1xf32>
    %33 = vector.broadcast %32 : vector<16x1xf32> to vector<16x16xf32>
    %34 = arith.mulf %29, %33 : vector<16x16xf32>
    %35 = arith.truncf %34 : vector<16x16xf32> to vector<16x16xbf16>
    %c0_16 = arith.constant 0 : index
    %c0_17 = arith.constant 0 : index
    %c0_18 = arith.constant 0 : index
    %36 = vector.load %arg25[%c0_16, %c0_17, %c0_18] : memref<12x16x8xbf16, #tpu.memory_space<vmem>>, vector<1x16x8xbf16>
    %37 = vector.shape_cast %36 : vector<1x16x8xbf16> to vector<16x8xbf16>
    %cst_19 = arith.constant dense<0.000000e+00> : vector<16x8xf32>
    %38 = tpu.matmul %35, %37, %cst_19 {dimension_numbers = #tpu.dot_dimension_numbers<[1], [0], [0], [1], [0, 0, 1, 1], [], []>} : vector<16x16xbf16>, vector<16x8xbf16>, vector<16x8xf32> -> vector<16x8xf32>
    %39 = vector.extract_strided_slice %21 {offsets = [0, 8], sizes = [16, 8], strides = [1, 1]} : vector<16x96xf32> to vector<16x8xf32>
    %c8 = arith.constant 8 : index
    %c0_20 = arith.constant 0 : index
    %40 = vector.load %arg24[%c8, %c0_20] : memref<96x16xf32, #tpu.memory_space<vmem>>, vector<8x16xf32>
    %cst_21 = arith.constant dense<0.000000e+00> : vector<16x16xf32>
    %41 = tpu.matmul %39, %40, %cst_21 {dimension_numbers = #tpu.dot_dimension_numbers<[1], [0], [0], [1], [0, 0, 1, 1], [], []>} : vector<16x8xf32>, vector<8x16xf32>, vector<16x16xf32> -> vector<16x16xf32>
    %cst_22 = arith.constant dense<0xFF800000> : vector<16xf32>
    %42 = vector.multi_reduction <maximumf>, %41, %cst_22 [1] : vector<16x16xf32> to vector<16xf32>
    %43 = vector.shape_cast %42 : vector<16xf32> to vector<16x1xf32>
    %44 = vector.broadcast %43 : vector<16x1xf32> to vector<16x16xf32>
    %45 = arith.subf %41, %44 : vector<16x16xf32>
    %46 = math.exp %45 : vector<16x16xf32>
    %cst_23 = arith.constant dense<0.000000e+00> : vector<16xf32>
    %47 = vector.multi_reduction <add>, %46, %cst_23 [1] : vector<16x16xf32> to vector<16xf32>
    %48 = vector.shape_cast %47 : vector<16xf32> to vector<16x1xf32>
    %49 = tpu.reciprocal %48 {approx = true} : vector<16x1xf32> -> vector<16x1xf32>
    %50 = vector.broadcast %49 : vector<16x1xf32> to vector<16x16xf32>
    %51 = arith.mulf %46, %50 : vector<16x16xf32>
    %52 = arith.truncf %51 : vector<16x16xf32> to vector<16x16xbf16>
    %c1 = arith.constant 1 : index
    %c0_24 = arith.constant 0 : index
    %c0_25 = arith.constant 0 : index
    %53 = vector.load %arg25[%c1, %c0_24, %c0_25] : memref<12x16x8xbf16, #tpu.memory_space<vmem>>, vector<1x16x8xbf16>
    %54 = vector.shape_cast %53 : vector<1x16x8xbf16> to vector<16x8xbf16>
    %cst_26 = arith.constant dense<0.000000e+00> : vector<16x8xf32>
    %55 = tpu.matmul %52, %54, %cst_26 {dimension_numbers = #tpu.dot_dimension_numbers<[1], [0], [0], [1], [0, 0, 1, 1], [], []>} : vector<16x16xbf16>, vector<16x8xbf16>, vector<16x8xf32> -> vector<16x8xf32>
    %56 = vector.extract_strided_slice %21 {offsets = [0, 16], sizes = [16, 8], strides = [1, 1]} : vector<16x96xf32> to vector<16x8xf32>
    %c16 = arith.constant 16 : index
    %c0_27 = arith.constant 0 : index
    %57 = vector.load %arg24[%c16, %c0_27] : memref<96x16xf32, #tpu.memory_space<vmem>>, vector<8x16xf32>
    %cst_28 = arith.constant dense<0.000000e+00> : vector<16x16xf32>
    %58 = tpu.matmul %56, %57, %cst_28 {dimension_numbers = #tpu.dot_dimension_numbers<[1], [0], [0], [1], [0, 0, 1, 1], [], []>} : vector<16x8xf32>, vector<8x16xf32>, vector<16x16xf32> -> vector<16x16xf32>
    %cst_29 = arith.constant dense<0xFF800000> : vector<16xf32>
    %59 = vector.multi_reduction <maximumf>, %58, %cst_29 [1] : vector<16x16xf32> to vector<16xf32>
    %60 = vector.shape_cast %59 : vector<16xf32> to vector<16x1xf32>
    %61 = vector.broadcast %60 : vector<16x1xf32> to vector<16x16xf32>
    %62 = arith.subf %58, %61 : vector<16x16xf32>
    %63 = math.exp %62 : vector<16x16xf32>
    %cst_30 = arith.constant dense<0.000000e+00> : vector<16xf32>
    %64 = vector.multi_reduction <add>, %63, %cst_30 [1] : vector<16x16xf32> to vector<16xf32>
    %65 = vector.shape_cast %64 : vector<16xf32> to vector<16x1xf32>
    %66 = tpu.reciprocal %65 {approx = true} : vector<16x1xf32> -> vector<16x1xf32>
    %67 = vector.broadcast %66 : vector<16x1xf32> to vector<16x16xf32>
    %68 = arith.mulf %63, %67 : vector<16x16xf32>
    %69 = arith.truncf %68 : vector<16x16xf32> to vector<16x16xbf16>
    %c2 = arith.constant 2 : index
    %c0_31 = arith.constant 0 : index
    %c0_32 = arith.constant 0 : index
    %70 = vector.load %arg25[%c2, %c0_31, %c0_32] : memref<12x16x8xbf16, #tpu.memory_space<vmem>>, vector<1x16x8xbf16>
    %71 = vector.shape_cast %70 : vector<1x16x8xbf16> to vector<16x8xbf16>
    %cst_33 = arith.constant dense<0.000000e+00> : vector<16x8xf32>
    %72 = tpu.matmul %69, %71, %cst_33 {dimension_numbers = #tpu.dot_dimension_numbers<[1], [0], [0], [1], [0, 0, 1, 1], [], []>} : vector<16x16xbf16>, vector<16x8xbf16>, vector<16x8xf32> -> vector<16x8xf32>
    %73 = vector.extract_strided_slice %21 {offsets = [0, 24], sizes = [16, 8], strides = [1, 1]} : vector<16x96xf32> to vector<16x8xf32>
    %c24 = arith.constant 24 : index
    %c0_34 = arith.constant 0 : index
    %74 = vector.load %arg24[%c24, %c0_34] : memref<96x16xf32, #tpu.memory_space<vmem>>, vector<8x16xf32>
    %cst_35 = arith.constant dense<0.000000e+00> : vector<16x16xf32>
    %75 = tpu.matmul %73, %74, %cst_35 {dimension_numbers = #tpu.dot_dimension_numbers<[1], [0], [0], [1], [0, 0, 1, 1], [], []>} : vector<16x8xf32>, vector<8x16xf32>, vector<16x16xf32> -> vector<16x16xf32>
    %cst_36 = arith.constant dense<0xFF800000> : vector<16xf32>
    %76 = vector.multi_reduction <maximumf>, %75, %cst_36 [1] : vector<16x16xf32> to vector<16xf32>
    %77 = vector.shape_cast %76 : vector<16xf32> to vector<16x1xf32>
    %78 = vector.broadcast %77 : vector<16x1xf32> to vector<16x16xf32>
    %79 = arith.subf %75, %78 : vector<16x16xf32>
    %80 = math.exp %79 : vector<16x16xf32>
    %cst_37 = arith.constant dense<0.000000e+00> : vector<16xf32>
    %81 = vector.multi_reduction <add>, %80, %cst_37 [1] : vector<16x16xf32> to vector<16xf32>
    %82 = vector.shape_cast %81 : vector<16xf32> to vector<16x1xf32>
    %83 = tpu.reciprocal %82 {approx = true} : vector<16x1xf32> -> vector<16x1xf32>
    %84 = vector.broadcast %83 : vector<16x1xf32> to vector<16x16xf32>
    %85 = arith.mulf %80, %84 : vector<16x16xf32>
    %86 = arith.truncf %85 : vector<16x16xf32> to vector<16x16xbf16>
    %c3 = arith.constant 3 : index
    %c0_38 = arith.constant 0 : index
    %c0_39 = arith.constant 0 : index
    %87 = vector.load %arg25[%c3, %c0_38, %c0_39] : memref<12x16x8xbf16, #tpu.memory_space<vmem>>, vector<1x16x8xbf16>
    %88 = vector.shape_cast %87 : vector<1x16x8xbf16> to vector<16x8xbf16>
    %cst_40 = arith.constant dense<0.000000e+00> : vector<16x8xf32>
    %89 = tpu.matmul %86, %88, %cst_40 {dimension_numbers = #tpu.dot_dimension_numbers<[1], [0], [0], [1], [0, 0, 1, 1], [], []>} : vector<16x16xbf16>, vector<16x8xbf16>, vector<16x8xf32> -> vector<16x8xf32>
    %90 = vector.extract_strided_slice %21 {offsets = [0, 32], sizes = [16, 8], strides = [1, 1]} : vector<16x96xf32> to vector<16x8xf32>
    %c32 = arith.constant 32 : index
    %c0_41 = arith.constant 0 : index
    %91 = vector.load %arg24[%c32, %c0_41] : memref<96x16xf32, #tpu.memory_space<vmem>>, vector<8x16xf32>
    %cst_42 = arith.constant dense<0.000000e+00> : vector<16x16xf32>
    %92 = tpu.matmul %90, %91, %cst_42 {dimension_numbers = #tpu.dot_dimension_numbers<[1], [0], [0], [1], [0, 0, 1, 1], [], []>} : vector<16x8xf32>, vector<8x16xf32>, vector<16x16xf32> -> vector<16x16xf32>
    %cst_43 = arith.constant dense<0xFF800000> : vector<16xf32>
    %93 = vector.multi_reduction <maximumf>, %92, %cst_43 [1] : vector<16x16xf32> to vector<16xf32>
    %94 = vector.shape_cast %93 : vector<16xf32> to vector<16x1xf32>
    %95 = vector.broadcast %94 : vector<16x1xf32> to vector<16x16xf32>
    %96 = arith.subf %92, %95 : vector<16x16xf32>
    %97 = math.exp %96 : vector<16x16xf32>
    %cst_44 = arith.constant dense<0.000000e+00> : vector<16xf32>
    %98 = vector.multi_reduction <add>, %97, %cst_44 [1] : vector<16x16xf32> to vector<16xf32>
    %99 = vector.shape_cast %98 : vector<16xf32> to vector<16x1xf32>
    %100 = tpu.reciprocal %99 {approx = true} : vector<16x1xf32> -> vector<16x1xf32>
    %101 = vector.broadcast %100 : vector<16x1xf32> to vector<16x16xf32>
    %102 = arith.mulf %97, %101 : vector<16x16xf32>
    %103 = arith.truncf %102 : vector<16x16xf32> to vector<16x16xbf16>
    %c4 = arith.constant 4 : index
    %c0_45 = arith.constant 0 : index
    %c0_46 = arith.constant 0 : index
    %104 = vector.load %arg25[%c4, %c0_45, %c0_46] : memref<12x16x8xbf16, #tpu.memory_space<vmem>>, vector<1x16x8xbf16>
    %105 = vector.shape_cast %104 : vector<1x16x8xbf16> to vector<16x8xbf16>
    %cst_47 = arith.constant dense<0.000000e+00> : vector<16x8xf32>
    %106 = tpu.matmul %103, %105, %cst_47 {dimension_numbers = #tpu.dot_dimension_numbers<[1], [0], [0], [1], [0, 0, 1, 1], [], []>} : vector<16x16xbf16>, vector<16x8xbf16>, vector<16x8xf32> -> vector<16x8xf32>
    %107 = vector.extract_strided_slice %21 {offsets = [0, 40], sizes = [16, 8], strides = [1, 1]} : vector<16x96xf32> to vector<16x8xf32>
    %c40 = arith.constant 40 : index
    %c0_48 = arith.constant 0 : index
    %108 = vector.load %arg24[%c40, %c0_48] : memref<96x16xf32, #tpu.memory_space<vmem>>, vector<8x16xf32>
    %cst_49 = arith.constant dense<0.000000e+00> : vector<16x16xf32>
    %109 = tpu.matmul %107, %108, %cst_49 {dimension_numbers = #tpu.dot_dimension_numbers<[1], [0], [0], [1], [0, 0, 1, 1], [], []>} : vector<16x8xf32>, vector<8x16xf32>, vector<16x16xf32> -> vector<16x16xf32>
    %cst_50 = arith.constant dense<0xFF800000> : vector<16xf32>
    %110 = vector.multi_reduction <maximumf>, %109, %cst_50 [1] : vector<16x16xf32> to vector<16xf32>
    %111 = vector.shape_cast %110 : vector<16xf32> to vector<16x1xf32>
    %112 = vector.broadcast %111 : vector<16x1xf32> to vector<16x16xf32>
    %113 = arith.subf %109, %112 : vector<16x16xf32>
    %114 = math.exp %113 : vector<16x16xf32>
    %cst_51 = arith.constant dense<0.000000e+00> : vector<16xf32>
    %115 = vector.multi_reduction <add>, %114, %cst_51 [1] : vector<16x16xf32> to vector<16xf32>
    %116 = vector.shape_cast %115 : vector<16xf32> to vector<16x1xf32>
    %117 = tpu.reciprocal %116 {approx = true} : vector<16x1xf32> -> vector<16x1xf32>
    %118 = vector.broadcast %117 : vector<16x1xf32> to vector<16x16xf32>
    %119 = arith.mulf %114, %118 : vector<16x16xf32>
    %120 = arith.truncf %119 : vector<16x16xf32> to vector<16x16xbf16>
    %c5 = arith.constant 5 : index
    %c0_52 = arith.constant 0 : index
    %c0_53 = arith.constant 0 : index
    %121 = vector.load %arg25[%c5, %c0_52, %c0_53] : memref<12x16x8xbf16, #tpu.memory_space<vmem>>, vector<1x16x8xbf16>
    %122 = vector.shape_cast %121 : vector<1x16x8xbf16> to vector<16x8xbf16>
    %cst_54 = arith.constant dense<0.000000e+00> : vector<16x8xf32>
    %123 = tpu.matmul %120, %122, %cst_54 {dimension_numbers = #tpu.dot_dimension_numbers<[1], [0], [0], [1], [0, 0, 1, 1], [], []>} : vector<16x16xbf16>, vector<16x8xbf16>, vector<16x8xf32> -> vector<16x8xf32>
    %124 = vector.extract_strided_slice %21 {offsets = [0, 48], sizes = [16, 8], strides = [1, 1]} : vector<16x96xf32> to vector<16x8xf32>
    %c48 = arith.constant 48 : index
    %c0_55 = arith.constant 0 : index
    %125 = vector.load %arg24[%c48, %c0_55] : memref<96x16xf32, #tpu.memory_space<vmem>>, vector<8x16xf32>
    %cst_56 = arith.constant dense<0.000000e+00> : vector<16x16xf32>
    %126 = tpu.matmul %124, %125, %cst_56 {dimension_numbers = #tpu.dot_dimension_numbers<[1], [0], [0], [1], [0, 0, 1, 1], [], []>} : vector<16x8xf32>, vector<8x16xf32>, vector<16x16xf32> -> vector<16x16xf32>
    %cst_57 = arith.constant dense<0xFF800000> : vector<16xf32>
    %127 = vector.multi_reduction <maximumf>, %126, %cst_57 [1] : vector<16x16xf32> to vector<16xf32>
    %128 = vector.shape_cast %127 : vector<16xf32> to vector<16x1xf32>
    %129 = vector.broadcast %128 : vector<16x1xf32> to vector<16x16xf32>
    %130 = arith.subf %126, %129 : vector<16x16xf32>
    %131 = math.exp %130 : vector<16x16xf32>
    %cst_58 = arith.constant dense<0.000000e+00> : vector<16xf32>
    %132 = vector.multi_reduction <add>, %131, %cst_58 [1] : vector<16x16xf32> to vector<16xf32>
    %133 = vector.shape_cast %132 : vector<16xf32> to vector<16x1xf32>
    %134 = tpu.reciprocal %133 {approx = true} : vector<16x1xf32> -> vector<16x1xf32>
    %135 = vector.broadcast %134 : vector<16x1xf32> to vector<16x16xf32>
    %136 = arith.mulf %131, %135 : vector<16x16xf32>
    %137 = arith.truncf %136 : vector<16x16xf32> to vector<16x16xbf16>
    %c6 = arith.constant 6 : index
    %c0_59 = arith.constant 0 : index
    %c0_60 = arith.constant 0 : index
    %138 = vector.load %arg25[%c6, %c0_59, %c0_60] : memref<12x16x8xbf16, #tpu.memory_space<vmem>>, vector<1x16x8xbf16>
    %139 = vector.shape_cast %138 : vector<1x16x8xbf16> to vector<16x8xbf16>
    %cst_61 = arith.constant dense<0.000000e+00> : vector<16x8xf32>
    %140 = tpu.matmul %137, %139, %cst_61 {dimension_numbers = #tpu.dot_dimension_numbers<[1], [0], [0], [1], [0, 0, 1, 1], [], []>} : vector<16x16xbf16>, vector<16x8xbf16>, vector<16x8xf32> -> vector<16x8xf32>
    %141 = vector.extract_strided_slice %21 {offsets = [0, 56], sizes = [16, 8], strides = [1, 1]} : vector<16x96xf32> to vector<16x8xf32>
    %c56 = arith.constant 56 : index
    %c0_62 = arith.constant 0 : index
    %142 = vector.load %arg24[%c56, %c0_62] : memref<96x16xf32, #tpu.memory_space<vmem>>, vector<8x16xf32>
    %cst_63 = arith.constant dense<0.000000e+00> : vector<16x16xf32>
    %143 = tpu.matmul %141, %142, %cst_63 {dimension_numbers = #tpu.dot_dimension_numbers<[1], [0], [0], [1], [0, 0, 1, 1], [], []>} : vector<16x8xf32>, vector<8x16xf32>, vector<16x16xf32> -> vector<16x16xf32>
    %cst_64 = arith.constant dense<0xFF800000> : vector<16xf32>
    %144 = vector.multi_reduction <maximumf>, %143, %cst_64 [1] : vector<16x16xf32> to vector<16xf32>
    %145 = vector.shape_cast %144 : vector<16xf32> to vector<16x1xf32>
    %146 = vector.broadcast %145 : vector<16x1xf32> to vector<16x16xf32>
    %147 = arith.subf %143, %146 : vector<16x16xf32>
    %148 = math.exp %147 : vector<16x16xf32>
    %cst_65 = arith.constant dense<0.000000e+00> : vector<16xf32>
    %149 = vector.multi_reduction <add>, %148, %cst_65 [1] : vector<16x16xf32> to vector<16xf32>
    %150 = vector.shape_cast %149 : vector<16xf32> to vector<16x1xf32>
    %151 = tpu.reciprocal %150 {approx = true} : vector<16x1xf32> -> vector<16x1xf32>
    %152 = vector.broadcast %151 : vector<16x1xf32> to vector<16x16xf32>
    %153 = arith.mulf %148, %152 : vector<16x16xf32>
    %154 = arith.truncf %153 : vector<16x16xf32> to vector<16x16xbf16>
    %c7 = arith.constant 7 : index
    %c0_66 = arith.constant 0 : index
    %c0_67 = arith.constant 0 : index
    %155 = vector.load %arg25[%c7, %c0_66, %c0_67] : memref<12x16x8xbf16, #tpu.memory_space<vmem>>, vector<1x16x8xbf16>
    %156 = vector.shape_cast %155 : vector<1x16x8xbf16> to vector<16x8xbf16>
    %cst_68 = arith.constant dense<0.000000e+00> : vector<16x8xf32>
    %157 = tpu.matmul %154, %156, %cst_68 {dimension_numbers = #tpu.dot_dimension_numbers<[1], [0], [0], [1], [0, 0, 1, 1], [], []>} : vector<16x16xbf16>, vector<16x8xbf16>, vector<16x8xf32> -> vector<16x8xf32>
    %158 = vector.extract_strided_slice %21 {offsets = [0, 64], sizes = [16, 8], strides = [1, 1]} : vector<16x96xf32> to vector<16x8xf32>
    %c64 = arith.constant 64 : index
    %c0_69 = arith.constant 0 : index
    %159 = vector.load %arg24[%c64, %c0_69] : memref<96x16xf32, #tpu.memory_space<vmem>>, vector<8x16xf32>
    %cst_70 = arith.constant dense<0.000000e+00> : vector<16x16xf32>
    %160 = tpu.matmul %158, %159, %cst_70 {dimension_numbers = #tpu.dot_dimension_numbers<[1], [0], [0], [1], [0, 0, 1, 1], [], []>} : vector<16x8xf32>, vector<8x16xf32>, vector<16x16xf32> -> vector<16x16xf32>
    %cst_71 = arith.constant dense<0xFF800000> : vector<16xf32>
    %161 = vector.multi_reduction <maximumf>, %160, %cst_71 [1] : vector<16x16xf32> to vector<16xf32>
    %162 = vector.shape_cast %161 : vector<16xf32> to vector<16x1xf32>
    %163 = vector.broadcast %162 : vector<16x1xf32> to vector<16x16xf32>
    %164 = arith.subf %160, %163 : vector<16x16xf32>
    %165 = math.exp %164 : vector<16x16xf32>
    %cst_72 = arith.constant dense<0.000000e+00> : vector<16xf32>
    %166 = vector.multi_reduction <add>, %165, %cst_72 [1] : vector<16x16xf32> to vector<16xf32>
    %167 = vector.shape_cast %166 : vector<16xf32> to vector<16x1xf32>
    %168 = tpu.reciprocal %167 {approx = true} : vector<16x1xf32> -> vector<16x1xf32>
    %169 = vector.broadcast %168 : vector<16x1xf32> to vector<16x16xf32>
    %170 = arith.mulf %165, %169 : vector<16x16xf32>
    %171 = arith.truncf %170 : vector<16x16xf32> to vector<16x16xbf16>
    %c8_73 = arith.constant 8 : index
    %c0_74 = arith.constant 0 : index
    %c0_75 = arith.constant 0 : index
    %172 = vector.load %arg25[%c8_73, %c0_74, %c0_75] : memref<12x16x8xbf16, #tpu.memory_space<vmem>>, vector<1x16x8xbf16>
    %173 = vector.shape_cast %172 : vector<1x16x8xbf16> to vector<16x8xbf16>
    %cst_76 = arith.constant dense<0.000000e+00> : vector<16x8xf32>
    %174 = tpu.matmul %171, %173, %cst_76 {dimension_numbers = #tpu.dot_dimension_numbers<[1], [0], [0], [1], [0, 0, 1, 1], [], []>} : vector<16x16xbf16>, vector<16x8xbf16>, vector<16x8xf32> -> vector<16x8xf32>
    %175 = vector.extract_strided_slice %21 {offsets = [0, 72], sizes = [16, 8], strides = [1, 1]} : vector<16x96xf32> to vector<16x8xf32>
    %c72 = arith.constant 72 : index
    %c0_77 = arith.constant 0 : index
    %176 = vector.load %arg24[%c72, %c0_77] : memref<96x16xf32, #tpu.memory_space<vmem>>, vector<8x16xf32>
    %cst_78 = arith.constant dense<0.000000e+00> : vector<16x16xf32>
    %177 = tpu.matmul %175, %176, %cst_78 {dimension_numbers = #tpu.dot_dimension_numbers<[1], [0], [0], [1], [0, 0, 1, 1], [], []>} : vector<16x8xf32>, vector<8x16xf32>, vector<16x16xf32> -> vector<16x16xf32>
    %cst_79 = arith.constant dense<0xFF800000> : vector<16xf32>
    %178 = vector.multi_reduction <maximumf>, %177, %cst_79 [1] : vector<16x16xf32> to vector<16xf32>
    %179 = vector.shape_cast %178 : vector<16xf32> to vector<16x1xf32>
    %180 = vector.broadcast %179 : vector<16x1xf32> to vector<16x16xf32>
    %181 = arith.subf %177, %180 : vector<16x16xf32>
    %182 = math.exp %181 : vector<16x16xf32>
    %cst_80 = arith.constant dense<0.000000e+00> : vector<16xf32>
    %183 = vector.multi_reduction <add>, %182, %cst_80 [1] : vector<16x16xf32> to vector<16xf32>
    %184 = vector.shape_cast %183 : vector<16xf32> to vector<16x1xf32>
    %185 = tpu.reciprocal %184 {approx = true} : vector<16x1xf32> -> vector<16x1xf32>
    %186 = vector.broadcast %185 : vector<16x1xf32> to vector<16x16xf32>
    %187 = arith.mulf %182, %186 : vector<16x16xf32>
    %188 = arith.truncf %187 : vector<16x16xf32> to vector<16x16xbf16>
    %c9 = arith.constant 9 : index
    %c0_81 = arith.constant 0 : index
    %c0_82 = arith.constant 0 : index
    %189 = vector.load %arg25[%c9, %c0_81, %c0_82] : memref<12x16x8xbf16, #tpu.memory_space<vmem>>, vector<1x16x8xbf16>
    %190 = vector.shape_cast %189 : vector<1x16x8xbf16> to vector<16x8xbf16>
    %cst_83 = arith.constant dense<0.000000e+00> : vector<16x8xf32>
    %191 = tpu.matmul %188, %190, %cst_83 {dimension_numbers = #tpu.dot_dimension_numbers<[1], [0], [0], [1], [0, 0, 1, 1], [], []>} : vector<16x16xbf16>, vector<16x8xbf16>, vector<16x8xf32> -> vector<16x8xf32>
    %192 = vector.extract_strided_slice %21 {offsets = [0, 80], sizes = [16, 8], strides = [1, 1]} : vector<16x96xf32> to vector<16x8xf32>
    %c80 = arith.constant 80 : index
    %c0_84 = arith.constant 0 : index
    %193 = vector.load %arg24[%c80, %c0_84] : memref<96x16xf32, #tpu.memory_space<vmem>>, vector<8x16xf32>
    %cst_85 = arith.constant dense<0.000000e+00> : vector<16x16xf32>
    %194 = tpu.matmul %192, %193, %cst_85 {dimension_numbers = #tpu.dot_dimension_numbers<[1], [0], [0], [1], [0, 0, 1, 1], [], []>} : vector<16x8xf32>, vector<8x16xf32>, vector<16x16xf32> -> vector<16x16xf32>
    %cst_86 = arith.constant dense<0xFF800000> : vector<16xf32>
    %195 = vector.multi_reduction <maximumf>, %194, %cst_86 [1] : vector<16x16xf32> to vector<16xf32>
    %196 = vector.shape_cast %195 : vector<16xf32> to vector<16x1xf32>
    %197 = vector.broadcast %196 : vector<16x1xf32> to vector<16x16xf32>
    %198 = arith.subf %194, %197 : vector<16x16xf32>
    %199 = math.exp %198 : vector<16x16xf32>
    %cst_87 = arith.constant dense<0.000000e+00> : vector<16xf32>
    %200 = vector.multi_reduction <add>, %199, %cst_87 [1] : vector<16x16xf32> to vector<16xf32>
    %201 = vector.shape_cast %200 : vector<16xf32> to vector<16x1xf32>
    %202 = tpu.reciprocal %201 {approx = true} : vector<16x1xf32> -> vector<16x1xf32>
    %203 = vector.broadcast %202 : vector<16x1xf32> to vector<16x16xf32>
    %204 = arith.mulf %199, %203 : vector<16x16xf32>
    %205 = arith.truncf %204 : vector<16x16xf32> to vector<16x16xbf16>
    %c10 = arith.constant 10 : index
    %c0_88 = arith.constant 0 : index
    %c0_89 = arith.constant 0 : index
    %206 = vector.load %arg25[%c10, %c0_88, %c0_89] : memref<12x16x8xbf16, #tpu.memory_space<vmem>>, vector<1x16x8xbf16>
    %207 = vector.shape_cast %206 : vector<1x16x8xbf16> to vector<16x8xbf16>
    %cst_90 = arith.constant dense<0.000000e+00> : vector<16x8xf32>
    %208 = tpu.matmul %205, %207, %cst_90 {dimension_numbers = #tpu.dot_dimension_numbers<[1], [0], [0], [1], [0, 0, 1, 1], [], []>} : vector<16x16xbf16>, vector<16x8xbf16>, vector<16x8xf32> -> vector<16x8xf32>
    %209 = vector.extract_strided_slice %21 {offsets = [0, 88], sizes = [16, 8], strides = [1, 1]} : vector<16x96xf32> to vector<16x8xf32>
    %c88 = arith.constant 88 : index
    %c0_91 = arith.constant 0 : index
    %210 = vector.load %arg24[%c88, %c0_91] : memref<96x16xf32, #tpu.memory_space<vmem>>, vector<8x16xf32>
    %cst_92 = arith.constant dense<0.000000e+00> : vector<16x16xf32>
    %211 = tpu.matmul %209, %210, %cst_92 {dimension_numbers = #tpu.dot_dimension_numbers<[1], [0], [0], [1], [0, 0, 1, 1], [], []>} : vector<16x8xf32>, vector<8x16xf32>, vector<16x16xf32> -> vector<16x16xf32>
    %cst_93 = arith.constant dense<0xFF800000> : vector<16xf32>
    %212 = vector.multi_reduction <maximumf>, %211, %cst_93 [1] : vector<16x16xf32> to vector<16xf32>
    %213 = vector.shape_cast %212 : vector<16xf32> to vector<16x1xf32>
    %214 = vector.broadcast %213 : vector<16x1xf32> to vector<16x16xf32>
    %215 = arith.subf %211, %214 : vector<16x16xf32>
    %216 = math.exp %215 : vector<16x16xf32>
    %cst_94 = arith.constant dense<0.000000e+00> : vector<16xf32>
    %217 = vector.multi_reduction <add>, %216, %cst_94 [1] : vector<16x16xf32> to vector<16xf32>
    %218 = vector.shape_cast %217 : vector<16xf32> to vector<16x1xf32>
    %219 = tpu.reciprocal %218 {approx = true} : vector<16x1xf32> -> vector<16x1xf32>
    %220 = vector.broadcast %219 : vector<16x1xf32> to vector<16x16xf32>
    %221 = arith.mulf %216, %220 : vector<16x16xf32>
    %222 = arith.truncf %221 : vector<16x16xf32> to vector<16x16xbf16>
    %c11 = arith.constant 11 : index
    %c0_95 = arith.constant 0 : index
    %c0_96 = arith.constant 0 : index
    %223 = vector.load %arg25[%c11, %c0_95, %c0_96] : memref<12x16x8xbf16, #tpu.memory_space<vmem>>, vector<1x16x8xbf16>
    %224 = vector.shape_cast %223 : vector<1x16x8xbf16> to vector<16x8xbf16>
    %cst_97 = arith.constant dense<0.000000e+00> : vector<16x8xf32>
    %225 = tpu.matmul %222, %224, %cst_97 {dimension_numbers = #tpu.dot_dimension_numbers<[1], [0], [0], [1], [0, 0, 1, 1], [], []>} : vector<16x16xbf16>, vector<16x8xbf16>, vector<16x8xf32> -> vector<16x8xf32>
    %226 = tpu.concatenate %38, %55, %72, %89, %106, %123, %140, %157, %174, %191, %208, %225 in 1 : vector<16x8xf32>, vector<16x8xf32>, vector<16x8xf32>, vector<16x8xf32>, vector<16x8xf32>, vector<16x8xf32>, vector<16x8xf32>, vector<16x8xf32>, vector<16x8xf32>, vector<16x8xf32>, vector<16x8xf32>, vector<16x8xf32> -> vector<16x96xf32>
    %227 = arith.truncf %226 : vector<16x96xf32> to vector<16x96xbf16>
    %c0_98 = arith.constant 0 : index
    %c0_99 = arith.constant 0 : index
    %c0_100 = arith.constant 0 : index
    %228 = vector.load %arg10[%c0_98, %c0_99, %c0_100] : memref<1x96x96xbf16, #tpu.memory_space<vmem>>, vector<1x96x96xbf16>
    %229 = vector.shape_cast %228 : vector<1x96x96xbf16> to vector<96x96xbf16>
    %cst_101 = arith.constant dense<0.000000e+00> : vector<16x96xf32>
    %230 = tpu.matmul %227, %229, %cst_101 {dimension_numbers = #tpu.dot_dimension_numbers<[1], [0], [0], [1], [0, 0, 1, 1], [], []>} : vector<16x96xbf16>, vector<96x96xbf16>, vector<16x96xf32> -> vector<16x96xf32>
    %c0_102 = arith.constant 0 : index
    %c0_103 = arith.constant 0 : index
    %c0_104 = arith.constant 0 : index
    %231 = vector.load %arg11[%c0_102, %c0_103, %c0_104] : memref<1x1x96xf32, #tpu.memory_space<vmem>>, vector<1x1x96xf32>
    %232 = vector.shape_cast %231 : vector<1x1x96xf32> to vector<1x96xf32>
    %233 = vector.broadcast %232 : vector<1x96xf32> to vector<16x96xf32>
    %234 = arith.addf %230, %233 : vector<16x96xf32>
    %235 = arith.addf %11, %234 : vector<16x96xf32>
    %c0_105 = arith.constant 0 : index
    %c0_106 = arith.constant 0 : index
    %c0_107 = arith.constant 0 : index
    %236 = vector.load %arg12[%c0_105, %c0_106, %c0_107] : memref<1x1x96xf32, #tpu.memory_space<vmem>>, vector<1x1x96xf32>
    %237 = vector.shape_cast %236 : vector<1x1x96xf32> to vector<1x96xf32>
    %c0_108 = arith.constant 0 : index
    %c0_109 = arith.constant 0 : index
    %c0_110 = arith.constant 0 : index
    %238 = vector.load %arg13[%c0_108, %c0_109, %c0_110] : memref<1x1x96xf32, #tpu.memory_space<vmem>>, vector<1x1x96xf32>
    %239 = vector.shape_cast %238 : vector<1x1x96xf32> to vector<1x96xf32>
    %cst_111 = arith.constant dense<0.000000e+00> : vector<16xf32>
    %240 = vector.multi_reduction <add>, %235, %cst_111 [1] : vector<16x96xf32> to vector<16xf32>
    %241 = vector.shape_cast %240 : vector<16xf32> to vector<16x1xf32>
    %cst_112 = arith.constant 9.600000e+01 : f32
    %242 = vector.broadcast %cst_112 : f32 to vector<16x1xf32>
    %243 = arith.divf %241, %242 : vector<16x1xf32>
    %244 = vector.broadcast %243 : vector<16x1xf32> to vector<16x96xf32>
    %245 = arith.subf %235, %244 : vector<16x96xf32>
    %246 = arith.mulf %245, %245 : vector<16x96xf32>
    %cst_113 = arith.constant dense<0.000000e+00> : vector<16xf32>
    %247 = vector.multi_reduction <add>, %246, %cst_113 [1] : vector<16x96xf32> to vector<16xf32>
    %248 = vector.shape_cast %247 : vector<16xf32> to vector<16x1xf32>
    %cst_114 = arith.constant 9.600000e+01 : f32
    %249 = vector.broadcast %cst_114 : f32 to vector<16x1xf32>
    %250 = arith.divf %248, %249 : vector<16x1xf32>
    %251 = vector.broadcast %243 : vector<16x1xf32> to vector<16x96xf32>
    %252 = arith.subf %235, %251 : vector<16x96xf32>
    %cst_115 = arith.constant 9.99999974E-6 : f32
    %253 = vector.broadcast %cst_115 : f32 to vector<16x1xf32>
    %254 = arith.addf %250, %253 : vector<16x1xf32>
    %255 = math.rsqrt %254 : vector<16x1xf32>
    %256 = vector.broadcast %255 : vector<16x1xf32> to vector<16x96xf32>
    %257 = arith.mulf %252, %256 : vector<16x96xf32>
    %258 = vector.broadcast %237 : vector<1x96xf32> to vector<16x96xf32>
    %259 = arith.mulf %257, %258 : vector<16x96xf32>
    %260 = vector.broadcast %239 : vector<1x96xf32> to vector<16x96xf32>
    %261 = arith.addf %259, %260 : vector<16x96xf32>
    %262 = arith.truncf %261 : vector<16x96xf32> to vector<16x96xbf16>
    %c0_116 = arith.constant 0 : index
    %c0_117 = arith.constant 0 : index
    %c0_118 = arith.constant 0 : index
    %263 = vector.load %arg16[%c0_116, %c0_117, %c0_118] : memref<1x96x256xbf16, #tpu.memory_space<vmem>>, vector<1x96x256xbf16>
    %264 = vector.shape_cast %263 : vector<1x96x256xbf16> to vector<96x256xbf16>
    %cst_119 = arith.constant dense<0.000000e+00> : vector<16x256xf32>
    %265 = tpu.matmul %262, %264, %cst_119 {dimension_numbers = #tpu.dot_dimension_numbers<[1], [0], [0], [1], [0, 0, 1, 1], [], []>} : vector<16x96xbf16>, vector<96x256xbf16>, vector<16x256xf32> -> vector<16x256xf32>
    %c0_120 = arith.constant 0 : index
    %c0_121 = arith.constant 0 : index
    %c0_122 = arith.constant 0 : index
    %266 = vector.load %arg17[%c0_120, %c0_121, %c0_122] : memref<1x1x256xf32, #tpu.memory_space<vmem>>, vector<1x1x256xf32>
    %267 = vector.shape_cast %266 : vector<1x1x256xf32> to vector<1x256xf32>
    %268 = vector.broadcast %267 : vector<1x256xf32> to vector<16x256xf32>
    %269 = arith.addf %265, %268 : vector<16x256xf32>
    %cst_123 = arith.constant 0.000000e+00 : f32
    %270 = vector.broadcast %cst_123 : f32 to vector<16x256xf32>
    %271 = arith.maximumf %269, %270 : vector<16x256xf32>
    %272 = arith.truncf %271 : vector<16x256xf32> to vector<16x256xbf16>
    %c0_124 = arith.constant 0 : index
    %c0_125 = arith.constant 0 : index
    %c0_126 = arith.constant 0 : index
    %273 = vector.load %arg18[%c0_124, %c0_125, %c0_126] : memref<1x256x96xbf16, #tpu.memory_space<vmem>>, vector<1x256x96xbf16>
    %274 = vector.shape_cast %273 : vector<1x256x96xbf16> to vector<256x96xbf16>
    %cst_127 = arith.constant dense<0.000000e+00> : vector<16x96xf32>
    %275 = tpu.matmul %272, %274, %cst_127 {dimension_numbers = #tpu.dot_dimension_numbers<[1], [0], [0], [1], [0, 0, 1, 1], [], []>} : vector<16x256xbf16>, vector<256x96xbf16>, vector<16x96xf32> -> vector<16x96xf32>
    %c0_128 = arith.constant 0 : index
    %c0_129 = arith.constant 0 : index
    %c0_130 = arith.constant 0 : index
    %276 = vector.load %arg19[%c0_128, %c0_129, %c0_130] : memref<1x1x96xf32, #tpu.memory_space<vmem>>, vector<1x1x96xf32>
    %277 = vector.shape_cast %276 : vector<1x1x96xf32> to vector<1x96xf32>
    %278 = vector.broadcast %277 : vector<1x96xf32> to vector<16x96xf32>
    %279 = arith.addf %275, %278 : vector<16x96xf32>
    %280 = arith.addf %261, %279 : vector<16x96xf32>
    %c0_131 = arith.constant 0 : index
    %c0_132 = arith.constant 0 : index
    %c0_133 = arith.constant 0 : index
    %281 = vector.load %arg14[%c0_131, %c0_132, %c0_133] : memref<1x1x96xf32, #tpu.memory_space<vmem>>, vector<1x1x96xf32>
    %282 = vector.shape_cast %281 : vector<1x1x96xf32> to vector<1x96xf32>
    %c0_134 = arith.constant 0 : index
    %c0_135 = arith.constant 0 : index
    %c0_136 = arith.constant 0 : index
    %283 = vector.load %arg15[%c0_134, %c0_135, %c0_136] : memref<1x1x96xf32, #tpu.memory_space<vmem>>, vector<1x1x96xf32>
    %284 = vector.shape_cast %283 : vector<1x1x96xf32> to vector<1x96xf32>
    %cst_137 = arith.constant dense<0.000000e+00> : vector<16xf32>
    %285 = vector.multi_reduction <add>, %280, %cst_137 [1] : vector<16x96xf32> to vector<16xf32>
    %286 = vector.shape_cast %285 : vector<16xf32> to vector<16x1xf32>
    %cst_138 = arith.constant 9.600000e+01 : f32
    %287 = vector.broadcast %cst_138 : f32 to vector<16x1xf32>
    %288 = arith.divf %286, %287 : vector<16x1xf32>
    %289 = vector.broadcast %288 : vector<16x1xf32> to vector<16x96xf32>
    %290 = arith.subf %280, %289 : vector<16x96xf32>
    %291 = arith.mulf %290, %290 : vector<16x96xf32>
    %cst_139 = arith.constant dense<0.000000e+00> : vector<16xf32>
    %292 = vector.multi_reduction <add>, %291, %cst_139 [1] : vector<16x96xf32> to vector<16xf32>
    %293 = vector.shape_cast %292 : vector<16xf32> to vector<16x1xf32>
    %cst_140 = arith.constant 9.600000e+01 : f32
    %294 = vector.broadcast %cst_140 : f32 to vector<16x1xf32>
    %295 = arith.divf %293, %294 : vector<16x1xf32>
    %296 = vector.broadcast %288 : vector<16x1xf32> to vector<16x96xf32>
    %297 = arith.subf %280, %296 : vector<16x96xf32>
    %cst_141 = arith.constant 9.99999974E-6 : f32
    %298 = vector.broadcast %cst_141 : f32 to vector<16x1xf32>
    %299 = arith.addf %295, %298 : vector<16x1xf32>
    %300 = math.rsqrt %299 : vector<16x1xf32>
    %301 = vector.broadcast %300 : vector<16x1xf32> to vector<16x96xf32>
    %302 = arith.mulf %297, %301 : vector<16x96xf32>
    %303 = vector.broadcast %282 : vector<1x96xf32> to vector<16x96xf32>
    %304 = arith.mulf %302, %303 : vector<16x96xf32>
    %305 = vector.broadcast %284 : vector<1x96xf32> to vector<16x96xf32>
    %306 = arith.addf %304, %305 : vector<16x96xf32>
    %307 = arith.index_cast %9 : i32 to index
    %c0_142 = arith.constant 0 : index
    %308 = vector.load %arg23[%307, %c0_142] : memref<16x96xf32, #tpu.memory_space<vmem>>, vector<16x96xf32>
    tpu.vector_store %arg23[%307, %c0_142], %306 {strides = array<i32>} : memref<16x96xf32, #tpu.memory_space<vmem>>, vector<16x96xf32>,
    %c3_i32 = arith.constant 3 : i32
    %309 = arith.cmpi eq, %arg1, %c3_i32 : i32
    %c0_i32_143 = arith.constant 0 : i32
    %310 = arith.cmpi eq, %arg2, %c0_i32_143 : i32
    %311 = arith.andi %309, %310 : i1
    %312 = arith.extui %311 : i1 to i32
    %c0_i32_144 = arith.constant 0 : i32
    %313 = arith.cmpi ne, %312, %c0_i32_144 : i32
    scf.if %313 {
      %c0_145 = arith.constant 0 : index
      %c0_146 = arith.constant 0 : index
      %314 = vector.load %arg23[%c0_145, %c0_146] : memref<16x96xf32, #tpu.memory_space<vmem>>, vector<16x96xf32>
      %cst_147 = arith.constant dense<0.000000e+00> : vector<96xf32>
      %315 = vector.multi_reduction <add>, %314, %cst_147 [0] : vector<16x96xf32> to vector<96xf32>
      %316 = vector.shape_cast %315 : vector<96xf32> to vector<1x96xf32>
      %cst_148 = arith.constant 1.600000e+01 : f32
      %317 = vector.broadcast %cst_148 : f32 to vector<1x96xf32>
      %318 = arith.divf %316, %317 : vector<1x96xf32>
      %c0_149 = arith.constant 0 : index
      %c0_150 = arith.constant 0 : index
      %319 = vector.load %arg20[%c0_149, %c0_150] : memref<1x96xf32, #tpu.memory_space<vmem>>, vector<1x96xf32>
      %320 = arith.mulf %318, %319 : vector<1x96xf32>
      %cst_151 = arith.constant dense<0.000000e+00> : vector<1xf32>
      %321 = vector.multi_reduction <add>, %320, %cst_151 [1] : vector<1x96xf32> to vector<1xf32>
      %322 = vector.shape_cast %321 : vector<1xf32> to vector<1x1xf32>
      %c0_152 = arith.constant 0 : index
      %c0_153 = arith.constant 0 : index
      %323 = vector.load %arg21[%c0_152, %c0_153] : memref<1x1xf32, #tpu.memory_space<vmem>>, vector<1x1xf32>
      %324 = arith.addf %322, %323 : vector<1x1xf32>
      %c0_154 = arith.constant 0 : index
      %c0_155 = arith.constant 0 : index
      %c0_156 = arith.constant 0 : index
      %325 = vector.load %arg22[%c0_154, %c0_155, %c0_156] : memref<1x1x1xf32, #tpu.memory_space<vmem>>, vector<1x1x1xf32>
      %326 = vector.shape_cast %325 : vector<1x1x1xf32> to vector<1x1xf32>
      %327 = vector.shape_cast %324 : vector<1x1xf32> to vector<1x1x1xf32>
      tpu.vector_store %arg22[%c0_154, %c0_155, %c0_156], %327 {strides = array<i32>} : memref<1x1x1xf32, #tpu.memory_space<vmem>>, vector<1x1x1xf32>,
    } else {
    }
    return
  }
  func.func @transform_0(%arg0: i32, %arg1: i32, %arg2: i32) -> (i32, i32, i32) {
    %c0_i32 = arith.constant 0 : i32
    %c0_i32_0 = arith.constant 0 : i32
    %c0_i32_1 = arith.constant 0 : i32
    return %arg0, %c0_i32, %c0_i32_0 : i32, i32, i32
  }
  func.func @transform_1(%arg0: i32, %arg1: i32, %arg2: i32) -> (i32, i32, i32) {
    %c0_i32 = arith.constant 0 : i32
    %c0_i32_0 = arith.constant 0 : i32
    %c0_i32_1 = arith.constant 0 : i32
    return %arg1, %c0_i32, %c0_i32_0 : i32, i32, i32
  }
  func.func @transform_2(%arg0: i32, %arg1: i32, %arg2: i32) -> (i32, i32, i32) {
    %c0_i32 = arith.constant 0 : i32
    %c0_i32_0 = arith.constant 0 : i32
    %c0_i32_1 = arith.constant 0 : i32
    return %arg1, %c0_i32, %c0_i32_0 : i32, i32, i32
  }
  func.func @transform_3(%arg0: i32, %arg1: i32, %arg2: i32) -> (i32, i32, i32) {
    %c0_i32 = arith.constant 0 : i32
    %c0_i32_0 = arith.constant 0 : i32
    %c0_i32_1 = arith.constant 0 : i32
    return %arg1, %c0_i32, %c0_i32_0 : i32, i32, i32
  }
  func.func @transform_4(%arg0: i32, %arg1: i32, %arg2: i32) -> (i32, i32, i32) {
    %c0_i32 = arith.constant 0 : i32
    %c0_i32_0 = arith.constant 0 : i32
    %c0_i32_1 = arith.constant 0 : i32
    return %arg1, %c0_i32, %c0_i32_0 : i32, i32, i32
  }
  func.func @transform_5(%arg0: i32, %arg1: i32, %arg2: i32) -> (i32, i32, i32) {
    %c0_i32 = arith.constant 0 : i32
    %c0_i32_0 = arith.constant 0 : i32
    %c0_i32_1 = arith.constant 0 : i32
    return %arg1, %c0_i32, %c0_i32_0 : i32, i32, i32
  }
  func.func @transform_6(%arg0: i32, %arg1: i32, %arg2: i32) -> (i32, i32, i32) {
    %c0_i32 = arith.constant 0 : i32
    %c0_i32_0 = arith.constant 0 : i32
    %c0_i32_1 = arith.constant 0 : i32
    return %arg1, %c0_i32, %c0_i32_0 : i32, i32, i32
  }
  func.func @transform_7(%arg0: i32, %arg1: i32, %arg2: i32) -> (i32, i32, i32) {
    %c0_i32 = arith.constant 0 : i32
    %c0_i32_0 = arith.constant 0 : i32
    %c0_i32_1 = arith.constant 0 : i32
    return %arg1, %c0_i32, %c0_i32_0 : i32, i32, i32
  }
  func.func @transform_8(%arg0: i32, %arg1: i32, %arg2: i32) -> (i32, i32, i32) {
    %c0_i32 = arith.constant 0 : i32
    %c0_i32_0 = arith.constant 0 : i32
    %c0_i32_1 = arith.constant 0 : i32
    return %arg1, %c0_i32, %c0_i32_0 : i32, i32, i32
  }
  func.func @transform_9(%arg0: i32, %arg1: i32, %arg2: i32) -> (i32, i32, i32) {
    %c0_i32 = arith.constant 0 : i32
    %c0_i32_0 = arith.constant 0 : i32
    %c0_i32_1 = arith.constant 0 : i32
    return %arg1, %c0_i32, %c0_i32_0 : i32, i32, i32
  }
  func.func @transform_10(%arg0: i32, %arg1: i32, %arg2: i32) -> (i32, i32, i32) {
    %c0_i32 = arith.constant 0 : i32
    %c0_i32_0 = arith.constant 0 : i32
    %c0_i32_1 = arith.constant 0 : i32
    return %arg1, %c0_i32, %c0_i32_0 : i32, i32, i32
  }
  func.func @transform_11(%arg0: i32, %arg1: i32, %arg2: i32) -> (i32, i32, i32) {
    %c0_i32 = arith.constant 0 : i32
    %c0_i32_0 = arith.constant 0 : i32
    %c0_i32_1 = arith.constant 0 : i32
    return %arg1, %c0_i32, %c0_i32_0 : i32, i32, i32
  }
  func.func @transform_12(%arg0: i32, %arg1: i32, %arg2: i32) -> (i32, i32, i32) {
    %c0_i32 = arith.constant 0 : i32
    %c0_i32_0 = arith.constant 0 : i32
    %c0_i32_1 = arith.constant 0 : i32
    return %arg1, %c0_i32, %c0_i32_0 : i32, i32, i32
  }
  func.func @transform_13(%arg0: i32, %arg1: i32, %arg2: i32) -> (i32, i32, i32) {
    %c0_i32 = arith.constant 0 : i32
    %c0_i32_0 = arith.constant 0 : i32
    %c0_i32_1 = arith.constant 0 : i32
    return %arg1, %c0_i32, %c0_i32_0 : i32, i32, i32
  }
  func.func @transform_14(%arg0: i32, %arg1: i32, %arg2: i32) -> (i32, i32, i32) {
    %c0_i32 = arith.constant 0 : i32
    %c0_i32_0 = arith.constant 0 : i32
    %c0_i32_1 = arith.constant 0 : i32
    return %arg1, %c0_i32, %c0_i32_0 : i32, i32, i32
  }
  func.func @transform_15(%arg0: i32, %arg1: i32, %arg2: i32) -> (i32, i32, i32) {
    %c0_i32 = arith.constant 0 : i32
    %c0_i32_0 = arith.constant 0 : i32
    %c0_i32_1 = arith.constant 0 : i32
    return %arg1, %c0_i32, %c0_i32_0 : i32, i32, i32
  }
  func.func @transform_16(%arg0: i32, %arg1: i32, %arg2: i32) -> (i32, i32, i32) {
    %c0_i32 = arith.constant 0 : i32
    %c0_i32_0 = arith.constant 0 : i32
    %c0_i32_1 = arith.constant 0 : i32
    return %arg1, %c0_i32, %c0_i32_0 : i32, i32, i32
  }
  func.func @transform_17(%arg0: i32, %arg1: i32, %arg2: i32) -> (i32, i32) {
    %c0_i32 = arith.constant 0 : i32
    %c0_i32_0 = arith.constant 0 : i32
    %c0_i32_1 = arith.constant 0 : i32
    return %c0_i32, %c0_i32_0 : i32, i32
  }
  func.func @transform_18(%arg0: i32, %arg1: i32, %arg2: i32) -> (i32, i32) {
    %c0_i32 = arith.constant 0 : i32
    %c0_i32_0 = arith.constant 0 : i32
    %c0_i32_1 = arith.constant 0 : i32
    return %c0_i32, %c0_i32_0 : i32, i32
  }
  func.func @transform_19(%arg0: i32, %arg1: i32, %arg2: i32) -> (i32, i32, i32) {
    %c0_i32 = arith.constant 0 : i32
    %c0_i32_0 = arith.constant 0 : i32
    %c0_i32_1 = arith.constant 0 : i32
    return %arg0, %c0_i32, %c0_i32_0 : i32, i32, i32
  }
}

</mosaic_0001>

<llo_original>
// kernel: tpu_custom_call.1
$region0: #{tpu_custom_call.1}
  #allocation0 [shape = 'u32[]', space=smem, size = 0x4, offset = 0x4, fixed_abs, tag = 'smem constant byte address 0x4 - core index']
  #allocation1 [shape = 'u32[144,128]{1,0:T(1,128)}', space=vmem, size = 0x12000, scoped, tag = 'internal scratch']
  #allocation2 [shape = 'f32[16,96]{1,0:T(8,128)}', space=vmem, size = 0x2000, scoped, tag = 'scratch operand']
  #allocation3 [shape = 'f32[96,16]{1,0:T(8,128)}', space=vmem, size = 0xc000, scoped, tag = 'scratch operand']
  #allocation4 [shape = 'bf16[12,16,8]{2,1,0:T(16,128)(2,1)}', space=vmem, size = 0xc000, scoped, tag = 'scratch operand']
  #allocation5 [shape = 'f32[1,1]{1,0:T(1,128)S(1)}', space=vmem, size = 0x200, scoped, tag = 'scoped memory for tpu_custom_call.1']
  %s0 = inlined_call_operand.vmem [shape: f32[2,16,96], index: 0, kind: input, shape index: {}]
  %s1 = inlined_call_operand.vmem [shape: bf16[4,96,96], index: 1, kind: input, shape index: {}]
  %s2 = inlined_call_operand.vmem [shape: f32[4,1,96], index: 2, kind: input, shape index: {}]
  %s3 = inlined_call_operand.vmem [shape: bf16[4,96,96], index: 3, kind: input, shape index: {}]
  %s4 = inlined_call_operand.vmem [shape: f32[4,1,96], index: 4, kind: input, shape index: {}]
  %s5 = inlined_call_operand.hbm [shape: bf16[4,96,96], index: 5, kind: input, shape index: {}]
  %s6 = inlined_call_operand.vmem [shape: f32[4,1,96], index: 6, kind: input, shape index: {}]
  %s7 = inlined_call_operand.hbm [shape: bf16[4,96,96], index: 7, kind: input, shape index: {}]
  %s8 = inlined_call_operand.vmem [shape: f32[4,1,96], index: 8, kind: input, shape index: {}]
  %s9 = inlined_call_operand.vmem [shape: f32[4,1,96], index: 9, kind: input, shape index: {}]
  %s10 = inlined_call_operand.vmem [shape: f32[4,1,96], index: 10, kind: input, shape index: {}]
  %s11 = inlined_call_operand.vmem [shape: f32[4,1,96], index: 11, kind: input, shape index: {}]
  %s12 = inlined_call_operand.vmem [shape: f32[4,1,96], index: 12, kind: input, shape index: {}]
  %s13 = inlined_call_operand.vmem [shape: bf16[4,96,256], index: 13, kind: input, shape index: {}]
  %s14 = inlined_call_operand.vmem [shape: f32[4,1,256], index: 14, kind: input, shape index: {}]
  %s15 = inlined_call_operand.vmem [shape: bf16[4,256,96], index: 15, kind: input, shape index: {}]
  %s16 = inlined_call_operand.vmem [shape: f32[4,1,96], index: 16, kind: input, shape index: {}]
  %s17 = inlined_call_operand.vmem [shape: f32[1,96], index: 17, kind: input, shape index: {}]
  %s18 = inlined_call_operand.<no memory space> [shape: f32[1,1], index: 18, kind: input, shape index: {}]
  %s19 = inlined_call_operand.vmem [shape: f32[2,1,1], index: 19, kind: output, shape index: {}]
  %s20 = sld [smem:[#allocation0]]
  $region129: #{tpu_custom_call.1} parent=0
    _
  %s22 = ssub.s32 1, %s20
  %s23 = scalar_select 0, %s22, %s20
  %v24 = vstv %s18
  %25 = vst [vmem:[#allocation5] sm:$0x1] %v24
  $region1: #{tpu_custom_call.1} parent=0
    #allocation6 [shape = 'u8[49152]{0}', space=vmem, size = 0xc000, scoped, tag = 'input window, operand 5']
    #allocation7 [shape = 's32[2]{0}', space=sflag, size = 0x8, scoped, tag = 'scoped memory for tpu_custom_call.1']
    #allocation8 [shape = 'u8[49152]{0}', space=vmem, size = 0xc000, scoped, tag = 'input window, operand 7']
    #allocation9 [shape = 's32[2]{0}', space=sflag, size = 0x8, scoped, tag = 'scoped memory for tpu_custom_call.1']
    %26 = vsyncpa [#allocation7], 0
    %s27 = scalar_lea.sflag [#allocation7], 1
    %28 = vsyncpa %s27, 0
    %29 = vsyncpa [#allocation9], 0
    %s30 = scalar_lea.sflag [#allocation9], 1
    %31 = vsyncpa %s30, 0
    loop: start=0, step=1, limit=10
    $region2: #{tpu_custom_call.1} parent=1 // loop_pre_header
      _
    $region3: #{tpu_custom_call.1} parent=1 // loop_header
      %s33 = sphi 0, %s37
      %p34 = scmp.ge.s32.totalorder %s33, 10
      %s40 = sphi 0, %s59
      %s41 = sphi 0, %s55
      %s42 = sphi 0, %s51
      %s43 = sphi 0, %s40
      %s44 = sphi 0, %s41
      %s45 = sphi 0, %s42
      %s46 = sphi 0, %s43
      %s47 = sphi 0, %s44
      %s48 = sphi 0, %s45
      %s62 = sphi 0, %s64
      %s65 = sphi 0, %s62
      %s66 = sphi 0, %s65
      %s82 = sphi 0, %s66
      %s88 = sphi 0, %s90
      %s91 = sphi 0, %s88
      %s92 = sphi 0, %s91
      %s108 = sphi 0, %s92
      %s114 = sphi 0, %s116
      %s117 = sphi 0, %s114
      %s118 = sphi 0, %s117
      %s134 = sphi 0, %s118
      %s140 = sphi 0, %s142
      %s143 = sphi 0, %s140
      %s144 = sphi 0, %s143
      %s160 = sphi 0, %s144
      %s166 = sphi 0, %s168
      %s169 = sphi 0, %s166
      %s170 = sphi 0, %s169
      %s186 = sphi 0, %s170
      %s192 = sphi 0, %s194
      %s195 = sphi 0, %s192
      %s196 = sphi 0, %s195
      %s212 = sphi 0, %s196
      %s218 = sphi 0, %s220
      %s221 = sphi 0, %s218
      %s222 = sphi 0, %s221
      %s238 = sphi 0, %s222
      %s244 = sphi 0, %s246
      %s247 = sphi 0, %s244
      %s248 = sphi 0, %s247
      %s264 = sphi 0, %s248
      %s270 = sphi 0, %s272
      %s273 = sphi 0, %s270
      %s274 = sphi 0, %s273
      %s290 = sphi 0, %s274
      %s296 = sphi 0, %s298
      %s299 = sphi 0, %s296
      %s300 = sphi 0, %s299
      %s316 = sphi 0, %s300
      %s322 = sphi 0, %s324
      %s325 = sphi 0, %s322
      %s326 = sphi 0, %s325
      %s342 = sphi 0, %s326
      %s348 = sphi 0, %s350
      %s351 = sphi 0, %s348
      %s352 = sphi 0, %s351
      %s368 = sphi 0, %s352
      %s374 = sphi 0, %s376
      %s377 = sphi 0, %s374
      %s378 = sphi 0, %s377
      %s394 = sphi 0, %s378
      %s400 = sphi 0, %s402
      %s403 = sphi 0, %s400
      %s404 = sphi 0, %s403
      %s420 = sphi 0, %s404
      %s426 = sphi 0, %s428
      %s429 = sphi 0, %s426
      %s430 = sphi 0, %s429
      %s446 = sphi 0, %s430
      %s452 = sphi 0, %s454
      %s455 = sphi 0, %s452
      %s456 = sphi 0, %s455
      %s472 = sphi 0, %s456
      %s478 = sphi 0, %s480
      %s481 = sphi 0, %s478
      %s482 = sphi 0, %s481
      %s498 = sphi 0, %s482
      %s502 = sphi 0, %s502
      %s504 = sphi 0, %s502
      %s505 = sphi 0, %s504
      %s519 = sphi 0, %s505
      %s523 = sphi 0, %s523
      %s525 = sphi 0, %s523
      %s526 = sphi 0, %s525
      %s540 = sphi 0, %s526
      %s546 = sphi 0, %s548
      %s549 = sphi 0, %s546
      %s550 = sphi 0, %s549
      %s566 = sphi 0, %s550
    $region4: #{tpu_custom_call.1} parent=1 // loop_header_branch
      %36 = sbr.rel (%p34) target = $region8
    $region5: #{tpu_custom_call.1} parent=1 // loop_body
      %s38 = ssub.s32 %s33, 1
      %s39 = ssub.s32 %s33, 2
      %s49 = sadd.s32 1, %s42
      %p50 = scmp.ge.s32.totalorder %s49, 1
      %s51 = scalar_select %p50, 0, %s49
      %s52 = sadd.s32 1, %s41
      %s53 = scalar_select %p50, %s52, %s41
      %p54 = scmp.ge.s32.totalorder %s53, 4
      %s55 = scalar_select %p54, 0, %s53
      %s56 = sadd.s32 1, %s40
      %s57 = scalar_select %p54, %s56, %s40
      %p58 = scmp.ge.s32.totalorder %s57, 2
      %s59 = scalar_select %p58, 0, %s57
      %s60 = ssub.s32 %s40, %s59
      %p61 = scmp.eq.s32.totalorder %s60, 0
      %s63 = sadd.s32 %s62, 1
      %s64 = scalar_select %p61, %s62, %s63
      %p67 = pneg %p61
      %p68 = scmp.eq.s32.totalorder %s33, 7
      %p69 = por %p67, %p68
      %p70 = scmp.ne.s32.totalorder %s62, %s65
      %p71 = scmp.eq.s32.totalorder %s33, 0
      %p72 = por %p70, %p71
      %p73 = scmp.ne.s32.totalorder %s62, %s65
      %p74 = scmp.eq.s32.totalorder %s38, 7
      %p75 = por %p73, %p74
      %p76 = scmp.ne.s32.totalorder %s65, %s66
      %p77 = scmp.eq.s32.totalorder %s38, 0
      %p78 = por %p76, %p77
      %p79 = scmp.ne.s32.totalorder %s65, %s66
      %p80 = scmp.eq.s32.totalorder %s39, 7
      %p81 = por %p79, %p80
      %p83 = scmp.ne.s32.totalorder %s66, %s82
      %p84 = scmp.eq.s32.totalorder %s39, 0
      %p85 = por %p83, %p84
      %s86 = ssub.s32 %s41, %s55
      %p87 = scmp.eq.s32.totalorder %s86, 0
      %s89 = sadd.s32 %s88, 1
      %s90 = scalar_select %p87, %s88, %s89
      %p93 = pneg %p87
      %p94 = scmp.eq.s32.totalorder %s33, 7
      %p95 = por %p93, %p94
      %p96 = scmp.ne.s32.totalorder %s88, %s91
      %p97 = scmp.eq.s32.totalorder %s33, 0
      %p98 = por %p96, %p97
      %p99 = scmp.ne.s32.totalorder %s88, %s91
      %p100 = scmp.eq.s32.totalorder %s38, 7
      %p101 = por %p99, %p100
      %p102 = scmp.ne.s32.totalorder %s91, %s92
      %p103 = scmp.eq.s32.totalorder %s38, 0
      %p104 = por %p102, %p103
      %p105 = scmp.ne.s32.totalorder %s91, %s92
      %p106 = scmp.eq.s32.totalorder %s39, 7
      %p107 = por %p105, %p106
      %p109 = scmp.ne.s32.totalorder %s92, %s108
      %p110 = scmp.eq.s32.totalorder %s39, 0
      %p111 = por %p109, %p110
      %s112 = ssub.s32 %s41, %s55
      %p113 = scmp.eq.s32.totalorder %s112, 0
      %s115 = sadd.s32 %s114, 1
      %s116 = scalar_select %p113, %s114, %s115
      %p119 = pneg %p113
      %p120 = scmp.eq.s32.totalorder %s33, 7
      %p121 = por %p119, %p120
      %p122 = scmp.ne.s32.totalorder %s114, %s117
      %p123 = scmp.eq.s32.totalorder %s33, 0
      %p124 = por %p122, %p123
      %p125 = scmp.ne.s32.totalorder %s114, %s117
      %p126 = scmp.eq.s32.totalorder %s38, 7
      %p127 = por %p125, %p126
      %p128 = scmp.ne.s32.totalorder %s117, %s118
      %p129 = scmp.eq.s32.totalorder %s38, 0
      %p130 = por %p128, %p129
      %p131 = scmp.ne.s32.totalorder %s117, %s118
      %p132 = scmp.eq.s32.totalorder %s39, 7
      %p133 = por %p131, %p132
      %p135 = scmp.ne.s32.totalorder %s118, %s134
      %p136 = scmp.eq.s32.totalorder %s39, 0
      %p137 = por %p135, %p136
      %s138 = ssub.s32 %s41, %s55
      %p139 = scmp.eq.s32.totalorder %s138, 0
      %s141 = sadd.s32 %s140, 1
      %s142 = scalar_select %p139, %s140, %s141
      %p145 = pneg %p139
      %p146 = scmp.eq.s32.totalorder %s33, 7
      %p147 = por %p145, %p146
      %p148 = scmp.ne.s32.totalorder %s140, %s143
      %p149 = scmp.eq.s32.totalorder %s33, 0
      %p150 = por %p148, %p149
      %p151 = scmp.ne.s32.totalorder %s140, %s143
      %p152 = scmp.eq.s32.totalorder %s38, 7
      %p153 = por %p151, %p152
      %p154 = scmp.ne.s32.totalorder %s143, %s144
      %p155 = scmp.eq.s32.totalorder %s38, 0
      %p156 = por %p154, %p155
      %p157 = scmp.ne.s32.totalorder %s143, %s144
      %p158 = scmp.eq.s32.totalorder %s39, 7
      %p159 = por %p157, %p158
      %p161 = scmp.ne.s32.totalorder %s144, %s160
      %p162 = scmp.eq.s32.totalorder %s39, 0
      %p163 = por %p161, %p162
      %s164 = ssub.s32 %s41, %s55
      %p165 = scmp.eq.s32.totalorder %s164, 0
      %s167 = sadd.s32 %s166, 1
      %s168 = scalar_select %p165, %s166, %s167
      %p171 = pneg %p165
      %p172 = scmp.eq.s32.totalorder %s33, 7
      %p173 = por %p171, %p172
      %p174 = scmp.ne.s32.totalorder %s166, %s169
      %p175 = scmp.eq.s32.totalorder %s33, 0
      %p176 = por %p174, %p175
      %p177 = scmp.ne.s32.totalorder %s166, %s169
      %p178 = scmp.eq.s32.totalorder %s38, 7
      %p179 = por %p177, %p178
      %p180 = scmp.ne.s32.totalorder %s169, %s170
      %p181 = scmp.eq.s32.totalorder %s38, 0
      %p182 = por %p180, %p181
      %p183 = scmp.ne.s32.totalorder %s169, %s170
      %p184 = scmp.eq.s32.totalorder %s39, 7
      %p185 = por %p183, %p184
      %p187 = scmp.ne.s32.totalorder %s170, %s186
      %p188 = scmp.eq.s32.totalorder %s39, 0
      %p189 = por %p187, %p188
      %s190 = ssub.s32 %s41, %s55
      %p191 = scmp.eq.s32.totalorder %s190, 0
      %s193 = sadd.s32 %s192, 1
      %s194 = scalar_select %p191, %s192, %s193
      %p197 = pneg %p191
      %p198 = scmp.eq.s32.totalorder %s33, 7
      %p199 = por %p197, %p198
      %p200 = scmp.ne.s32.totalorder %s192, %s195
      %p201 = scmp.eq.s32.totalorder %s33, 0
      %p202 = por %p200, %p201
      %p203 = scmp.ne.s32.totalorder %s192, %s195
      %p204 = scmp.eq.s32.totalorder %s38, 7
      %p205 = por %p203, %p204
      %p206 = scmp.ne.s32.totalorder %s195, %s196
      %p207 = scmp.eq.s32.totalorder %s38, 0
      %p208 = por %p206, %p207
      %p209 = scmp.ne.s32.totalorder %s195, %s196
      %p210 = scmp.eq.s32.totalorder %s39, 7
      %p211 = por %p209, %p210
      %p213 = scmp.ne.s32.totalorder %s196, %s212
      %p214 = scmp.eq.s32.totalorder %s39, 0
      %p215 = por %p213, %p214
      %s216 = ssub.s32 %s41, %s55
      %p217 = scmp.eq.s32.totalorder %s216, 0
      %s219 = sadd.s32 %s218, 1
      %s220 = scalar_select %p217, %s218, %s219
      %p223 = pneg %p217
      %p224 = scmp.eq.s32.totalorder %s33, 7
      %p225 = por %p223, %p224
      %p226 = scmp.ne.s32.totalorder %s218, %s221
      %p227 = scmp.eq.s32.totalorder %s33, 0
      %p228 = por %p226, %p227
      %p229 = scmp.ne.s32.totalorder %s218, %s221
      %p230 = scmp.eq.s32.totalorder %s38, 7
      %p231 = por %p229, %p230
      %p232 = scmp.ne.s32.totalorder %s221, %s222
      %p233 = scmp.eq.s32.totalorder %s38, 0
      %p234 = por %p232, %p233
      %p235 = scmp.ne.s32.totalorder %s221, %s222
      %p236 = scmp.eq.s32.totalorder %s39, 7
      %p237 = por %p235, %p236
      %p239 = scmp.ne.s32.totalorder %s222, %s238
      %p240 = scmp.eq.s32.totalorder %s39, 0
      %p241 = por %p239, %p240
      %s242 = ssub.s32 %s41, %s55
      %p243 = scmp.eq.s32.totalorder %s242, 0
      %s245 = sadd.s32 %s244, 1
      %s246 = scalar_select %p243, %s244, %s245
      %p249 = pneg %p243
      %p250 = scmp.eq.s32.totalorder %s33, 7
      %p251 = por %p249, %p250
      %p252 = scmp.ne.s32.totalorder %s244, %s247
      %p253 = scmp.eq.s32.totalorder %s33, 0
      %p254 = por %p252, %p253
      %p255 = scmp.ne.s32.totalorder %s244, %s247
      %p256 = scmp.eq.s32.totalorder %s38, 7
      %p257 = por %p255, %p256
      %p258 = scmp.ne.s32.totalorder %s247, %s248
      %p259 = scmp.eq.s32.totalorder %s38, 0
      %p260 = por %p258, %p259
      %p261 = scmp.ne.s32.totalorder %s247, %s248
      %p262 = scmp.eq.s32.totalorder %s39, 7
      %p263 = por %p261, %p262
      %p265 = scmp.ne.s32.totalorder %s248, %s264
      %p266 = scmp.eq.s32.totalorder %s39, 0
      %p267 = por %p265, %p266
      %s268 = ssub.s32 %s41, %s55
      %p269 = scmp.eq.s32.totalorder %s268, 0
      %s271 = sadd.s32 %s270, 1
      %s272 = scalar_select %p269, %s270, %s271
      %p275 = pneg %p269
      %p276 = scmp.eq.s32.totalorder %s33, 7
      %p277 = por %p275, %p276
      %p278 = scmp.ne.s32.totalorder %s270, %s273
      %p279 = scmp.eq.s32.totalorder %s33, 0
      %p280 = por %p278, %p279
      %p281 = scmp.ne.s32.totalorder %s270, %s273
      %p282 = scmp.eq.s32.totalorder %s38, 7
      %p283 = por %p281, %p282
      %p284 = scmp.ne.s32.totalorder %s273, %s274
      %p285 = scmp.eq.s32.totalorder %s38, 0
      %p286 = por %p284, %p285
      %p287 = scmp.ne.s32.totalorder %s273, %s274
      %p288 = scmp.eq.s32.totalorder %s39, 7
      %p289 = por %p287, %p288
      %p291 = scmp.ne.s32.totalorder %s274, %s290
      %p292 = scmp.eq.s32.totalorder %s39, 0
      %p293 = por %p291, %p292
      %s294 = ssub.s32 %s41, %s55
      %p295 = scmp.eq.s32.totalorder %s294, 0
      %s297 = sadd.s32 %s296, 1
      %s298 = scalar_select %p295, %s296, %s297
      %p301 = pneg %p295
      %p302 = scmp.eq.s32.totalorder %s33, 7
      %p303 = por %p301, %p302
      %p304 = scmp.ne.s32.totalorder %s296, %s299
      %p305 = scmp.eq.s32.totalorder %s33, 0
      %p306 = por %p304, %p305
      %p307 = scmp.ne.s32.totalorder %s296, %s299
      %p308 = scmp.eq.s32.totalorder %s38, 7
      %p309 = por %p307, %p308
      %p310 = scmp.ne.s32.totalorder %s299, %s300
      %p311 = scmp.eq.s32.totalorder %s38, 0
      %p312 = por %p310, %p311
      %p313 = scmp.ne.s32.totalorder %s299, %s300
      %p314 = scmp.eq.s32.totalorder %s39, 7
      %p315 = por %p313, %p314
      %p317 = scmp.ne.s32.totalorder %s300, %s316
      %p318 = scmp.eq.s32.totalorder %s39, 0
      %p319 = por %p317, %p318
      %s320 = ssub.s32 %s41, %s55
      %p321 = scmp.eq.s32.totalorder %s320, 0
      %s323 = sadd.s32 %s322, 1
      %s324 = scalar_select %p321, %s322, %s323
      %p327 = pneg %p321
      %p328 = scmp.eq.s32.totalorder %s33, 7
      %p329 = por %p327, %p328
      %p330 = scmp.ne.s32.totalorder %s322, %s325
      %p331 = scmp.eq.s32.totalorder %s33, 0
      %p332 = por %p330, %p331
      %p333 = scmp.ne.s32.totalorder %s322, %s325
      %p334 = scmp.eq.s32.totalorder %s38, 7
      %p335 = por %p333, %p334
      %p336 = scmp.ne.s32.totalorder %s325, %s326
      %p337 = scmp.eq.s32.totalorder %s38, 0
      %p338 = por %p336, %p337
      %p339 = scmp.ne.s32.totalorder %s325, %s326
      %p340 = scmp.eq.s32.totalorder %s39, 7
      %p341 = por %p339, %p340
      %p343 = scmp.ne.s32.totalorder %s326, %s342
      %p344 = scmp.eq.s32.totalorder %s39, 0
      %p345 = por %p343, %p344
      %s346 = ssub.s32 %s41, %s55
      %p347 = scmp.eq.s32.totalorder %s346, 0
      %s349 = sadd.s32 %s348, 1
      %s350 = scalar_select %p347, %s348, %s349
      %p353 = pneg %p347
      %p354 = scmp.eq.s32.totalorder %s33, 7
      %p355 = por %p353, %p354
      %p356 = scmp.ne.s32.totalorder %s348, %s351
      %p357 = scmp.eq.s32.totalorder %s33, 0
      %p358 = por %p356, %p357
      %p359 = scmp.ne.s32.totalorder %s348, %s351
      %p360 = scmp.eq.s32.totalorder %s38, 7
      %p361 = por %p359, %p360
      %p362 = scmp.ne.s32.totalorder %s351, %s352
      %p363 = scmp.eq.s32.totalorder %s38, 0
      %p364 = por %p362, %p363
      %p365 = scmp.ne.s32.totalorder %s351, %s352
      %p366 = scmp.eq.s32.totalorder %s39, 7
      %p367 = por %p365, %p366
      %p369 = scmp.ne.s32.totalorder %s352, %s368
      %p370 = scmp.eq.s32.totalorder %s39, 0
      %p371 = por %p369, %p370
      %s372 = ssub.s32 %s41, %s55
      %p373 = scmp.eq.s32.totalorder %s372, 0
      %s375 = sadd.s32 %s374, 1
      %s376 = scalar_select %p373, %s374, %s375
      %p379 = pneg %p373
      %p380 = scmp.eq.s32.totalorder %s33, 7
      %p381 = por %p379, %p380
      %p382 = scmp.ne.s32.totalorder %s374, %s377
      %p383 = scmp.eq.s32.totalorder %s33, 0
      %p384 = por %p382, %p383
      %p385 = scmp.ne.s32.totalorder %s374, %s377
      %p386 = scmp.eq.s32.totalorder %s38, 7
      %p387 = por %p385, %p386
      %p388 = scmp.ne.s32.totalorder %s377, %s378
      %p389 = scmp.eq.s32.totalorder %s38, 0
      %p390 = por %p388, %p389
      %p391 = scmp.ne.s32.totalorder %s377, %s378
      %p392 = scmp.eq.s32.totalorder %s39, 7
      %p393 = por %p391, %p392
      %p395 = scmp.ne.s32.totalorder %s378, %s394
      %p396 = scmp.eq.s32.totalorder %s39, 0
      %p397 = por %p395, %p396
      %s398 = ssub.s32 %s41, %s55
      %p399 = scmp.eq.s32.totalorder %s398, 0
      %s401 = sadd.s32 %s400, 1
      %s402 = scalar_select %p399, %s400, %s401
      %p405 = pneg %p399
      %p406 = scmp.eq.s32.totalorder %s33, 7
      %p407 = por %p405, %p406
      %p408 = scmp.ne.s32.totalorder %s400, %s403
      %p409 = scmp.eq.s32.totalorder %s33, 0
      %p410 = por %p408, %p409
      %p411 = scmp.ne.s32.totalorder %s400, %s403
      %p412 = scmp.eq.s32.totalorder %s38, 7
      %p413 = por %p411, %p412
      %p414 = scmp.ne.s32.totalorder %s403, %s404
      %p415 = scmp.eq.s32.totalorder %s38, 0
      %p416 = por %p414, %p415
      %p417 = scmp.ne.s32.totalorder %s403, %s404
      %p418 = scmp.eq.s32.totalorder %s39, 7
      %p419 = por %p417, %p418
      %p421 = scmp.ne.s32.totalorder %s404, %s420
      %p422 = scmp.eq.s32.totalorder %s39, 0
      %p423 = por %p421, %p422
      %s424 = ssub.s32 %s41, %s55
      %p425 = scmp.eq.s32.totalorder %s424, 0
      %s427 = sadd.s32 %s426, 1
      %s428 = scalar_select %p425, %s426, %s427
      %p431 = pneg %p425
      %p432 = scmp.eq.s32.totalorder %s33, 7
      %p433 = por %p431, %p432
      %p434 = scmp.ne.s32.totalorder %s426, %s429
      %p435 = scmp.eq.s32.totalorder %s33, 0
      %p436 = por %p434, %p435
      %p437 = scmp.ne.s32.totalorder %s426, %s429
      %p438 = scmp.eq.s32.totalorder %s38, 7
      %p439 = por %p437, %p438
      %p440 = scmp.ne.s32.totalorder %s429, %s430
      %p441 = scmp.eq.s32.totalorder %s38, 0
      %p442 = por %p440, %p441
      %p443 = scmp.ne.s32.totalorder %s429, %s430
      %p444 = scmp.eq.s32.totalorder %s39, 7
      %p445 = por %p443, %p444
      %p447 = scmp.ne.s32.totalorder %s430, %s446
      %p448 = scmp.eq.s32.totalorder %s39, 0
      %p449 = por %p447, %p448
      %s450 = ssub.s32 %s41, %s55
      %p451 = scmp.eq.s32.totalorder %s450, 0
      %s453 = sadd.s32 %s452, 1
      %s454 = scalar_select %p451, %s452, %s453
      %p457 = pneg %p451
      %p458 = scmp.eq.s32.totalorder %s33, 7
      %p459 = por %p457, %p458
      %p460 = scmp.ne.s32.totalorder %s452, %s455
      %p461 = scmp.eq.s32.totalorder %s33, 0
      %p462 = por %p460, %p461
      %p463 = scmp.ne.s32.totalorder %s452, %s455
      %p464 = scmp.eq.s32.totalorder %s38, 7
      %p465 = por %p463, %p464
      %p466 = scmp.ne.s32.totalorder %s455, %s456
      %p467 = scmp.eq.s32.totalorder %s38, 0
      %p468 = por %p466, %p467
      %p469 = scmp.ne.s32.totalorder %s455, %s456
      %p470 = scmp.eq.s32.totalorder %s39, 7
      %p471 = por %p469, %p470
      %p473 = scmp.ne.s32.totalorder %s456, %s472
      %p474 = scmp.eq.s32.totalorder %s39, 0
      %p475 = por %p473, %p474
      %s476 = ssub.s32 %s41, %s55
      %p477 = scmp.eq.s32.totalorder %s476, 0
      %s479 = sadd.s32 %s478, 1
      %s480 = scalar_select %p477, %s478, %s479
      %p483 = pneg %p477
      %p484 = scmp.eq.s32.totalorder %s33, 7
      %p485 = por %p483, %p484
      %p486 = scmp.ne.s32.totalorder %s478, %s481
      %p487 = scmp.eq.s32.totalorder %s33, 0
      %p488 = por %p486, %p487
      %p489 = scmp.ne.s32.totalorder %s478, %s481
      %p490 = scmp.eq.s32.totalorder %s38, 7
      %p491 = por %p489, %p490
      %p492 = scmp.ne.s32.totalorder %s481, %s482
      %p493 = scmp.eq.s32.totalorder %s38, 0
      %p494 = por %p492, %p493
      %p495 = scmp.ne.s32.totalorder %s481, %s482
      %p496 = scmp.eq.s32.totalorder %s39, 7
      %p497 = por %p495, %p496
      %p499 = scmp.ne.s32.totalorder %s482, %s498
      %p500 = scmp.eq.s32.totalorder %s39, 0
      %p501 = por %p499, %p500
      %s503 = sadd.s32 %s502, 1
      %p506 = scmp.eq.s32.totalorder %s33, 7
      %p507 = scmp.ne.s32.totalorder %s502, %s504
      %p508 = scmp.eq.s32.totalorder %s33, 0
      %p509 = por %p507, %p508
      %p510 = scmp.ne.s32.totalorder %s502, %s504
      %p511 = scmp.eq.s32.totalorder %s38, 7
      %p512 = por %p510, %p511
      %p513 = scmp.ne.s32.totalorder %s504, %s505
      %p514 = scmp.eq.s32.totalorder %s38, 0
      %p515 = por %p513, %p514
      %p516 = scmp.ne.s32.totalorder %s504, %s505
      %p517 = scmp.eq.s32.totalorder %s39, 7
      %p518 = por %p516, %p517
      %p520 = scmp.ne.s32.totalorder %s505, %s519
      %p521 = scmp.eq.s32.totalorder %s39, 0
      %p522 = por %p520, %p521
      %s524 = sadd.s32 %s523, 1
      %p527 = scmp.eq.s32.totalorder %s33, 7
      %p528 = scmp.ne.s32.totalorder %s523, %s525
      %p529 = scmp.eq.s32.totalorder %s33, 0
      %p530 = por %p528, %p529
      %p531 = scmp.ne.s32.totalorder %s523, %s525
      %p532 = scmp.eq.s32.totalorder %s38, 7
      %p533 = por %p531, %p532
      %p534 = scmp.ne.s32.totalorder %s525, %s526
      %p535 = scmp.eq.s32.totalorder %s38, 0
      %p536 = por %p534, %p535
      %p537 = scmp.ne.s32.totalorder %s525, %s526
      %p538 = scmp.eq.s32.totalorder %s39, 7
      %p539 = por %p537, %p538
      %p541 = scmp.ne.s32.totalorder %s526, %s540
      %p542 = scmp.eq.s32.totalorder %s39, 0
      %p543 = por %p541, %p542
      %s544 = ssub.s32 %s40, %s59
      %p545 = scmp.eq.s32.totalorder %s544, 0
      %s547 = sadd.s32 %s546, 1
      %s548 = scalar_select %p545, %s546, %s547
      %p551 = pneg %p545
      %p552 = scmp.eq.s32.totalorder %s33, 7
      %p553 = por %p551, %p552
      %p554 = scmp.ne.s32.totalorder %s546, %s549
      %p555 = scmp.eq.s32.totalorder %s33, 0
      %p556 = por %p554, %p555
      %p557 = scmp.ne.s32.totalorder %s546, %s549
      %p558 = scmp.eq.s32.totalorder %s38, 7
      %p559 = por %p557, %p558
      %p560 = scmp.ne.s32.totalorder %s549, %s550
      %p561 = scmp.eq.s32.totalorder %s38, 0
      %p562 = por %p560, %p561
      %p563 = scmp.ne.s32.totalorder %s549, %s550
      %p564 = scmp.eq.s32.totalorder %s39, 7
      %p565 = por %p563, %p564
      %p567 = scmp.ne.s32.totalorder %s550, %s566
      %p568 = scmp.eq.s32.totalorder %s39, 0
      %p569 = por %p567, %p568
      %p570 = scmp.le.s32.totalorder 1, %s33
      %p571 = scmp.lt.s32.totalorder %s33, 9
      %p572 = pnand %p570, %p571
      %p573 = pneg %p572
      // Predicated region
      $region9: #{tpu_custom_call.1} parent=5 // pred_check
        _
      $region10: #{tpu_custom_call.1} parent=5 // pred_check_branch
        %575 = sbr.rel (%p572) target = $region12
      $region11: #{tpu_custom_call.1} parent=5 // pred_region
        %s576 = ssub.s32 %s33, 1
        // Predicated region
        $region13: #{tpu_custom_call.1} parent=11 // pred_check
          %p577 = pneg %p515
        $region14: #{tpu_custom_call.1} parent=11 // pred_check_branch
          %579 = sbr.rel (%p577) target = $region16
        $region15: #{tpu_custom_call.1} parent=11 // pred_region
          _
        $region16: #{tpu_custom_call.1} parent=11 // pred_fallthru
          _
        // Predicated region
        $region17: #{tpu_custom_call.1} parent=11 // pred_check
          %p580 = pneg %p536
        $region18: #{tpu_custom_call.1} parent=11 // pred_check_branch
          %582 = sbr.rel (%p580) target = $region20
        $region19: #{tpu_custom_call.1} parent=11 // pred_region
          _
        $region20: #{tpu_custom_call.1} parent=11 // pred_fallthru
          _
      $region12: #{tpu_custom_call.1} parent=5 // pred_fallthru
        _
      %p583 = scmp.lt.s32.totalorder %s33, 8
      // Predicated region
      $region21: #{tpu_custom_call.1} parent=5 // pred_check
        %p584 = pneg %p583
      $region22: #{tpu_custom_call.1} parent=5 // pred_check_branch
        %586 = sbr.rel (%p584) target = $region24
      $region23: #{tpu_custom_call.1} parent=5 // pred_region
        // Predicated region
        $region25: #{tpu_custom_call.1} parent=23 // pred_check
          %p587 = pneg %p72
        $region26: #{tpu_custom_call.1} parent=23 // pred_check_branch
          %589 = sbr.rel (%p587) target = $region28
        $region27: #{tpu_custom_call.1} parent=23 // pred_region
          %p590 = scmp.lt.s32.totalorder %s40, 1
          %s591 = scalar_select %p590, %s40, 1
          %s592 = smul.addr %s591, 2
          %s593 = smul.addr %s592, 8
          %s594 = scalar_lea.vmem %s0, %s593
        $region28: #{tpu_custom_call.1} parent=23 // pred_fallthru
          _
        // Predicated region
        $region29: #{tpu_custom_call.1} parent=23 // pred_check
          %p595 = pneg %p98
        $region30: #{tpu_custom_call.1} parent=23 // pred_check_branch
          %597 = sbr.rel (%p595) target = $region32
        $region31: #{tpu_custom_call.1} parent=23 // pred_region
          %p598 = scmp.lt.s32.totalorder %s41, 3
          %s599 = scalar_select %p598, %s41, 3
          %s600 = smul.addr %s599, 12
          %s601 = smul.addr %s600, 4
          %s602 = scalar_lea.vmem %s1, %s601
        $region32: #{tpu_custom_call.1} parent=23 // pred_fallthru
          _
        // Predicated region
        $region33: #{tpu_custom_call.1} parent=23 // pred_check
          %p603 = pneg %p124
        $region34: #{tpu_custom_call.1} parent=23 // pred_check_branch
          %605 = sbr.rel (%p603) target = $region36
        $region35: #{tpu_custom_call.1} parent=23 // pred_region
          %p606 = scmp.lt.s32.totalorder %s41, 3
          %s607 = scalar_select %p606, %s41, 3
          %s608 = scalar_lea.vmem %s2, %s607
        $region36: #{tpu_custom_call.1} parent=23 // pred_fallthru
          _
        // Predicated region
        $region37: #{tpu_custom_call.1} parent=23 // pred_check
          %p609 = pneg %p150
        $region38: #{tpu_custom_call.1} parent=23 // pred_check_branch
          %611 = sbr.rel (%p609) target = $region40
        $region39: #{tpu_custom_call.1} parent=23 // pred_region
          %p612 = scmp.lt.s32.totalorder %s41, 3
          %s613 = scalar_select %p612, %s41, 3
          %s614 = smul.addr %s613, 12
          %s615 = smul.addr %s614, 4
          %s616 = scalar_lea.vmem %s3, %s615
        $region40: #{tpu_custom_call.1} parent=23 // pred_fallthru
          _
        // Predicated region
        $region41: #{tpu_custom_call.1} parent=23 // pred_check
          %p617 = pneg %p176
        $region42: #{tpu_custom_call.1} parent=23 // pred_check_branch
          %619 = sbr.rel (%p617) target = $region44
        $region43: #{tpu_custom_call.1} parent=23 // pred_region
          %p620 = scmp.lt.s32.totalorder %s41, 3
          %s621 = scalar_select %p620, %s41, 3
          %s622 = scalar_lea.vmem %s4, %s621
        $region44: #{tpu_custom_call.1} parent=23 // pred_fallthru
          _
        // Predicated region
        $region45: #{tpu_custom_call.1} parent=23 // pred_check
          %p623 = pneg %p202
        $region46: #{tpu_custom_call.1} parent=23 // pred_check_branch
          %625 = sbr.rel (%p623) target = $region48
        $region47: #{tpu_custom_call.1} parent=23 // pred_region
          %s626 = sand.u32 %s192, 1
          %s627 = scalar_lea.sflag [#allocation7], %s626
          %s628 = sand.u32 %s192, 1
          %s629 = smul.addr %s628, 48
          %s630 = scalar_lea.vmem [#allocation6], %s629
          %s632 = ssub.s32 768, 768
          %633 = vsyncadd %s627, %s632
          %s634 = smul.addr %s41, 12
          %s635 = smul.addr %s634, 64
          %s636 = scalar_lea.hbm %s5, %s635
          %s637 = sshll.u32 %s630, 4
          %s638 = int_to_ptr.vmem [resolvable:$true] %s637
          %643 = dma.hbm_to_vmem [thread:$0]  %s636, 768, %s638, %s627, 64, 64, 4
        $region48: #{tpu_custom_call.1} parent=23 // pred_fallthru
          _
        // Predicated region
        $region49: #{tpu_custom_call.1} parent=23 // pred_check
          %p644 = pneg %p228
        $region50: #{tpu_custom_call.1} parent=23 // pred_check_branch
          %646 = sbr.rel (%p644) target = $region52
        $region51: #{tpu_custom_call.1} parent=23 // pred_region
          %p647 = scmp.lt.s32.totalorder %s41, 3
          %s648 = scalar_select %p647, %s41, 3
          %s649 = scalar_lea.vmem %s6, %s648
        $region52: #{tpu_custom_call.1} parent=23 // pred_fallthru
          _
        // Predicated region
        $region53: #{tpu_custom_call.1} parent=23 // pred_check
          %p650 = pneg %p254
        $region54: #{tpu_custom_call.1} parent=23 // pred_check_branch
          %652 = sbr.rel (%p650) target = $region56
        $region55: #{tpu_custom_call.1} parent=23 // pred_region
          %s653 = sand.u32 %s244, 1
          %s654 = scalar_lea.sflag [#allocation9], %s653
          %s655 = sand.u32 %s244, 1
          %s656 = smul.addr %s655, 48
          %s657 = scalar_lea.vmem [#allocation8], %s656
          %s659 = ssub.s32 768, 768
          %660 = vsyncadd %s654, %s659
          %s661 = smul.addr %s41, 12
          %s662 = smul.addr %s661, 64
          %s663 = scalar_lea.hbm %s7, %s662
          %s664 = sshll.u32 %s657, 4
          %s665 = int_to_ptr.vmem [resolvable:$true] %s664
          %670 = dma.hbm_to_vmem [thread:$0]  %s663, 768, %s665, %s654, 64, 64, 4
        $region56: #{tpu_custom_call.1} parent=23 // pred_fallthru
          _
        // Predicated region
        $region57: #{tpu_custom_call.1} parent=23 // pred_check
          %p671 = pneg %p280
        $region58: #{tpu_custom_call.1} parent=23 // pred_check_branch
          %673 = sbr.rel (%p671) target = $region60
        $region59: #{tpu_custom_call.1} parent=23 // pred_region
          %p674 = scmp.lt.s32.totalorder %s41, 3
          %s675 = scalar_select %p674, %s41, 3
          %s676 = scalar_lea.vmem %s8, %s675
        $region60: #{tpu_custom_call.1} parent=23 // pred_fallthru
          _
        // Predicated region
        $region61: #{tpu_custom_call.1} parent=23 // pred_check
          %p677 = pneg %p306
        $region62: #{tpu_custom_call.1} parent=23 // pred_check_branch
          %679 = sbr.rel (%p677) target = $region64
        $region63: #{tpu_custom_call.1} parent=23 // pred_region
          %p680 = scmp.lt.s32.totalorder %s41, 3
          %s681 = scalar_select %p680, %s41, 3
          %s682 = scalar_lea.vmem %s9, %s681
        $region64: #{tpu_custom_call.1} parent=23 // pred_fallthru
          _
        // Predicated region
        $region65: #{tpu_custom_call.1} parent=23 // pred_check
          %p683 = pneg %p332
        $region66: #{tpu_custom_call.1} parent=23 // pred_check_branch
          %685 = sbr.rel (%p683) target = $region68
        $region67: #{tpu_custom_call.1} parent=23 // pred_region
          %p686 = scmp.lt.s32.totalorder %s41, 3
          %s687 = scalar_select %p686, %s41, 3
          %s688 = scalar_lea.vmem %s10, %s687
        $region68: #{tpu_custom_call.1} parent=23 // pred_fallthru
          _
        // Predicated region
        $region69: #{tpu_custom_call.1} parent=23 // pred_check
          %p689 = pneg %p358
        $region70: #{tpu_custom_call.1} parent=23 // pred_check_branch
          %691 = sbr.rel (%p689) target = $region72
        $region71: #{tpu_custom_call.1} parent=23 // pred_region
          %p692 = scmp.lt.s32.totalorder %s41, 3
          %s693 = scalar_select %p692, %s41, 3
          %s694 = scalar_lea.vmem %s11, %s693
        $region72: #{tpu_custom_call.1} parent=23 // pred_fallthru
          _
        // Predicated region
        $region73: #{tpu_custom_call.1} parent=23 // pred_check
          %p695 = pneg %p384
        $region74: #{tpu_custom_call.1} parent=23 // pred_check_branch
          %697 = sbr.rel (%p695) target = $region76
        $region75: #{tpu_custom_call.1} parent=23 // pred_region
          %p698 = scmp.lt.s32.totalorder %s41, 3
          %s699 = scalar_select %p698, %s41, 3
          %s700 = scalar_lea.vmem %s12, %s699
        $region76: #{tpu_custom_call.1} parent=23 // pred_fallthru
          _
        // Predicated region
        $region77: #{tpu_custom_call.1} parent=23 // pred_check
          %p701 = pneg %p410
        $region78: #{tpu_custom_call.1} parent=23 // pred_check_branch
          %703 = sbr.rel (%p701) target = $region80
        $region79: #{tpu_custom_call.1} parent=23 // pred_region
          %p704 = scmp.lt.s32.totalorder %s41, 3
          %s705 = scalar_select %p704, %s41, 3
          %s706 = smul.addr %s705, 24
          %s707 = smul.addr %s706, 4
          %s708 = scalar_lea.vmem %s13, %s707
        $region80: #{tpu_custom_call.1} parent=23 // pred_fallthru
          _
        // Predicated region
        $region81: #{tpu_custom_call.1} parent=23 // pred_check
          %p709 = pneg %p436
        $region82: #{tpu_custom_call.1} parent=23 // pred_check_branch
          %711 = sbr.rel (%p709) target = $region84
        $region83: #{tpu_custom_call.1} parent=23 // pred_region
          %p712 = scmp.lt.s32.totalorder %s41, 3
          %s713 = scalar_select %p712, %s41, 3
          %s714 = smul.addr %s713, 2
          %s715 = scalar_lea.vmem %s14, %s714
        $region84: #{tpu_custom_call.1} parent=23 // pred_fallthru
          _
        // Predicated region
        $region85: #{tpu_custom_call.1} parent=23 // pred_check
          %p716 = pneg %p462
        $region86: #{tpu_custom_call.1} parent=23 // pred_check_branch
          %718 = sbr.rel (%p716) target = $region88
        $region87: #{tpu_custom_call.1} parent=23 // pred_region
          %p719 = scmp.lt.s32.totalorder %s41, 3
          %s720 = scalar_select %p719, %s41, 3
          %s721 = smul.addr %s720, 32
          %s722 = smul.addr %s721, 4
          %s723 = scalar_lea.vmem %s15, %s722
        $region88: #{tpu_custom_call.1} parent=23 // pred_fallthru
          _
        // Predicated region
        $region89: #{tpu_custom_call.1} parent=23 // pred_check
          %p724 = pneg %p488
        $region90: #{tpu_custom_call.1} parent=23 // pred_check_branch
          %726 = sbr.rel (%p724) target = $region92
        $region91: #{tpu_custom_call.1} parent=23 // pred_region
          %p727 = scmp.lt.s32.totalorder %s41, 3
          %s728 = scalar_select %p727, %s41, 3
          %s729 = scalar_lea.vmem %s16, %s728
        $region92: #{tpu_custom_call.1} parent=23 // pred_fallthru
          _
      $region24: #{tpu_custom_call.1} parent=5 // pred_fallthru
        _
      %p730 = scmp.le.s32.totalorder 1, %s33
      %p731 = scmp.lt.s32.totalorder %s33, 9
      %p732 = pnand %p730, %p731
      %p733 = pneg %p732
      // Predicated region
      $region93: #{tpu_custom_call.1} parent=5 // pred_check
        _
      $region94: #{tpu_custom_call.1} parent=5 // pred_check_branch
        %735 = sbr.rel (%p732) target = $region96
      $region95: #{tpu_custom_call.1} parent=5 // pred_region
        %s736 = ssub.s32 %s33, 1
        %s737 = sand.u32 %s195, 1
        %s738 = scalar_lea.sflag [#allocation7], %s737
        %s739 = sand.u32 %s195, 1
        %s740 = smul.addr %s739, 48
        %s741 = scalar_lea.vmem [#allocation6], %s740
        // Predicated region
        $region97: #{tpu_custom_call.1} parent=95 // pred_check
          %p742 = pneg %p208
        $region98: #{tpu_custom_call.1} parent=95 // pred_check_branch
          %744 = sbr.rel (%p742) target = $region100
        $region99: #{tpu_custom_call.1} parent=95 // pred_region
          %745 = dma.done %s738, 768
        $region100: #{tpu_custom_call.1} parent=95 // pred_fallthru
          _
        %s746 = sand.u32 %s247, 1
        %s747 = scalar_lea.sflag [#allocation9], %s746
        %s748 = sand.u32 %s247, 1
        %s749 = smul.addr %s748, 48
        %s750 = scalar_lea.vmem [#allocation8], %s749
        // Predicated region
        $region101: #{tpu_custom_call.1} parent=95 // pred_check
          %p751 = pneg %p260
        $region102: #{tpu_custom_call.1} parent=95 // pred_check_branch
          %753 = sbr.rel (%p751) target = $region104
        $region103: #{tpu_custom_call.1} parent=95 // pred_region
          %754 = dma.done %s747, 768
        $region104: #{tpu_custom_call.1} parent=95 // pred_fallthru
          _
        %p755 = scmp.lt.s32.totalorder %s43, 1
        %s756 = scalar_select %p755, %s43, 1
        %s757 = smul.addr %s756, 2
        %s758 = smul.addr %s757, 8
        %s759 = scalar_lea.vmem %s0, %s758
        %p760 = pneg %p78
        %p761 = pneg %p75
        %p762 = scmp.lt.s32.totalorder %s44, 3
        %s763 = scalar_select %p762, %s44, 3
        %s764 = smul.addr %s763, 12
        %s765 = smul.addr %s764, 4
        %s766 = scalar_lea.vmem %s1, %s765
        %p767 = pneg %p104
        %p768 = pneg %p101
        %p769 = scmp.lt.s32.totalorder %s44, 3
        %s770 = scalar_select %p769, %s44, 3
        %s771 = scalar_lea.vmem %s2, %s770
        %p772 = pneg %p130
        %p773 = pneg %p127
        %p774 = scmp.lt.s32.totalorder %s44, 3
        %s775 = scalar_select %p774, %s44, 3
        %s776 = smul.addr %s775, 12
        %s777 = smul.addr %s776, 4
        %s778 = scalar_lea.vmem %s3, %s777
        %p779 = pneg %p156
        %p780 = pneg %p153
        %p781 = scmp.lt.s32.totalorder %s44, 3
        %s782 = scalar_select %p781, %s44, 3
        %s783 = scalar_lea.vmem %s4, %s782
        %p784 = pneg %p182
        %p785 = pneg %p179
        %s786 = sand.u32 %s195, 1
        %s787 = scalar_lea.sflag [#allocation7], %s786
        %s788 = sand.u32 %s195, 1
        %s789 = smul.addr %s788, 48
        %s790 = scalar_lea.vmem [#allocation6], %s789
        %p791 = pneg %p208
        %p792 = pneg %p205
        %p793 = scmp.lt.s32.totalorder %s44, 3
        %s794 = scalar_select %p793, %s44, 3
        %s795 = scalar_lea.vmem %s6, %s794
        %p796 = pneg %p234
        %p797 = pneg %p231
        %s798 = sand.u32 %s247, 1
        %s799 = scalar_lea.sflag [#allocation9], %s798
        %s800 = sand.u32 %s247, 1
        %s801 = smul.addr %s800, 48
        %s802 = scalar_lea.vmem [#allocation8], %s801
        %p803 = pneg %p260
        %p804 = pneg %p257
        %p805 = scmp.lt.s32.totalorder %s44, 3
        %s806 = scalar_select %p805, %s44, 3
        %s807 = scalar_lea.vmem %s8, %s806
        %p808 = pneg %p286
        %p809 = pneg %p283
        %p810 = scmp.lt.s32.totalorder %s44, 3
        %s811 = scalar_select %p810, %s44, 3
        %s812 = scalar_lea.vmem %s9, %s811
        %p813 = pneg %p312
        %p814 = pneg %p309
        %p815 = scmp.lt.s32.totalorder %s44, 3
        %s816 = scalar_select %p815, %s44, 3
        %s817 = scalar_lea.vmem %s10, %s816
        %p818 = pneg %p338
        %p819 = pneg %p335
        %p820 = scmp.lt.s32.totalorder %s44, 3
        %s821 = scalar_select %p820, %s44, 3
        %s822 = scalar_lea.vmem %s11, %s821
        %p823 = pneg %p364
        %p824 = pneg %p361
        %p825 = scmp.lt.s32.totalorder %s44, 3
        %s826 = scalar_select %p825, %s44, 3
        %s827 = scalar_lea.vmem %s12, %s826
        %p828 = pneg %p390
        %p829 = pneg %p387
        %p830 = scmp.lt.s32.totalorder %s44, 3
        %s831 = scalar_select %p830, %s44, 3
        %s832 = smul.addr %s831, 24
        %s833 = smul.addr %s832, 4
        %s834 = scalar_lea.vmem %s13, %s833
        %p835 = pneg %p416
        %p836 = pneg %p413
        %p837 = scmp.lt.s32.totalorder %s44, 3
        %s838 = scalar_select %p837, %s44, 3
        %s839 = smul.addr %s838, 2
        %s840 = scalar_lea.vmem %s14, %s839
        %p841 = pneg %p442
        %p842 = pneg %p439
        %p843 = scmp.lt.s32.totalorder %s44, 3
        %s844 = scalar_select %p843, %s44, 3
        %s845 = smul.addr %s844, 32
        %s846 = smul.addr %s845, 4
        %s847 = scalar_lea.vmem %s15, %s846
        %p848 = pneg %p468
        %p849 = pneg %p465
        %p850 = scmp.lt.s32.totalorder %s44, 3
        %s851 = scalar_select %p850, %s44, 3
        %s852 = scalar_lea.vmem %s16, %s851
        %p853 = pneg %p494
        %p854 = pneg %p491
        %p855 = pneg %p515
        %p856 = pneg %p512
        %p857 = pneg %p536
        %p858 = pneg %p533
        %p859 = pneg %p562
        %p860 = pneg %p559
        %p861 = scmp.lt.s32.totalorder %s43, 1
        %s862 = scalar_select %p861, %s43, 1
        %s863 = scalar_lea.vmem %s19, %s862
        %p864 = scmp.lt.s32.totalorder %s43, 1
        %s865 = scalar_select %p864, %s43, 1
        %s866 = smul.addr %s865, 2
        %s867 = smul.addr %s866, 8
        %s868 = scalar_lea.vmem %s0, %s867
        %p869 = scmp.lt.s32.totalorder %s44, 3
        %s870 = scalar_select %p869, %s44, 3
        %s871 = smul.addr %s870, 12
        %s872 = smul.addr %s871, 4
        %s873 = scalar_lea.vmem %s1, %s872
        %p874 = scmp.lt.s32.totalorder %s44, 3
        %s875 = scalar_select %p874, %s44, 3
        %s876 = scalar_lea.vmem %s2, %s875
        %p877 = scmp.lt.s32.totalorder %s44, 3
        %s878 = scalar_select %p877, %s44, 3
        %s879 = smul.addr %s878, 12
        %s880 = smul.addr %s879, 4
        %s881 = scalar_lea.vmem %s3, %s880
        %p882 = scmp.lt.s32.totalorder %s44, 3
        %s883 = scalar_select %p882, %s44, 3
        %s884 = scalar_lea.vmem %s4, %s883
        %p885 = scmp.lt.s32.totalorder %s44, 3
        %s886 = scalar_select %p885, %s44, 3
        %s887 = scalar_lea.vmem %s6, %s886
        %p888 = scmp.lt.s32.totalorder %s44, 3
        %s889 = scalar_select %p888, %s44, 3
        %s890 = scalar_lea.vmem %s8, %s889
        %p891 = scmp.lt.s32.totalorder %s44, 3
        %s892 = scalar_select %p891, %s44, 3
        %s893 = scalar_lea.vmem %s9, %s892
        %p894 = scmp.lt.s32.totalorder %s44, 3
        %s895 = scalar_select %p894, %s44, 3
        %s896 = scalar_lea.vmem %s10, %s895
        %p897 = scmp.lt.s32.totalorder %s44, 3
        %s898 = scalar_select %p897, %s44, 3
        %s899 = scalar_lea.vmem %s11, %s898
        %p900 = scmp.lt.s32.totalorder %s44, 3
        %s901 = scalar_select %p900, %s44, 3
        %s902 = scalar_lea.vmem %s12, %s901
        %p903 = scmp.lt.s32.totalorder %s44, 3
        %s904 = scalar_select %p903, %s44, 3
        %s905 = smul.addr %s904, 24
        %s906 = smul.addr %s905, 4
        %s907 = scalar_lea.vmem %s13, %s906
        %p908 = scmp.lt.s32.totalorder %s44, 3
        %s909 = scalar_select %p908, %s44, 3
        %s910 = smul.addr %s909, 2
        %s911 = scalar_lea.vmem %s14, %s910
        %p912 = scmp.lt.s32.totalorder %s44, 3
        %s913 = scalar_select %p912, %s44, 3
        %s914 = smul.addr %s913, 32
        %s915 = smul.addr %s914, 4
        %s916 = scalar_lea.vmem %s15, %s915
        %p917 = scmp.lt.s32.totalorder %s44, 3
        %s918 = scalar_select %p917, %s44, 3
        %s919 = scalar_lea.vmem %s16, %s918
        %p920 = scmp.lt.s32.totalorder %s43, 1
        %s921 = scalar_select %p920, %s43, 1
        %s922 = scalar_lea.vmem %s19, %s921
        %p924 = scmp.eq.s32.totalorder %s44, 0
        %p925 = scmp.eq.s32.totalorder %s45, 0
        %p926 = pnand %p924, %p925
        %p927 = pneg %p926
        // Predicated region
        $region105: #{tpu_custom_call.1} parent=95 // pred_check
          _
        $region106: #{tpu_custom_call.1} parent=95 // pred_check_branch
          %929 = sbr.rel (%p926) target = $region108
        $region107: #{tpu_custom_call.1} parent=95 // pred_region
          %v930 = vld [vmem:[%s868] sm:$0xff]
          %v931 = vld [vmem:[%s868 + $0x8] sm:$0xff]
          %vm932 = vcmask 785408
          %933 = vst.msk [vmem:[#allocation2] sm:$0xff] %vm932, %v930
          %934 = vst.msk [vmem:[#allocation2 + $0x8] sm:$0xff] %vm932, %v931
        $region108: #{tpu_custom_call.1} parent=95 // pred_fallthru
          _
        // Predicated region
        $region109: #{tpu_custom_call.1} parent=95 // pred_check
          %p935 = pneg %p925
        $region110: #{tpu_custom_call.1} parent=95 // pred_check_branch
          %937 = sbr.rel (%p935) target = $region112
        $region111: #{tpu_custom_call.1} parent=95 // pred_region
          %v938 = vld [vmem:[#allocation2] sm:$0xff]
          %v939 = vld [vmem:[#allocation2 + $0x8] sm:$0xff]
          %v940 = vpack.c.bf16 %v939, %v938
          %v941 = vld [vmem:[%s881] sm:$0xf]
          %v942 = vld [vmem:[%s881 + $0x4] sm:$0xf]
          %v943 = vld [vmem:[%s881 + $0x8] sm:$0xf]
          %v944 = vld [vmem:[%s881 + $0xc] sm:$0xf]
          %v945 = vld [vmem:[%s881 + $0x10] sm:$0xf]
          %v946 = vld [vmem:[%s881 + $0x14] sm:$0xf]
          %v947 = vld [vmem:[%s881 + $0x18] sm:$0xf]
          %v948 = vld [vmem:[%s881 + $0x1c] sm:$0xf]
          %v949 = vld [vmem:[%s881 + $0x20] sm:$0xf]
          %v950 = vld [vmem:[%s881 + $0x24] sm:$0xf]
          %v951 = vld [vmem:[%s881 + $0x28] sm:$0xf]
          %v952 = vld [vmem:[%s881 + $0x2c] sm:$0xf]
          %v953 = vld [vmem:[%s884] sm:$0x1]
          %v955 = vlaneseq
          %v956 = vshrl.u32 %v955, 7
          %v957 = vsub.s32 0, %v956
          %v958 = vrot.slane %v953, %v957
          %v972 = vunpack.c.l.b16 %v941
          %v973 = vunpack.c.l.b16 %v942
          %v974 = vunpack.c.l.b16 %v943
          %v975 = vunpack.c.l.b16 %v944
          %v976 = vunpack.c.l.b16 %v945
          %v977 = vunpack.c.l.b16 %v946
          %v978 = vunpack.c.l.b16 %v947
          %v979 = vunpack.c.l.b16 %v948
          %v980 = vunpack.c.l.b16 %v949
          %v981 = vunpack.c.l.b16 %v950
          %v982 = vunpack.c.l.b16 %v951
          %v983 = vunpack.c.l.b16 %v952
          %v984 = vpack.c.b16 %v973, %v972
          %v985 = vpack.c.b16 %v975, %v974
          %v986 = vpack.c.b16 %v977, %v976
          %v987 = vpack.c.b16 %v979, %v978
          %v988 = vpack.c.b16 %v981, %v980
          %v989 = vpack.c.b16 %v983, %v982
          %vm996 = vcmask 785408
          %v998 = vsel %vm996, %v940, 0
          %1000 = vmatprep.subr.bf16.mxu0 0
          %1001 = vmatpush1.bf16.msra.mxu0 %v984
          %1002 = vmatprep.subr.bf16.mxu0 0
          %1003 = vmatpush1.bf16.msra.mxu0 %v985
          %1004 = vmatprep.subr.bf16.mxu0 0
          %1005 = vmatpush1.bf16.msra.mxu0 %v986
          %1006 = vmatprep.subr.bf16.mxu0 0
          %1007 = vmatpush1.bf16.msra.mxu0 %v987
          %1008 = vmatprep.subr.bf16.mxu0 0
          %1009 = vmatpush1.bf16.msra.mxu0 %v988
          %1010 = vmatprep.subr.bf16.mxu0 0
          %1011 = vmatpush1.bf16.msra.mxu0 %v989
          %1012 = vmatprep.subr.bf16.mxu0 0
          %1013 = vmatpush1.bf16.msra.mxu0 0
          %1014 = vmatprep.subr.bf16.mxu0 0
          %1015 = vmatpush1.bf16.msra.mxu0 0
          %1016 = vmatprep.subr.bf16.mxu0 0
          %1017 = vmatpush1.bf16.msra.mxu0 0
          %1018 = vmatprep.subr.bf16.mxu0 0
          %1019 = vmatpush1.bf16.msra.mxu0 0
          %1020 = vmatprep.subr.bf16.mxu0 0
          %1021 = vmatpush1.bf16.msra.mxu0 0
          %1022 = vmatprep.subr.bf16.mxu0 0
          %1023 = vmatpush1.bf16.msra.mxu0 0
          %1024 = vmatprep.subr.bf16.mxu0 0
          %1025 = vmatpush1.bf16.msra.mxu0 0
          %1026 = vmatprep.subr.bf16.mxu0 0
          %1027 = vmatpush1.bf16.msra.mxu0 0
          %1028 = vmatprep.subr.bf16.mxu0 0
          %1029 = vmatpush1.bf16.msra.mxu0 0
          %1030 = vmatprep.subr.bf16.mxu0 0
          %1031 = vmatpush1.bf16.msra.mxu0 0
          %1032 = vmatprep.mubr.bf16.mxu0 0
          %1033 = vmatmul.mubr.bf16.gmra.mrb[0].mxu0 %v998
          %v1034 = vpop.f32.mrb[0].mxu0
          %v1035 = vadd.f32 %v958, %v1034
          %v1036 = vpop.f32.mrb[0].mxu0
          %v1037 = vpop.f32.mrb[0].mxu0
          %v1038 = vadd.f32 %v958, %v1037
          %v1039 = vpop.f32.mrb[0].mxu0
          %1040 = vdwg.mxu0
          %v1041 = vld [vmem:[%s741] sm:$0xf]
          %v1042 = vld [vmem:[%s741 + $0x4] sm:$0xf]
          %v1043 = vld [vmem:[%s741 + $0x8] sm:$0xf]
          %v1044 = vld [vmem:[%s741 + $0xc] sm:$0xf]
          %v1045 = vld [vmem:[%s741 + $0x10] sm:$0xf]
          %v1046 = vld [vmem:[%s741 + $0x14] sm:$0xf]
          %v1047 = vld [vmem:[%s741 + $0x18] sm:$0xf]
          %v1048 = vld [vmem:[%s741 + $0x1c] sm:$0xf]
          %v1049 = vld [vmem:[%s741 + $0x20] sm:$0xf]
          %v1050 = vld [vmem:[%s741 + $0x24] sm:$0xf]
          %v1051 = vld [vmem:[%s741 + $0x28] sm:$0xf]
          %v1052 = vld [vmem:[%s741 + $0x2c] sm:$0xf]
          %v1053 = vld [vmem:[%s887] sm:$0x1]
          %v1055 = vlaneseq
          %v1056 = vshrl.u32 %v1055, 7
          %v1057 = vsub.s32 0, %v1056
          %v1058 = vrot.slane %v1053, %v1057
          %v1072 = vunpack.c.l.b16 %v1041
          %v1073 = vunpack.c.l.b16 %v1042
          %v1074 = vunpack.c.l.b16 %v1043
          %v1075 = vunpack.c.l.b16 %v1044
          %v1076 = vunpack.c.l.b16 %v1045
          %v1077 = vunpack.c.l.b16 %v1046
          %v1078 = vunpack.c.l.b16 %v1047
          %v1079 = vunpack.c.l.b16 %v1048
          %v1080 = vunpack.c.l.b16 %v1049
          %v1081 = vunpack.c.l.b16 %v1050
          %v1082 = vunpack.c.l.b16 %v1051
          %v1083 = vunpack.c.l.b16 %v1052
          %v1084 = vpack.c.b16 %v1073, %v1072
          %v1085 = vpack.c.b16 %v1075, %v1074
          %v1086 = vpack.c.b16 %v1077, %v1076
          %v1087 = vpack.c.b16 %v1079, %v1078
          %v1088 = vpack.c.b16 %v1081, %v1080
          %v1089 = vpack.c.b16 %v1083, %v1082
          %1096 = vmatprep.subr.bf16.mxu0 0
          %1097 = vmatpush1.bf16.msra.mxu0 %v1084
          %1098 = vmatprep.subr.bf16.mxu0 0
          %1099 = vmatpush1.bf16.msra.mxu0 %v1085
          %1100 = vmatprep.subr.bf16.mxu0 0
          %1101 = vmatpush1.bf16.msra.mxu0 %v1086
          %1102 = vmatprep.subr.bf16.mxu0 0
          %1103 = vmatpush1.bf16.msra.mxu0 %v1087
          %1104 = vmatprep.subr.bf16.mxu0 0
          %1105 = vmatpush1.bf16.msra.mxu0 %v1088
          %1106 = vmatprep.subr.bf16.mxu0 0
          %1107 = vmatpush1.bf16.msra.mxu0 %v1089
          %1108 = vmatprep.subr.bf16.mxu0 0
          %1109 = vmatpush1.bf16.msra.mxu0 0
          %1110 = vmatprep.subr.bf16.mxu0 0
          %1111 = vmatpush1.bf16.msra.mxu0 0
          %1112 = vmatprep.subr.bf16.mxu0 0
          %1113 = vmatpush1.bf16.msra.mxu0 0
          %1114 = vmatprep.subr.bf16.mxu0 0
          %1115 = vmatpush1.bf16.msra.mxu0 0
          %1116 = vmatprep.subr.bf16.mxu0 0
          %1117 = vmatpush1.bf16.msra.mxu0 0
          %1118 = vmatprep.subr.bf16.mxu0 0
          %1119 = vmatpush1.bf16.msra.mxu0 0
          %1120 = vmatprep.subr.bf16.mxu0 0
          %1121 = vmatpush1.bf16.msra.mxu0 0
          %1122 = vmatprep.subr.bf16.mxu0 0
          %1123 = vmatpush1.bf16.msra.mxu0 0
          %1124 = vmatprep.subr.bf16.mxu0 0
          %1125 = vmatpush1.bf16.msra.mxu0 0
          %1126 = vmatprep.subr.bf16.mxu0 0
          %1127 = vmatpush1.bf16.msra.mxu0 0
          %1128 = vmatprep.mubr.bf16.mxu0 0
          %1129 = vmatmul.mubr.bf16.gmra.mrb[0].mxu0 %v998
          %v1130 = vpop.f32.mrb[0].mxu0
          %v1131 = vadd.f32 %v1058, %v1130
          %v1132 = vpop.f32.mrb[0].mxu0
          %v1133 = vpop.f32.mrb[0].mxu0
          %v1134 = vadd.f32 %v1058, %v1133
          %v1135 = vpop.f32.mrb[0].mxu0
          %1136 = vdwg.mxu0
          %1137 = vxpose.xlu0.b32.start [1/16] %v1035, 128
          %1138 = vxpose.xlu0.b32.cont [2/16] %v1038, 128
          %1139 = vxpose.xlu0.b32.cont [3/16] 0.0, 128
          %1140 = vxpose.xlu0.b32.cont [4/16] 0.0, 128
          %1141 = vxpose.xlu0.b32.cont [5/16] 0.0, 128
          %1142 = vxpose.xlu0.b32.cont [6/16] 0.0, 128
          %1143 = vxpose.xlu0.b32.cont [7/16] 0.0, 128
          %1144 = vxpose.xlu0.b32.cont [8/16] 0.0, 128
          %1145 = vxpose.xlu0.b32.cont [9/16] 0.0, 128
          %1146 = vxpose.xlu0.b32.cont [10/16] 0.0, 128
          %1147 = vxpose.xlu0.b32.cont [11/16] 0.0, 128
          %1148 = vxpose.xlu0.b32.cont [12/16] 0.0, 128
          %1149 = vxpose.xlu0.b32.cont [13/16] 0.0, 128
          %1150 = vxpose.xlu0.b32.cont [14/16] 0.0, 128
          %1151 = vxpose.xlu0.b32.cont [15/16] 0.0, 128
          %1152 = vxpose.xlu0.b32.end [16/16] 0.0, 128
          %v1153 = vpop.trf.xlu0
          %v1154 = vpop.trf.xlu0
          %v1155 = vpop.trf.xlu0
          %v1156 = vpop.trf.xlu0
          %v1157 = vpop.trf.xlu0
          %v1158 = vpop.trf.xlu0
          %v1159 = vpop.trf.xlu0
          %v1160 = vpop.trf.xlu0
          %v1161 = vpop.trf.xlu0
          %v1162 = vpop.trf.xlu0
          %v1163 = vpop.trf.xlu0
          %v1164 = vpop.trf.xlu0
          %v1165 = vpop.trf.xlu0
          %v1166 = vpop.trf.xlu0
          %v1167 = vpop.trf.xlu0
          %v1168 = vpop.trf.xlu0
          %vm1169 = vcmask 130048
          %1170 = vst.msk [vmem:[#allocation3] sm:$0xff] %vm1169, %v1153
          %1171 = vst.msk [vmem:[#allocation3 + $0x8] sm:$0xff] %vm1169, %v1154
          %1172 = vst.msk [vmem:[#allocation3 + $0x10] sm:$0xff] %vm1169, %v1155
          %1173 = vst.msk [vmem:[#allocation3 + $0x18] sm:$0xff] %vm1169, %v1156
          %1174 = vst.msk [vmem:[#allocation3 + $0x20] sm:$0xff] %vm1169, %v1157
          %1175 = vst.msk [vmem:[#allocation3 + $0x28] sm:$0xff] %vm1169, %v1158
          %1176 = vst.msk [vmem:[#allocation3 + $0x30] sm:$0xff] %vm1169, %v1159
          %1177 = vst.msk [vmem:[#allocation3 + $0x38] sm:$0xff] %vm1169, %v1160
          %1178 = vst.msk [vmem:[#allocation3 + $0x40] sm:$0xff] %vm1169, %v1161
          %1179 = vst.msk [vmem:[#allocation3 + $0x48] sm:$0xff] %vm1169, %v1162
          %1180 = vst.msk [vmem:[#allocation3 + $0x50] sm:$0xff] %vm1169, %v1163
          %1181 = vst.msk [vmem:[#allocation3 + $0x58] sm:$0xff] %vm1169, %v1164
          %v1182 = vpack.c.bf16 %v1134, %v1131
          %vm1183 = vcmask 64512
          %1184 = vst.msk [vmem:[#allocation4] sm:$0xff] %vm1183, %v1182
          %1186 = vrot.lane.b32.xlu0 %v1182, 120
          %v1187 = vpop.permute.xlu0 %1186
          %s1189 = scalar_lea.vmem [#allocation4], 8
          %1190 = vst.msk [vmem:[%s1189] sm:$0xff] %vm1183, %v1187
          %1191 = vrot.lane.b32.xlu0 %v1182, 112
          %v1192 = vpop.permute.xlu0 %1191
          %s1194 = scalar_lea.vmem [#allocation4], 16
          %1195 = vst.msk [vmem:[%s1194] sm:$0xff] %vm1183, %v1192
          %1196 = vrot.lane.b32.xlu0 %v1182, 104
          %v1197 = vpop.permute.xlu0 %1196
          %s1199 = scalar_lea.vmem [#allocation4], 24
          %1200 = vst.msk [vmem:[%s1199] sm:$0xff] %vm1183, %v1197
          %1201 = vrot.lane.b32.xlu0 %v1182, 96
          %v1202 = vpop.permute.xlu0 %1201
          %s1204 = scalar_lea.vmem [#allocation4], 32
          %1205 = vst.msk [vmem:[%s1204] sm:$0xff] %vm1183, %v1202
          %1206 = vrot.lane.b32.xlu0 %v1182, 88
          %v1207 = vpop.permute.xlu0 %1206
          %s1209 = scalar_lea.vmem [#allocation4], 40
          %1210 = vst.msk [vmem:[%s1209] sm:$0xff] %vm1183, %v1207
          %1211 = vrot.lane.b32.xlu0 %v1182, 80
          %v1212 = vpop.permute.xlu0 %1211
          %s1214 = scalar_lea.vmem [#allocation4], 48
          %1215 = vst.msk [vmem:[%s1214] sm:$0xff] %vm1183, %v1212
          %1216 = vrot.lane.b32.xlu0 %v1182, 72
          %v1217 = vpop.permute.xlu0 %1216
          %s1219 = scalar_lea.vmem [#allocation4], 56
          %1220 = vst.msk [vmem:[%s1219] sm:$0xff] %vm1183, %v1217
          %1221 = vrot.lane.b32.xlu0 %v1182, 64
          %v1222 = vpop.permute.xlu0 %1221
          %s1224 = scalar_lea.vmem [#allocation4], 64
          %1225 = vst.msk [vmem:[%s1224] sm:$0xff] %vm1183, %v1222
          %1226 = vrot.lane.b32.xlu0 %v1182, 56
          %v1227 = vpop.permute.xlu0 %1226
          %s1229 = scalar_lea.vmem [#allocation4], 72
          %1230 = vst.msk [vmem:[%s1229] sm:$0xff] %vm1183, %v1227
          %1231 = vrot.lane.b32.xlu0 %v1182, 48
          %v1232 = vpop.permute.xlu0 %1231
          %s1234 = scalar_lea.vmem [#allocation4], 80
          %1235 = vst.msk [vmem:[%s1234] sm:$0xff] %vm1183, %v1232
          %1236 = vrot.lane.b32.xlu0 %v1182, 40
          %v1237 = vpop.permute.xlu0 %1236
          %s1239 = scalar_lea.vmem [#allocation4], 88
          %1240 = vst.msk [vmem:[%s1239] sm:$0xff] %vm1183, %v1237
        $region112: #{tpu_custom_call.1} parent=95 // pred_fallthru
          _
        %s1241 = smul.u32 %s45, 16
        %s1242 = scalar_lea.vmem [#allocation2], %s1241
        %v1243 = vld [vmem:[%s1242] sm:$0xff]
        %v1244 = vld [vmem:[%s1242 + $0x8] sm:$0xff]
        %v1245 = vpack.c.bf16 %v1244, %v1243
        %v1246 = vld [vmem:[%s873] sm:$0xf]
        %v1247 = vld [vmem:[%s873 + $0x4] sm:$0xf]
        %v1248 = vld [vmem:[%s873 + $0x8] sm:$0xf]
        %v1249 = vld [vmem:[%s873 + $0xc] sm:$0xf]
        %v1250 = vld [vmem:[%s873 + $0x10] sm:$0xf]
        %v1251 = vld [vmem:[%s873 + $0x14] sm:$0xf]
        %v1252 = vld [vmem:[%s873 + $0x18] sm:$0xf]
        %v1253 = vld [vmem:[%s873 + $0x1c] sm:$0xf]
        %v1254 = vld [vmem:[%s873 + $0x20] sm:$0xf]
        %v1255 = vld [vmem:[%s873 + $0x24] sm:$0xf]
        %v1256 = vld [vmem:[%s873 + $0x28] sm:$0xf]
        %v1257 = vld [vmem:[%s873 + $0x2c] sm:$0xf]
        %v1258 = vld [vmem:[%s876] sm:$0x1]
        %v1260 = vlaneseq
        %v1261 = vshrl.u32 %v1260, 7
        %v1262 = vsub.s32 0, %v1261
        %v1263 = vrot.slane %v1258, %v1262
        %v1277 = vunpack.c.l.b16 %v1246
        %v1278 = vunpack.c.l.b16 %v1247
        %v1279 = vunpack.c.l.b16 %v1248
        %v1280 = vunpack.c.l.b16 %v1249
        %v1281 = vunpack.c.l.b16 %v1250
        %v1282 = vunpack.c.l.b16 %v1251
        %v1283 = vunpack.c.l.b16 %v1252
        %v1284 = vunpack.c.l.b16 %v1253
        %v1285 = vunpack.c.l.b16 %v1254
        %v1286 = vunpack.c.l.b16 %v1255
        %v1287 = vunpack.c.l.b16 %v1256
        %v1288 = vunpack.c.l.b16 %v1257
        %v1289 = vpack.c.b16 %v1278, %v1277
        %v1290 = vpack.c.b16 %v1280, %v1279
        %v1291 = vpack.c.b16 %v1282, %v1281
        %v1292 = vpack.c.b16 %v1284, %v1283
        %v1293 = vpack.c.b16 %v1286, %v1285
        %v1294 = vpack.c.b16 %v1288, %v1287
        %vm1301 = vcmask 785408
        %v1303 = vsel %vm1301, %v1245, 0
        %1305 = vmatprep.subr.bf16.mxu0 0
        %1306 = vmatpush1.bf16.msra.mxu0 %v1289
        %1307 = vmatprep.subr.bf16.mxu0 0
        %1308 = vmatpush1.bf16.msra.mxu0 %v1290
        %1309 = vmatprep.subr.bf16.mxu0 0
        %1310 = vmatpush1.bf16.msra.mxu0 %v1291
        %1311 = vmatprep.subr.bf16.mxu0 0
        %1312 = vmatpush1.bf16.msra.mxu0 %v1292
        %1313 = vmatprep.subr.bf16.mxu0 0
        %1314 = vmatpush1.bf16.msra.mxu0 %v1293
        %1315 = vmatprep.subr.bf16.mxu0 0
        %1316 = vmatpush1.bf16.msra.mxu0 %v1294
        %1317 = vmatprep.subr.bf16.mxu0 0
        %1318 = vmatpush1.bf16.msra.mxu0 0
        %1319 = vmatprep.subr.bf16.mxu0 0
        %1320 = vmatpush1.bf16.msra.mxu0 0
        %1321 = vmatprep.subr.bf16.mxu0 0
        %1322 = vmatpush1.bf16.msra.mxu0 0
        %1323 = vmatprep.subr.bf16.mxu0 0
        %1324 = vmatpush1.bf16.msra.mxu0 0
        %1325 = vmatprep.subr.bf16.mxu0 0
        %1326 = vmatpush1.bf16.msra.mxu0 0
        %1327 = vmatprep.subr.bf16.mxu0 0
        %1328 = vmatpush1.bf16.msra.mxu0 0
        %1329 = vmatprep.subr.bf16.mxu0 0
        %1330 = vmatpush1.bf16.msra.mxu0 0
        %1331 = vmatprep.subr.bf16.mxu0 0
        %1332 = vmatpush1.bf16.msra.mxu0 0
        %1333 = vmatprep.subr.bf16.mxu0 0
        %1334 = vmatpush1.bf16.msra.mxu0 0
        %1335 = vmatprep.subr.bf16.mxu0 0
        %1336 = vmatpush1.bf16.msra.mxu0 0
        %1337 = vmatprep.mubr.bf16.mxu0 0
        %1338 = vmatmul.mubr.bf16.gmra.mrb[0].mxu0 %v1303
        %v1339 = vpop.f32.mrb[0].mxu0
        %v1340 = vadd.f32 %v1263, %v1339
        %v1341 = vpop.f32.mrb[0].mxu0
        %v1342 = vpop.f32.mrb[0].mxu0
        %v1343 = vadd.f32 %v1263, %v1342
        %v1344 = vpop.f32.mrb[0].mxu0
        %1345 = vdwg.mxu0
        %v1346 = vmul.f32 %v1340, 0.35355338
        %v1347 = vmul.f32 %v1343, 0.35355338
        %v1348 = vld [vmem:[#allocation3] sm:$0xff]
        %vm1349 = vcmask 64512
        %v1351 = vsel %vm1349, %v1346, 0
        %v1354 = vsel %vm1349, %v1347, 0
        %1356 = vmatprep.subr.mxu0 0.0
        %1357 = vmatpush1.msra.mxu0 %v1348
        %1358 = vmatprep.subr.mxu0 0.0
        %1359 = vmatpush1.msra.mxu0 0.0
        %1360 = vmatprep.subr.mxu0 0.0
        %1361 = vmatpush1.msra.mxu0 0.0
        %1362 = vmatprep.subr.mxu0 0.0
        %1363 = vmatpush1.msra.mxu0 0.0
        %1364 = vmatprep.subr.mxu0 0.0
        %1365 = vmatpush1.msra.mxu0 0.0
        %1366 = vmatprep.subr.mxu0 0.0
        %1367 = vmatpush1.msra.mxu0 0.0
        %1368 = vmatprep.subr.mxu0 0.0
        %1369 = vmatpush1.msra.mxu0 0.0
        %1370 = vmatprep.subr.mxu0 0.0
        %1371 = vmatpush1.msra.mxu0 0.0
        %1372 = vmatprep.subr.mxu0 0.0
        %1373 = vmatpush1.msra.mxu0 0.0
        %1374 = vmatprep.subr.mxu0 0.0
        %1375 = vmatpush1.msra.mxu0 0.0
        %1376 = vmatprep.subr.mxu0 0.0
        %1377 = vmatpush1.msra.mxu0 0.0
        %1378 = vmatprep.subr.mxu0 0.0
        %1379 = vmatpush1.msra.mxu0 0.0
        %1380 = vmatprep.subr.mxu0 0.0
        %1381 = vmatpush1.msra.mxu0 0.0
        %1382 = vmatprep.subr.mxu0 0.0
        %1383 = vmatpush1.msra.mxu0 0.0
        %1384 = vmatprep.subr.mxu0 0.0
        %1385 = vmatpush1.msra.mxu0 0.0
        %1386 = vmatprep.subr.mxu0 0.0
        %1387 = vmatpush1.msra.mxu0 0.0
        %1388 = vmatprep.subr.mxu0 0.0
        %1389 = vmatpush1.msra.mxu0 0.0
        %1390 = vmatprep.subr.mxu0 0.0
        %1391 = vmatpush1.msra.mxu0 0.0
        %1392 = vmatprep.subr.mxu0 0.0
        %1393 = vmatpush1.msra.mxu0 0.0
        %1394 = vmatprep.subr.mxu0 0.0
        %1395 = vmatpush1.msra.mxu0 0.0
        %1396 = vmatprep.subr.mxu0 0.0
        %1397 = vmatpush1.msra.mxu0 0.0
        %1398 = vmatprep.subr.mxu0 0.0
        %1399 = vmatpush1.msra.mxu0 0.0
        %1400 = vmatprep.subr.mxu0 0.0
        %1401 = vmatpush1.msra.mxu0 0.0
        %1402 = vmatprep.subr.mxu0 0.0
        %1403 = vmatpush1.msra.mxu0 0.0
        %1404 = vmatprep.subr.mxu0 0.0
        %1405 = vmatpush1.msra.mxu0 0.0
        %1406 = vmatprep.subr.mxu0 0.0
        %1407 = vmatpush1.msra.mxu0 0.0
        %1408 = vmatprep.subr.mxu0 0.0
        %1409 = vmatpush1.msra.mxu0 0.0
        %1410 = vmatprep.subr.mxu0 0.0
        %1411 = vmatpush1.msra.mxu0 0.0
        %1412 = vmatprep.subr.mxu0 0.0
        %1413 = vmatpush1.msra.mxu0 0.0
        %1414 = vmatprep.subr.mxu0 0.0
        %1415 = vmatpush1.msra.mxu0 0.0
        %1416 = vmatprep.subr.mxu0 0.0
        %1417 = vmatpush1.msra.mxu0 0.0
        %1418 = vmatprep.subr.mxu0 0.0
        %1419 = vmatpush1.msra.mxu0 0.0
        %1420 = vmatprep.mubr.f32.mxu0 0.0
        %1421 = vmatmul.mubr.f32.gmra.mrb[0].mxu0 %v1351
        %v1422 = vpop.f32.mrb[0].mxu0
        %v1423 = vadd.f32 0.0, %v1422
        %v1424 = vpop.f32.mrb[0].mxu0
        %1425 = vmatprep.mubr.f32.mxu0 0.0
        %1426 = vmatmul.mubr.f32.gmra.mrb[0].mxu0 %v1354
        %v1427 = vpop.f32.mrb[0].mxu0
        %v1428 = vadd.f32 0.0, %v1427
        %v1429 = vpop.f32.mrb[0].mxu0
        %1430 = vdwg.mxu0
        %vm1431 = vcmask 130048
        %v1432 = vsel %vm1431, %v1423, -inf
        %1433 = vmax.xlane.f32.xlu0 %v1432
        %v1434 = vpop.xlane.xlu0 %1433
        %v1435 = vsel %vm1431, %v1428, -inf
        %1436 = vmax.xlane.f32.xlu0 %v1435
        %v1437 = vpop.xlane.xlu0 %1436
        %v1438 = vsub.f32 %v1423, %v1434
        %v1439 = vsub.f32 %v1428, %v1437
        %v1440 = vmul.f32 %v1438, 1.442695
        %v1441 = vpow.pop %v1440
        %v1442 = vmul.f32 %v1439, 1.442695
        %v1443 = vpow.pop %v1442
        %v1444 = vsel %vm1431, %v1441, 0.0
        %1445 = vadd.xlane.f32.xlu0 %v1444
        %v1446 = vpop.xlane.xlu0 %1445
        %v1447 = vsel %vm1431, %v1443, 0.0
        %1448 = vadd.xlane.f32.xlu0 %v1447
        %v1449 = vpop.xlane.xlu0 %1448
        %v1450 = vrcp.pop %v1446
        %v1451 = vrcp.pop %v1449
        %v1452 = vmul.f32 %v1441, %v1450
        %v1453 = vmul.f32 %v1443, %v1451
        %v1454 = vpack.c.bf16 %v1453, %v1452
        %v1455 = vld [vmem:[#allocation4] sm:$0xff]
        %v1457 = vsel %vm1431, %v1454, 0
        %1459 = vmatprep.subr.bf16.mxu0 0
        %1460 = vmatpush1.bf16.msra.mxu0 %v1455
        %1461 = vmatprep.subr.bf16.mxu0 0
        %1462 = vmatpush1.bf16.msra.mxu0 0
        %1463 = vmatprep.subr.bf16.mxu0 0
        %1464 = vmatpush1.bf16.msra.mxu0 0
        %1465 = vmatprep.subr.bf16.mxu0 0
        %1466 = vmatpush1.bf16.msra.mxu0 0
        %1467 = vmatprep.subr.bf16.mxu0 0
        %1468 = vmatpush1.bf16.msra.mxu0 0
        %1469 = vmatprep.subr.bf16.mxu0 0
        %1470 = vmatpush1.bf16.msra.mxu0 0
        %1471 = vmatprep.subr.bf16.mxu0 0
        %1472 = vmatpush1.bf16.msra.mxu0 0
        %1473 = vmatprep.subr.bf16.mxu0 0
        %1474 = vmatpush1.bf16.msra.mxu0 0
        %1475 = vmatprep.subr.bf16.mxu0 0
        %1476 = vmatpush1.bf16.msra.mxu0 0
        %1477 = vmatprep.subr.bf16.mxu0 0
        %1478 = vmatpush1.bf16.msra.mxu0 0
        %1479 = vmatprep.subr.bf16.mxu0 0
        %1480 = vmatpush1.bf16.msra.mxu0 0
        %1481 = vmatprep.subr.bf16.mxu0 0
        %1482 = vmatpush1.bf16.msra.mxu0 0
        %1483 = vmatprep.subr.bf16.mxu0 0
        %1484 = vmatpush1.bf16.msra.mxu0 0
        %1485 = vmatprep.subr.bf16.mxu0 0
        %1486 = vmatpush1.bf16.msra.mxu0 0
        %1487 = vmatprep.subr.bf16.mxu0 0
        %1488 = vmatpush1.bf16.msra.mxu0 0
        %1489 = vmatprep.subr.bf16.mxu0 0
        %1490 = vmatpush1.bf16.msra.mxu0 0
        %1491 = vmatprep.mubr.bf16.mxu0 0
        %1492 = vmatmul.mubr.bf16.gmra.mrb[0].mxu0 %v1457
        %v1493 = vpop.f32.mrb[0].mxu0
        %v1494 = vadd.f32 0.0, %v1493
        %v1495 = vpop.f32.mrb[0].mxu0
        %v1496 = vpop.f32.mrb[0].mxu0
        %v1497 = vadd.f32 0.0, %v1496
        %v1498 = vpop.f32.mrb[0].mxu0
        %1499 = vdwg.mxu0
        %v1500 = vld [vmem:[#allocation3 + $0x8] sm:$0xff]
        %1501 = vrot.lane.b32.xlu0 %v1346, 120
        %v1502 = vpop.permute.xlu0 %1501
        %1503 = vrot.lane.b32.xlu0 %v1347, 120
        %v1504 = vpop.permute.xlu0 %1503
        %v1505 = vsel %vm1349, %v1502, 0
        %v1507 = vsel %vm1349, %v1504, 0
        %1509 = vmatprep.subr.mxu0 0.0
        %1510 = vmatpush1.msra.mxu0 %v1500
        %1511 = vmatprep.subr.mxu0 0.0
        %1512 = vmatpush1.msra.mxu0 0.0
        %1513 = vmatprep.subr.mxu0 0.0
        %1514 = vmatpush1.msra.mxu0 0.0
        %1515 = vmatprep.subr.mxu0 0.0
        %1516 = vmatpush1.msra.mxu0 0.0
        %1517 = vmatprep.subr.mxu0 0.0
        %1518 = vmatpush1.msra.mxu0 0.0
        %1519 = vmatprep.subr.mxu0 0.0
        %1520 = vmatpush1.msra.mxu0 0.0
        %1521 = vmatprep.subr.mxu0 0.0
        %1522 = vmatpush1.msra.mxu0 0.0
        %1523 = vmatprep.subr.mxu0 0.0
        %1524 = vmatpush1.msra.mxu0 0.0
        %1525 = vmatprep.subr.mxu0 0.0
        %1526 = vmatpush1.msra.mxu0 0.0
        %1527 = vmatprep.subr.mxu0 0.0
        %1528 = vmatpush1.msra.mxu0 0.0
        %1529 = vmatprep.subr.mxu0 0.0
        %1530 = vmatpush1.msra.mxu0 0.0
        %1531 = vmatprep.subr.mxu0 0.0
        %1532 = vmatpush1.msra.mxu0 0.0
        %1533 = vmatprep.subr.mxu0 0.0
        %1534 = vmatpush1.msra.mxu0 0.0
        %1535 = vmatprep.subr.mxu0 0.0
        %1536 = vmatpush1.msra.mxu0 0.0
        %1537 = vmatprep.subr.mxu0 0.0
        %1538 = vmatpush1.msra.mxu0 0.0
        %1539 = vmatprep.subr.mxu0 0.0
        %1540 = vmatpush1.msra.mxu0 0.0
        %1541 = vmatprep.subr.mxu0 0.0
        %1542 = vmatpush1.msra.mxu0 0.0
        %1543 = vmatprep.subr.mxu0 0.0
        %1544 = vmatpush1.msra.mxu0 0.0
        %1545 = vmatprep.subr.mxu0 0.0
        %1546 = vmatpush1.msra.mxu0 0.0
        %1547 = vmatprep.subr.mxu0 0.0
        %1548 = vmatpush1.msra.mxu0 0.0
        %1549 = vmatprep.subr.mxu0 0.0
        %1550 = vmatpush1.msra.mxu0 0.0
        %1551 = vmatprep.subr.mxu0 0.0
        %1552 = vmatpush1.msra.mxu0 0.0
        %1553 = vmatprep.subr.mxu0 0.0
        %1554 = vmatpush1.msra.mxu0 0.0
        %1555 = vmatprep.subr.mxu0 0.0
        %1556 = vmatpush1.msra.mxu0 0.0
        %1557 = vmatprep.subr.mxu0 0.0
        %1558 = vmatpush1.msra.mxu0 0.0
        %1559 = vmatprep.subr.mxu0 0.0
        %1560 = vmatpush1.msra.mxu0 0.0
        %1561 = vmatprep.subr.mxu0 0.0
        %1562 = vmatpush1.msra.mxu0 0.0
        %1563 = vmatprep.subr.mxu0 0.0
        %1564 = vmatpush1.msra.mxu0 0.0
        %1565 = vmatprep.subr.mxu0 0.0
        %1566 = vmatpush1.msra.mxu0 0.0
        %1567 = vmatprep.subr.mxu0 0.0
        %1568 = vmatpush1.msra.mxu0 0.0
        %1569 = vmatprep.subr.mxu0 0.0
        %1570 = vmatpush1.msra.mxu0 0.0
        %1571 = vmatprep.subr.mxu0 0.0
        %1572 = vmatpush1.msra.mxu0 0.0
        %1573 = vmatprep.mubr.f32.mxu0 0.0
        %1574 = vmatmul.mubr.f32.gmra.mrb[0].mxu0 %v1505
        %v1575 = vpop.f32.mrb[0].mxu0
        %v1576 = vadd.f32 0.0, %v1575
        %v1577 = vpop.f32.mrb[0].mxu0
        %1578 = vmatprep.mubr.f32.mxu0 0.0
        %1579 = vmatmul.mubr.f32.gmra.mrb[0].mxu0 %v1507
        %v1580 = vpop.f32.mrb[0].mxu0
        %v1581 = vadd.f32 0.0, %v1580
        %v1582 = vpop.f32.mrb[0].mxu0
        %1583 = vdwg.mxu0
        %v1584 = vsel %vm1431, %v1576, -inf
        %1585 = vmax.xlane.f32.xlu0 %v1584
        %v1586 = vpop.xlane.xlu0 %1585
        %v1587 = vsel %vm1431, %v1581, -inf
        %1588 = vmax.xlane.f32.xlu0 %v1587
        %v1589 = vpop.xlane.xlu0 %1588
        %v1590 = vsub.f32 %v1576, %v1586
        %v1591 = vsub.f32 %v1581, %v1589
        %v1592 = vmul.f32 %v1590, 1.442695
        %v1593 = vpow.pop %v1592
        %v1594 = vmul.f32 %v1591, 1.442695
        %v1595 = vpow.pop %v1594
        %v1596 = vsel %vm1431, %v1593, 0.0
        %1597 = vadd.xlane.f32.xlu0 %v1596
        %v1598 = vpop.xlane.xlu0 %1597
        %v1599 = vsel %vm1431, %v1595, 0.0
        %1600 = vadd.xlane.f32.xlu0 %v1599
        %v1601 = vpop.xlane.xlu0 %1600
        %v1602 = vrcp.pop %v1598
        %v1603 = vrcp.pop %v1601
        %v1604 = vmul.f32 %v1593, %v1602
        %v1605 = vmul.f32 %v1595, %v1603
        %v1606 = vpack.c.bf16 %v1605, %v1604
        %s1607 = scalar_lea.vmem [#allocation4], 8
        %v1608 = vld [vmem:[%s1607] sm:$0xff]
        %v1610 = vsel %vm1431, %v1606, 0
        %1612 = vmatprep.subr.bf16.mxu0 0
        %1613 = vmatpush1.bf16.msra.mxu0 %v1608
        %1614 = vmatprep.subr.bf16.mxu0 0
        %1615 = vmatpush1.bf16.msra.mxu0 0
        %1616 = vmatprep.subr.bf16.mxu0 0
        %1617 = vmatpush1.bf16.msra.mxu0 0
        %1618 = vmatprep.subr.bf16.mxu0 0
        %1619 = vmatpush1.bf16.msra.mxu0 0
        %1620 = vmatprep.subr.bf16.mxu0 0
        %1621 = vmatpush1.bf16.msra.mxu0 0
        %1622 = vmatprep.subr.bf16.mxu0 0
        %1623 = vmatpush1.bf16.msra.mxu0 0
        %1624 = vmatprep.subr.bf16.mxu0 0
        %1625 = vmatpush1.bf16.msra.mxu0 0
        %1626 = vmatprep.subr.bf16.mxu0 0
        %1627 = vmatpush1.bf16.msra.mxu0 0
        %1628 = vmatprep.subr.bf16.mxu0 0
        %1629 = vmatpush1.bf16.msra.mxu0 0
        %1630 = vmatprep.subr.bf16.mxu0 0
        %1631 = vmatpush1.bf16.msra.mxu0 0
        %1632 = vmatprep.subr.bf16.mxu0 0
        %1633 = vmatpush1.bf16.msra.mxu0 0
        %1634 = vmatprep.subr.bf16.mxu0 0
        %1635 = vmatpush1.bf16.msra.mxu0 0
        %1636 = vmatprep.subr.bf16.mxu0 0
        %1637 = vmatpush1.bf16.msra.mxu0 0
        %1638 = vmatprep.subr.bf16.mxu0 0
        %1639 = vmatpush1.bf16.msra.mxu0 0
        %1640 = vmatprep.subr.bf16.mxu0 0
        %1641 = vmatpush1.bf16.msra.mxu0 0
        %1642 = vmatprep.subr.bf16.mxu0 0
        %1643 = vmatpush1.bf16.msra.mxu0 0
        %1644 = vmatprep.mubr.bf16.mxu0 0
        %1645 = vmatmul.mubr.bf16.gmra.mrb[0].mxu0 %v1610
        %v1646 = vpop.f32.mrb[0].mxu0
        %v1647 = vadd.f32 0.0, %v1646
        %v1648 = vpop.f32.mrb[0].mxu0
        %v1649 = vpop.f32.mrb[0].mxu0
        %v1650 = vadd.f32 0.0, %v1649
        %v1651 = vpop.f32.mrb[0].mxu0
        %1652 = vdwg.mxu0
        %v1653 = vld [vmem:[#allocation3 + $0x10] sm:$0xff]
        %1654 = vrot.lane.b32.xlu0 %v1346, 112
        %v1655 = vpop.permute.xlu0 %1654
        %1656 = vrot.lane.b32.xlu0 %v1347, 112
        %v1657 = vpop.permute.xlu0 %1656
        %v1658 = vsel %vm1349, %v1655, 0
        %v1660 = vsel %vm1349, %v1657, 0
        %1662 = vmatprep.subr.mxu0 0.0
        %1663 = vmatpush1.msra.mxu0 %v1653
        %1664 = vmatprep.subr.mxu0 0.0
        %1665 = vmatpush1.msra.mxu0 0.0
        %1666 = vmatprep.subr.mxu0 0.0
        %1667 = vmatpush1.msra.mxu0 0.0
        %1668 = vmatprep.subr.mxu0 0.0
        %1669 = vmatpush1.msra.mxu0 0.0
        %1670 = vmatprep.subr.mxu0 0.0
        %1671 = vmatpush1.msra.mxu0 0.0
        %1672 = vmatprep.subr.mxu0 0.0
        %1673 = vmatpush1.msra.mxu0 0.0
        %1674 = vmatprep.subr.mxu0 0.0
        %1675 = vmatpush1.msra.mxu0 0.0
        %1676 = vmatprep.subr.mxu0 0.0
        %1677 = vmatpush1.msra.mxu0 0.0
        %1678 = vmatprep.subr.mxu0 0.0
        %1679 = vmatpush1.msra.mxu0 0.0
        %1680 = vmatprep.subr.mxu0 0.0
        %1681 = vmatpush1.msra.mxu0 0.0
        %1682 = vmatprep.subr.mxu0 0.0
        %1683 = vmatpush1.msra.mxu0 0.0
        %1684 = vmatprep.subr.mxu0 0.0
        %1685 = vmatpush1.msra.mxu0 0.0
        %1686 = vmatprep.subr.mxu0 0.0
        %1687 = vmatpush1.msra.mxu0 0.0
        %1688 = vmatprep.subr.mxu0 0.0
        %1689 = vmatpush1.msra.mxu0 0.0
        %1690 = vmatprep.subr.mxu0 0.0
        %1691 = vmatpush1.msra.mxu0 0.0
        %1692 = vmatprep.subr.mxu0 0.0
        %1693 = vmatpush1.msra.mxu0 0.0
        %1694 = vmatprep.subr.mxu0 0.0
        %1695 = vmatpush1.msra.mxu0 0.0
        %1696 = vmatprep.subr.mxu0 0.0
        %1697 = vmatpush1.msra.mxu0 0.0
        %1698 = vmatprep.subr.mxu0 0.0
        %1699 = vmatpush1.msra.mxu0 0.0
        %1700 = vmatprep.subr.mxu0 0.0
        %1701 = vmatpush1.msra.mxu0 0.0
        %1702 = vmatprep.subr.mxu0 0.0
        %1703 = vmatpush1.msra.mxu0 0.0
        %1704 = vmatprep.subr.mxu0 0.0
        %1705 = vmatpush1.msra.mxu0 0.0
        %1706 = vmatprep.subr.mxu0 0.0
        %1707 = vmatpush1.msra.mxu0 0.0
        %1708 = vmatprep.subr.mxu0 0.0
        %1709 = vmatpush1.msra.mxu0 0.0
        %1710 = vmatprep.subr.mxu0 0.0
        %1711 = vmatpush1.msra.mxu0 0.0
        %1712 = vmatprep.subr.mxu0 0.0
        %1713 = vmatpush1.msra.mxu0 0.0
        %1714 = vmatprep.subr.mxu0 0.0
        %1715 = vmatpush1.msra.mxu0 0.0
        %1716 = vmatprep.subr.mxu0 0.0
        %1717 = vmatpush1.msra.mxu0 0.0
        %1718 = vmatprep.subr.mxu0 0.0
        %1719 = vmatpush1.msra.mxu0 0.0
        %1720 = vmatprep.subr.mxu0 0.0
        %1721 = vmatpush1.msra.mxu0 0.0
        %1722 = vmatprep.subr.mxu0 0.0
        %1723 = vmatpush1.msra.mxu0 0.0
        %1724 = vmatprep.subr.mxu0 0.0
        %1725 = vmatpush1.msra.mxu0 0.0
        %1726 = vmatprep.mubr.f32.mxu0 0.0
        %1727 = vmatmul.mubr.f32.gmra.mrb[0].mxu0 %v1658
        %v1728 = vpop.f32.mrb[0].mxu0
        %v1729 = vadd.f32 0.0, %v1728
        %v1730 = vpop.f32.mrb[0].mxu0
        %1731 = vmatprep.mubr.f32.mxu0 0.0
        %1732 = vmatmul.mubr.f32.gmra.mrb[0].mxu0 %v1660
        %v1733 = vpop.f32.mrb[0].mxu0
        %v1734 = vadd.f32 0.0, %v1733
        %v1735 = vpop.f32.mrb[0].mxu0
        %1736 = vdwg.mxu0
        %v1737 = vsel %vm1431, %v1729, -inf
        %1738 = vmax.xlane.f32.xlu0 %v1737
        %v1739 = vpop.xlane.xlu0 %1738
        %v1740 = vsel %vm1431, %v1734, -inf
        %1741 = vmax.xlane.f32.xlu0 %v1740
        %v1742 = vpop.xlane.xlu0 %1741
        %v1743 = vsub.f32 %v1729, %v1739
        %v1744 = vsub.f32 %v1734, %v1742
        %v1745 = vmul.f32 %v1743, 1.442695
        %v1746 = vpow.pop %v1745
        %v1747 = vmul.f32 %v1744, 1.442695
        %v1748 = vpow.pop %v1747
        %v1749 = vsel %vm1431, %v1746, 0.0
        %1750 = vadd.xlane.f32.xlu0 %v1749
        %v1751 = vpop.xlane.xlu0 %1750
        %v1752 = vsel %vm1431, %v1748, 0.0
        %1753 = vadd.xlane.f32.xlu0 %v1752
        %v1754 = vpop.xlane.xlu0 %1753
        %v1755 = vrcp.pop %v1751
        %v1756 = vrcp.pop %v1754
        %v1757 = vmul.f32 %v1746, %v1755
        %v1758 = vmul.f32 %v1748, %v1756
        %v1759 = vpack.c.bf16 %v1758, %v1757
        %s1760 = scalar_lea.vmem [#allocation4], 16
        %v1761 = vld [vmem:[%s1760] sm:$0xff]
        %v1763 = vsel %vm1431, %v1759, 0
        %1765 = vmatprep.subr.bf16.mxu0 0
        %1766 = vmatpush1.bf16.msra.mxu0 %v1761
        %1767 = vmatprep.subr.bf16.mxu0 0
        %1768 = vmatpush1.bf16.msra.mxu0 0
        %1769 = vmatprep.subr.bf16.mxu0 0
        %1770 = vmatpush1.bf16.msra.mxu0 0
        %1771 = vmatprep.subr.bf16.mxu0 0
        %1772 = vmatpush1.bf16.msra.mxu0 0
        %1773 = vmatprep.subr.bf16.mxu0 0
        %1774 = vmatpush1.bf16.msra.mxu0 0
        %1775 = vmatprep.subr.bf16.mxu0 0
        %1776 = vmatpush1.bf16.msra.mxu0 0
        %1777 = vmatprep.subr.bf16.mxu0 0
        %1778 = vmatpush1.bf16.msra.mxu0 0
        %1779 = vmatprep.subr.bf16.mxu0 0
        %1780 = vmatpush1.bf16.msra.mxu0 0
        %1781 = vmatprep.subr.bf16.mxu0 0
        %1782 = vmatpush1.bf16.msra.mxu0 0
        %1783 = vmatprep.subr.bf16.mxu0 0
        %1784 = vmatpush1.bf16.msra.mxu0 0
        %1785 = vmatprep.subr.bf16.mxu0 0
        %1786 = vmatpush1.bf16.msra.mxu0 0
        %1787 = vmatprep.subr.bf16.mxu0 0
        %1788 = vmatpush1.bf16.msra.mxu0 0
        %1789 = vmatprep.subr.bf16.mxu0 0
        %1790 = vmatpush1.bf16.msra.mxu0 0
        %1791 = vmatprep.subr.bf16.mxu0 0
        %1792 = vmatpush1.bf16.msra.mxu0 0
        %1793 = vmatprep.subr.bf16.mxu0 0
        %1794 = vmatpush1.bf16.msra.mxu0 0
        %1795 = vmatprep.subr.bf16.mxu0 0
        %1796 = vmatpush1.bf16.msra.mxu0 0
        %1797 = vmatprep.mubr.bf16.mxu0 0
        %1798 = vmatmul.mubr.bf16.gmra.mrb[0].mxu0 %v1763
        %v1799 = vpop.f32.mrb[0].mxu0
        %v1800 = vadd.f32 0.0, %v1799
        %v1801 = vpop.f32.mrb[0].mxu0
        %v1802 = vpop.f32.mrb[0].mxu0
        %v1803 = vadd.f32 0.0, %v1802
        %v1804 = vpop.f32.mrb[0].mxu0
        %1805 = vdwg.mxu0
        %v1806 = vld [vmem:[#allocation3 + $0x18] sm:$0xff]
        %1807 = vrot.lane.b32.xlu0 %v1346, 104
        %v1808 = vpop.permute.xlu0 %1807
        %1809 = vrot.lane.b32.xlu0 %v1347, 104
        %v1810 = vpop.permute.xlu0 %1809
        %v1811 = vsel %vm1349, %v1808, 0
        %v1813 = vsel %vm1349, %v1810, 0
        %1815 = vmatprep.subr.mxu0 0.0
        %1816 = vmatpush1.msra.mxu0 %v1806
        %1817 = vmatprep.subr.mxu0 0.0
        %1818 = vmatpush1.msra.mxu0 0.0
        %1819 = vmatprep.subr.mxu0 0.0
        %1820 = vmatpush1.msra.mxu0 0.0
        %1821 = vmatprep.subr.mxu0 0.0
        %1822 = vmatpush1.msra.mxu0 0.0
        %1823 = vmatprep.subr.mxu0 0.0
        %1824 = vmatpush1.msra.mxu0 0.0
        %1825 = vmatprep.subr.mxu0 0.0
        %1826 = vmatpush1.msra.mxu0 0.0
        %1827 = vmatprep.subr.mxu0 0.0
        %1828 = vmatpush1.msra.mxu0 0.0
        %1829 = vmatprep.subr.mxu0 0.0
        %1830 = vmatpush1.msra.mxu0 0.0
        %1831 = vmatprep.subr.mxu0 0.0
        %1832 = vmatpush1.msra.mxu0 0.0
        %1833 = vmatprep.subr.mxu0 0.0
        %1834 = vmatpush1.msra.mxu0 0.0
        %1835 = vmatprep.subr.mxu0 0.0
        %1836 = vmatpush1.msra.mxu0 0.0
        %1837 = vmatprep.subr.mxu0 0.0
        %1838 = vmatpush1.msra.mxu0 0.0
        %1839 = vmatprep.subr.mxu0 0.0
        %1840 = vmatpush1.msra.mxu0 0.0
        %1841 = vmatprep.subr.mxu0 0.0
        %1842 = vmatpush1.msra.mxu0 0.0
        %1843 = vmatprep.subr.mxu0 0.0
        %1844 = vmatpush1.msra.mxu0 0.0
        %1845 = vmatprep.subr.mxu0 0.0
        %1846 = vmatpush1.msra.mxu0 0.0
        %1847 = vmatprep.subr.mxu0 0.0
        %1848 = vmatpush1.msra.mxu0 0.0
        %1849 = vmatprep.subr.mxu0 0.0
        %1850 = vmatpush1.msra.mxu0 0.0
        %1851 = vmatprep.subr.mxu0 0.0
        %1852 = vmatpush1.msra.mxu0 0.0
        %1853 = vmatprep.subr.mxu0 0.0
        %1854 = vmatpush1.msra.mxu0 0.0
        %1855 = vmatprep.subr.mxu0 0.0
        %1856 = vmatpush1.msra.mxu0 0.0
        %1857 = vmatprep.subr.mxu0 0.0
        %1858 = vmatpush1.msra.mxu0 0.0
        %1859 = vmatprep.subr.mxu0 0.0
        %1860 = vmatpush1.msra.mxu0 0.0
        %1861 = vmatprep.subr.mxu0 0.0
        %1862 = vmatpush1.msra.mxu0 0.0
        %1863 = vmatprep.subr.mxu0 0.0
        %1864 = vmatpush1.msra.mxu0 0.0
        %1865 = vmatprep.subr.mxu0 0.0
        %1866 = vmatpush1.msra.mxu0 0.0
        %1867 = vmatprep.subr.mxu0 0.0
        %1868 = vmatpush1.msra.mxu0 0.0
        %1869 = vmatprep.subr.mxu0 0.0
        %1870 = vmatpush1.msra.mxu0 0.0
        %1871 = vmatprep.subr.mxu0 0.0
        %1872 = vmatpush1.msra.mxu0 0.0
        %1873 = vmatprep.subr.mxu0 0.0
        %1874 = vmatpush1.msra.mxu0 0.0
        %1875 = vmatprep.subr.mxu0 0.0
        %1876 = vmatpush1.msra.mxu0 0.0
        %1877 = vmatprep.subr.mxu0 0.0
        %1878 = vmatpush1.msra.mxu0 0.0
        %1879 = vmatprep.mubr.f32.mxu0 0.0
        %1880 = vmatmul.mubr.f32.gmra.mrb[0].mxu0 %v1811
        %v1881 = vpop.f32.mrb[0].mxu0
        %v1882 = vadd.f32 0.0, %v1881
        %v1883 = vpop.f32.mrb[0].mxu0
        %1884 = vmatprep.mubr.f32.mxu0 0.0
        %1885 = vmatmul.mubr.f32.gmra.mrb[0].mxu0 %v1813
        %v1886 = vpop.f32.mrb[0].mxu0
        %v1887 = vadd.f32 0.0, %v1886
        %v1888 = vpop.f32.mrb[0].mxu0
        %1889 = vdwg.mxu0
        %v1890 = vsel %vm1431, %v1882, -inf
        %1891 = vmax.xlane.f32.xlu0 %v1890
        %v1892 = vpop.xlane.xlu0 %1891
        %v1893 = vsel %vm1431, %v1887, -inf
        %1894 = vmax.xlane.f32.xlu0 %v1893
        %v1895 = vpop.xlane.xlu0 %1894
        %v1896 = vsub.f32 %v1882, %v1892
        %v1897 = vsub.f32 %v1887, %v1895
        %v1898 = vmul.f32 %v1896, 1.442695
        %v1899 = vpow.pop %v1898
        %v1900 = vmul.f32 %v1897, 1.442695
        %v1901 = vpow.pop %v1900
        %v1902 = vsel %vm1431, %v1899, 0.0
        %1903 = vadd.xlane.f32.xlu0 %v1902
        %v1904 = vpop.xlane.xlu0 %1903
        %v1905 = vsel %vm1431, %v1901, 0.0
        %1906 = vadd.xlane.f32.xlu0 %v1905
        %v1907 = vpop.xlane.xlu0 %1906
        %v1908 = vrcp.pop %v1904
        %v1909 = vrcp.pop %v1907
        %v1910 = vmul.f32 %v1899, %v1908
        %v1911 = vmul.f32 %v1901, %v1909
        %v1912 = vpack.c.bf16 %v1911, %v1910
        %s1913 = scalar_lea.vmem [#allocation4], 24
        %v1914 = vld [vmem:[%s1913] sm:$0xff]
        %v1916 = vsel %vm1431, %v1912, 0
        %1918 = vmatprep.subr.bf16.mxu0 0
        %1919 = vmatpush1.bf16.msra.mxu0 %v1914
        %1920 = vmatprep.subr.bf16.mxu0 0
        %1921 = vmatpush1.bf16.msra.mxu0 0
        %1922 = vmatprep.subr.bf16.mxu0 0
        %1923 = vmatpush1.bf16.msra.mxu0 0
        %1924 = vmatprep.subr.bf16.mxu0 0
        %1925 = vmatpush1.bf16.msra.mxu0 0
        %1926 = vmatprep.subr.bf16.mxu0 0
        %1927 = vmatpush1.bf16.msra.mxu0 0
        %1928 = vmatprep.subr.bf16.mxu0 0
        %1929 = vmatpush1.bf16.msra.mxu0 0
        %1930 = vmatprep.subr.bf16.mxu0 0
        %1931 = vmatpush1.bf16.msra.mxu0 0
        %1932 = vmatprep.subr.bf16.mxu0 0
        %1933 = vmatpush1.bf16.msra.mxu0 0
        %1934 = vmatprep.subr.bf16.mxu0 0
        %1935 = vmatpush1.bf16.msra.mxu0 0
        %1936 = vmatprep.subr.bf16.mxu0 0
        %1937 = vmatpush1.bf16.msra.mxu0 0
        %1938 = vmatprep.subr.bf16.mxu0 0
        %1939 = vmatpush1.bf16.msra.mxu0 0
        %1940 = vmatprep.subr.bf16.mxu0 0
        %1941 = vmatpush1.bf16.msra.mxu0 0
        %1942 = vmatprep.subr.bf16.mxu0 0
        %1943 = vmatpush1.bf16.msra.mxu0 0
        %1944 = vmatprep.subr.bf16.mxu0 0
        %1945 = vmatpush1.bf16.msra.mxu0 0
        %1946 = vmatprep.subr.bf16.mxu0 0
        %1947 = vmatpush1.bf16.msra.mxu0 0
        %1948 = vmatprep.subr.bf16.mxu0 0
        %1949 = vmatpush1.bf16.msra.mxu0 0
        %1950 = vmatprep.mubr.bf16.mxu0 0
        %1951 = vmatmul.mubr.bf16.gmra.mrb[0].mxu0 %v1916
        %v1952 = vpop.f32.mrb[0].mxu0
        %v1953 = vadd.f32 0.0, %v1952
        %v1954 = vpop.f32.mrb[0].mxu0
        %v1955 = vpop.f32.mrb[0].mxu0
        %v1956 = vadd.f32 0.0, %v1955
        %v1957 = vpop.f32.mrb[0].mxu0
        %1958 = vdwg.mxu0
        %v1959 = vld [vmem:[#allocation3 + $0x20] sm:$0xff]
        %1960 = vrot.lane.b32.xlu0 %v1346, 96
        %v1961 = vpop.permute.xlu0 %1960
        %1962 = vrot.lane.b32.xlu0 %v1347, 96
        %v1963 = vpop.permute.xlu0 %1962
        %v1964 = vsel %vm1349, %v1961, 0
        %v1966 = vsel %vm1349, %v1963, 0
        %1968 = vmatprep.subr.mxu0 0.0
        %1969 = vmatpush1.msra.mxu0 %v1959
        %1970 = vmatprep.subr.mxu0 0.0
        %1971 = vmatpush1.msra.mxu0 0.0
        %1972 = vmatprep.subr.mxu0 0.0
        %1973 = vmatpush1.msra.mxu0 0.0
        %1974 = vmatprep.subr.mxu0 0.0
        %1975 = vmatpush1.msra.mxu0 0.0
        %1976 = vmatprep.subr.mxu0 0.0
        %1977 = vmatpush1.msra.mxu0 0.0
        %1978 = vmatprep.subr.mxu0 0.0
        %1979 = vmatpush1.msra.mxu0 0.0
        %1980 = vmatprep.subr.mxu0 0.0
        %1981 = vmatpush1.msra.mxu0 0.0
        %1982 = vmatprep.subr.mxu0 0.0
        %1983 = vmatpush1.msra.mxu0 0.0
        %1984 = vmatprep.subr.mxu0 0.0
        %1985 = vmatpush1.msra.mxu0 0.0
        %1986 = vmatprep.subr.mxu0 0.0
        %1987 = vmatpush1.msra.mxu0 0.0
        %1988 = vmatprep.subr.mxu0 0.0
        %1989 = vmatpush1.msra.mxu0 0.0
        %1990 = vmatprep.subr.mxu0 0.0
        %1991 = vmatpush1.msra.mxu0 0.0
        %1992 = vmatprep.subr.mxu0 0.0
        %1993 = vmatpush1.msra.mxu0 0.0
        %1994 = vmatprep.subr.mxu0 0.0
        %1995 = vmatpush1.msra.mxu0 0.0
        %1996 = vmatprep.subr.mxu0 0.0
        %1997 = vmatpush1.msra.mxu0 0.0
        %1998 = vmatprep.subr.mxu0 0.0
        %1999 = vmatpush1.msra.mxu0 0.0
        %2000 = vmatprep.subr.mxu0 0.0
        %2001 = vmatpush1.msra.mxu0 0.0
        %2002 = vmatprep.subr.mxu0 0.0
        %2003 = vmatpush1.msra.mxu0 0.0
        %2004 = vmatprep.subr.mxu0 0.0
        %2005 = vmatpush1.msra.mxu0 0.0
        %2006 = vmatprep.subr.mxu0 0.0
        %2007 = vmatpush1.msra.mxu0 0.0
        %2008 = vmatprep.subr.mxu0 0.0
        %2009 = vmatpush1.msra.mxu0 0.0
        %2010 = vmatprep.subr.mxu0 0.0
        %2011 = vmatpush1.msra.mxu0 0.0
        %2012 = vmatprep.subr.mxu0 0.0
        %2013 = vmatpush1.msra.mxu0 0.0
        %2014 = vmatprep.subr.mxu0 0.0
        %2015 = vmatpush1.msra.mxu0 0.0
        %2016 = vmatprep.subr.mxu0 0.0
        %2017 = vmatpush1.msra.mxu0 0.0
        %2018 = vmatprep.subr.mxu0 0.0
        %2019 = vmatpush1.msra.mxu0 0.0
        %2020 = vmatprep.subr.mxu0 0.0
        %2021 = vmatpush1.msra.mxu0 0.0
        %2022 = vmatprep.subr.mxu0 0.0
        %2023 = vmatpush1.msra.mxu0 0.0
        %2024 = vmatprep.subr.mxu0 0.0
        %2025 = vmatpush1.msra.mxu0 0.0
        %2026 = vmatprep.subr.mxu0 0.0
        %2027 = vmatpush1.msra.mxu0 0.0
        %2028 = vmatprep.subr.mxu0 0.0
        %2029 = vmatpush1.msra.mxu0 0.0
        %2030 = vmatprep.subr.mxu0 0.0
        %2031 = vmatpush1.msra.mxu0 0.0
        %2032 = vmatprep.mubr.f32.mxu0 0.0
        %2033 = vmatmul.mubr.f32.gmra.mrb[0].mxu0 %v1964
        %v2034 = vpop.f32.mrb[0].mxu0
        %v2035 = vadd.f32 0.0, %v2034
        %v2036 = vpop.f32.mrb[0].mxu0
        %2037 = vmatprep.mubr.f32.mxu0 0.0
        %2038 = vmatmul.mubr.f32.gmra.mrb[0].mxu0 %v1966
        %v2039 = vpop.f32.mrb[0].mxu0
        %v2040 = vadd.f32 0.0, %v2039
        %v2041 = vpop.f32.mrb[0].mxu0
        %2042 = vdwg.mxu0
        %v2043 = vsel %vm1431, %v2035, -inf
        %2044 = vmax.xlane.f32.xlu0 %v2043
        %v2045 = vpop.xlane.xlu0 %2044
        %v2046 = vsel %vm1431, %v2040, -inf
        %2047 = vmax.xlane.f32.xlu0 %v2046
        %v2048 = vpop.xlane.xlu0 %2047
        %v2049 = vsub.f32 %v2035, %v2045
        %v2050 = vsub.f32 %v2040, %v2048
        %v2051 = vmul.f32 %v2049, 1.442695
        %v2052 = vpow.pop %v2051
        %v2053 = vmul.f32 %v2050, 1.442695
        %v2054 = vpow.pop %v2053
        %v2055 = vsel %vm1431, %v2052, 0.0
        %2056 = vadd.xlane.f32.xlu0 %v2055
        %v2057 = vpop.xlane.xlu0 %2056
        %v2058 = vsel %vm1431, %v2054, 0.0
        %2059 = vadd.xlane.f32.xlu0 %v2058
        %v2060 = vpop.xlane.xlu0 %2059
        %v2061 = vrcp.pop %v2057
        %v2062 = vrcp.pop %v2060
        %v2063 = vmul.f32 %v2052, %v2061
        %v2064 = vmul.f32 %v2054, %v2062
        %v2065 = vpack.c.bf16 %v2064, %v2063
        %s2066 = scalar_lea.vmem [#allocation4], 32
        %v2067 = vld [vmem:[%s2066] sm:$0xff]
        %v2069 = vsel %vm1431, %v2065, 0
        %2071 = vmatprep.subr.bf16.mxu0 0
        %2072 = vmatpush1.bf16.msra.mxu0 %v2067
        %2073 = vmatprep.subr.bf16.mxu0 0
        %2074 = vmatpush1.bf16.msra.mxu0 0
        %2075 = vmatprep.subr.bf16.mxu0 0
        %2076 = vmatpush1.bf16.msra.mxu0 0
        %2077 = vmatprep.subr.bf16.mxu0 0
        %2078 = vmatpush1.bf16.msra.mxu0 0
        %2079 = vmatprep.subr.bf16.mxu0 0
        %2080 = vmatpush1.bf16.msra.mxu0 0
        %2081 = vmatprep.subr.bf16.mxu0 0
        %2082 = vmatpush1.bf16.msra.mxu0 0
        %2083 = vmatprep.subr.bf16.mxu0 0
        %2084 = vmatpush1.bf16.msra.mxu0 0
        %2085 = vmatprep.subr.bf16.mxu0 0
        %2086 = vmatpush1.bf16.msra.mxu0 0
        %2087 = vmatprep.subr.bf16.mxu0 0
        %2088 = vmatpush1.bf16.msra.mxu0 0
        %2089 = vmatprep.subr.bf16.mxu0 0
        %2090 = vmatpush1.bf16.msra.mxu0 0
        %2091 = vmatprep.subr.bf16.mxu0 0
        %2092 = vmatpush1.bf16.msra.mxu0 0
        %2093 = vmatprep.subr.bf16.mxu0 0
        %2094 = vmatpush1.bf16.msra.mxu0 0
        %2095 = vmatprep.subr.bf16.mxu0 0
        %2096 = vmatpush1.bf16.msra.mxu0 0
        %2097 = vmatprep.subr.bf16.mxu0 0
        %2098 = vmatpush1.bf16.msra.mxu0 0
        %2099 = vmatprep.subr.bf16.mxu0 0
        %2100 = vmatpush1.bf16.msra.mxu0 0
        %2101 = vmatprep.subr.bf16.mxu0 0
        %2102 = vmatpush1.bf16.msra.mxu0 0
        %2103 = vmatprep.mubr.bf16.mxu0 0
        %2104 = vmatmul.mubr.bf16.gmra.mrb[0].mxu0 %v2069
        %v2105 = vpop.f32.mrb[0].mxu0
        %v2106 = vadd.f32 0.0, %v2105
        %v2107 = vpop.f32.mrb[0].mxu0
        %v2108 = vpop.f32.mrb[0].mxu0
        %v2109 = vadd.f32 0.0, %v2108
        %v2110 = vpop.f32.mrb[0].mxu0
        %2111 = vdwg.mxu0
        %v2112 = vld [vmem:[#allocation3 + $0x28] sm:$0xff]
        %2113 = vrot.lane.b32.xlu0 %v1346, 88
        %v2114 = vpop.permute.xlu0 %2113
        %2115 = vrot.lane.b32.xlu0 %v1347, 88
        %v2116 = vpop.permute.xlu0 %2115
        %v2117 = vsel %vm1349, %v2114, 0
        %v2119 = vsel %vm1349, %v2116, 0
        %2121 = vmatprep.subr.mxu0 0.0
        %2122 = vmatpush1.msra.mxu0 %v2112
        %2123 = vmatprep.subr.mxu0 0.0
        %2124 = vmatpush1.msra.mxu0 0.0
        %2125 = vmatprep.subr.mxu0 0.0
        %2126 = vmatpush1.msra.mxu0 0.0
        %2127 = vmatprep.subr.mxu0 0.0
        %2128 = vmatpush1.msra.mxu0 0.0
        %2129 = vmatprep.subr.mxu0 0.0
        %2130 = vmatpush1.msra.mxu0 0.0
        %2131 = vmatprep.subr.mxu0 0.0
        %2132 = vmatpush1.msra.mxu0 0.0
        %2133 = vmatprep.subr.mxu0 0.0
        %2134 = vmatpush1.msra.mxu0 0.0
        %2135 = vmatprep.subr.mxu0 0.0
        %2136 = vmatpush1.msra.mxu0 0.0
        %2137 = vmatprep.subr.mxu0 0.0
        %2138 = vmatpush1.msra.mxu0 0.0
        %2139 = vmatprep.subr.mxu0 0.0
        %2140 = vmatpush1.msra.mxu0 0.0
        %2141 = vmatprep.subr.mxu0 0.0
        %2142 = vmatpush1.msra.mxu0 0.0
        %2143 = vmatprep.subr.mxu0 0.0
        %2144 = vmatpush1.msra.mxu0 0.0
        %2145 = vmatprep.subr.mxu0 0.0
        %2146 = vmatpush1.msra.mxu0 0.0
        %2147 = vmatprep.subr.mxu0 0.0
        %2148 = vmatpush1.msra.mxu0 0.0
        %2149 = vmatprep.subr.mxu0 0.0
        %2150 = vmatpush1.msra.mxu0 0.0
        %2151 = vmatprep.subr.mxu0 0.0
        %2152 = vmatpush1.msra.mxu0 0.0
        %2153 = vmatprep.subr.mxu0 0.0
        %2154 = vmatpush1.msra.mxu0 0.0
        %2155 = vmatprep.subr.mxu0 0.0
        %2156 = vmatpush1.msra.mxu0 0.0
        %2157 = vmatprep.subr.mxu0 0.0
        %2158 = vmatpush1.msra.mxu0 0.0
        %2159 = vmatprep.subr.mxu0 0.0
        %2160 = vmatpush1.msra.mxu0 0.0
        %2161 = vmatprep.subr.mxu0 0.0
        %2162 = vmatpush1.msra.mxu0 0.0
        %2163 = vmatprep.subr.mxu0 0.0
        %2164 = vmatpush1.msra.mxu0 0.0
        %2165 = vmatprep.subr.mxu0 0.0
        %2166 = vmatpush1.msra.mxu0 0.0
        %2167 = vmatprep.subr.mxu0 0.0
        %2168 = vmatpush1.msra.mxu0 0.0
        %2169 = vmatprep.subr.mxu0 0.0
        %2170 = vmatpush1.msra.mxu0 0.0
        %2171 = vmatprep.subr.mxu0 0.0
        %2172 = vmatpush1.msra.mxu0 0.0
        %2173 = vmatprep.subr.mxu0 0.0
        %2174 = vmatpush1.msra.mxu0 0.0
        %2175 = vmatprep.subr.mxu0 0.0
        %2176 = vmatpush1.msra.mxu0 0.0
        %2177 = vmatprep.subr.mxu0 0.0
        %2178 = vmatpush1.msra.mxu0 0.0
        %2179 = vmatprep.subr.mxu0 0.0
        %2180 = vmatpush1.msra.mxu0 0.0
        %2181 = vmatprep.subr.mxu0 0.0
        %2182 = vmatpush1.msra.mxu0 0.0
        %2183 = vmatprep.subr.mxu0 0.0
        %2184 = vmatpush1.msra.mxu0 0.0
        %2185 = vmatprep.mubr.f32.mxu0 0.0
        %2186 = vmatmul.mubr.f32.gmra.mrb[0].mxu0 %v2117
        %v2187 = vpop.f32.mrb[0].mxu0
        %v2188 = vadd.f32 0.0, %v2187
        %v2189 = vpop.f32.mrb[0].mxu0
        %2190 = vmatprep.mubr.f32.mxu0 0.0
        %2191 = vmatmul.mubr.f32.gmra.mrb[0].mxu0 %v2119
        %v2192 = vpop.f32.mrb[0].mxu0
        %v2193 = vadd.f32 0.0, %v2192
        %v2194 = vpop.f32.mrb[0].mxu0
        %2195 = vdwg.mxu0
        %v2196 = vsel %vm1431, %v2188, -inf
        %2197 = vmax.xlane.f32.xlu0 %v2196
        %v2198 = vpop.xlane.xlu0 %2197
        %v2199 = vsel %vm1431, %v2193, -inf
        %2200 = vmax.xlane.f32.xlu0 %v2199
        %v2201 = vpop.xlane.xlu0 %2200
        %v2202 = vsub.f32 %v2188, %v2198
        %v2203 = vsub.f32 %v2193, %v2201
        %v2204 = vmul.f32 %v2202, 1.442695
        %v2205 = vpow.pop %v2204
        %v2206 = vmul.f32 %v2203, 1.442695
        %v2207 = vpow.pop %v2206
        %v2208 = vsel %vm1431, %v2205, 0.0
        %2209 = vadd.xlane.f32.xlu0 %v2208
        %v2210 = vpop.xlane.xlu0 %2209
        %v2211 = vsel %vm1431, %v2207, 0.0
        %2212 = vadd.xlane.f32.xlu0 %v2211
        %v2213 = vpop.xlane.xlu0 %2212
        %v2214 = vrcp.pop %v2210
        %v2215 = vrcp.pop %v2213
        %v2216 = vmul.f32 %v2205, %v2214
        %v2217 = vmul.f32 %v2207, %v2215
        %v2218 = vpack.c.bf16 %v2217, %v2216
        %s2219 = scalar_lea.vmem [#allocation4], 40
        %v2220 = vld [vmem:[%s2219] sm:$0xff]
        %v2222 = vsel %vm1431, %v2218, 0
        %2224 = vmatprep.subr.bf16.mxu0 0
        %2225 = vmatpush1.bf16.msra.mxu0 %v2220
        %2226 = vmatprep.subr.bf16.mxu0 0
        %2227 = vmatpush1.bf16.msra.mxu0 0
        %2228 = vmatprep.subr.bf16.mxu0 0
        %2229 = vmatpush1.bf16.msra.mxu0 0
        %2230 = vmatprep.subr.bf16.mxu0 0
        %2231 = vmatpush1.bf16.msra.mxu0 0
        %2232 = vmatprep.subr.bf16.mxu0 0
        %2233 = vmatpush1.bf16.msra.mxu0 0
        %2234 = vmatprep.subr.bf16.mxu0 0
        %2235 = vmatpush1.bf16.msra.mxu0 0
        %2236 = vmatprep.subr.bf16.mxu0 0
        %2237 = vmatpush1.bf16.msra.mxu0 0
        %2238 = vmatprep.subr.bf16.mxu0 0
        %2239 = vmatpush1.bf16.msra.mxu0 0
        %2240 = vmatprep.subr.bf16.mxu0 0
        %2241 = vmatpush1.bf16.msra.mxu0 0
        %2242 = vmatprep.subr.bf16.mxu0 0
        %2243 = vmatpush1.bf16.msra.mxu0 0
        %2244 = vmatprep.subr.bf16.mxu0 0
        %2245 = vmatpush1.bf16.msra.mxu0 0
        %2246 = vmatprep.subr.bf16.mxu0 0
        %2247 = vmatpush1.bf16.msra.mxu0 0
        %2248 = vmatprep.subr.bf16.mxu0 0
        %2249 = vmatpush1.bf16.msra.mxu0 0
        %2250 = vmatprep.subr.bf16.mxu0 0
        %2251 = vmatpush1.bf16.msra.mxu0 0
        %2252 = vmatprep.subr.bf16.mxu0 0
        %2253 = vmatpush1.bf16.msra.mxu0 0
        %2254 = vmatprep.subr.bf16.mxu0 0
        %2255 = vmatpush1.bf16.msra.mxu0 0
        %2256 = vmatprep.mubr.bf16.mxu0 0
        %2257 = vmatmul.mubr.bf16.gmra.mrb[0].mxu0 %v2222
        %v2258 = vpop.f32.mrb[0].mxu0
        %v2259 = vadd.f32 0.0, %v2258
        %v2260 = vpop.f32.mrb[0].mxu0
        %v2261 = vpop.f32.mrb[0].mxu0
        %v2262 = vadd.f32 0.0, %v2261
        %v2263 = vpop.f32.mrb[0].mxu0
        %2264 = vdwg.mxu0
        %v2265 = vld [vmem:[#allocation3 + $0x30] sm:$0xff]
        %2266 = vrot.lane.b32.xlu0 %v1346, 80
        %v2267 = vpop.permute.xlu0 %2266
        %2268 = vrot.lane.b32.xlu0 %v1347, 80
        %v2269 = vpop.permute.xlu0 %2268
        %v2270 = vsel %vm1349, %v2267, 0
        %v2272 = vsel %vm1349, %v2269, 0
        %2274 = vmatprep.subr.mxu0 0.0
        %2275 = vmatpush1.msra.mxu0 %v2265
        %2276 = vmatprep.subr.mxu0 0.0
        %2277 = vmatpush1.msra.mxu0 0.0
        %2278 = vmatprep.subr.mxu0 0.0
        %2279 = vmatpush1.msra.mxu0 0.0
        %2280 = vmatprep.subr.mxu0 0.0
        %2281 = vmatpush1.msra.mxu0 0.0
        %2282 = vmatprep.subr.mxu0 0.0
        %2283 = vmatpush1.msra.mxu0 0.0
        %2284 = vmatprep.subr.mxu0 0.0
        %2285 = vmatpush1.msra.mxu0 0.0
        %2286 = vmatprep.subr.mxu0 0.0
        %2287 = vmatpush1.msra.mxu0 0.0
        %2288 = vmatprep.subr.mxu0 0.0
        %2289 = vmatpush1.msra.mxu0 0.0
        %2290 = vmatprep.subr.mxu0 0.0
        %2291 = vmatpush1.msra.mxu0 0.0
        %2292 = vmatprep.subr.mxu0 0.0
        %2293 = vmatpush1.msra.mxu0 0.0
        %2294 = vmatprep.subr.mxu0 0.0
        %2295 = vmatpush1.msra.mxu0 0.0
        %2296 = vmatprep.subr.mxu0 0.0
        %2297 = vmatpush1.msra.mxu0 0.0
        %2298 = vmatprep.subr.mxu0 0.0
        %2299 = vmatpush1.msra.mxu0 0.0
        %2300 = vmatprep.subr.mxu0 0.0
        %2301 = vmatpush1.msra.mxu0 0.0
        %2302 = vmatprep.subr.mxu0 0.0
        %2303 = vmatpush1.msra.mxu0 0.0
        %2304 = vmatprep.subr.mxu0 0.0
        %2305 = vmatpush1.msra.mxu0 0.0
        %2306 = vmatprep.subr.mxu0 0.0
        %2307 = vmatpush1.msra.mxu0 0.0
        %2308 = vmatprep.subr.mxu0 0.0
        %2309 = vmatpush1.msra.mxu0 0.0
        %2310 = vmatprep.subr.mxu0 0.0
        %2311 = vmatpush1.msra.mxu0 0.0
        %2312 = vmatprep.subr.mxu0 0.0
        %2313 = vmatpush1.msra.mxu0 0.0
        %2314 = vmatprep.subr.mxu0 0.0
        %2315 = vmatpush1.msra.mxu0 0.0
        %2316 = vmatprep.subr.mxu0 0.0
        %2317 = vmatpush1.msra.mxu0 0.0
        %2318 = vmatprep.subr.mxu0 0.0
        %2319 = vmatpush1.msra.mxu0 0.0
        %2320 = vmatprep.subr.mxu0 0.0
        %2321 = vmatpush1.msra.mxu0 0.0
        %2322 = vmatprep.subr.mxu0 0.0
        %2323 = vmatpush1.msra.mxu0 0.0
        %2324 = vmatprep.subr.mxu0 0.0
        %2325 = vmatpush1.msra.mxu0 0.0
        %2326 = vmatprep.subr.mxu0 0.0
        %2327 = vmatpush1.msra.mxu0 0.0
        %2328 = vmatprep.subr.mxu0 0.0
        %2329 = vmatpush1.msra.mxu0 0.0
        %2330 = vmatprep.subr.mxu0 0.0
        %2331 = vmatpush1.msra.mxu0 0.0
        %2332 = vmatprep.subr.mxu0 0.0
        %2333 = vmatpush1.msra.mxu0 0.0
        %2334 = vmatprep.subr.mxu0 0.0
        %2335 = vmatpush1.msra.mxu0 0.0
        %2336 = vmatprep.subr.mxu0 0.0
        %2337 = vmatpush1.msra.mxu0 0.0
        %2338 = vmatprep.mubr.f32.mxu0 0.0
        %2339 = vmatmul.mubr.f32.gmra.mrb[0].mxu0 %v2270
        %v2340 = vpop.f32.mrb[0].mxu0
        %v2341 = vadd.f32 0.0, %v2340
        %v2342 = vpop.f32.mrb[0].mxu0
        %2343 = vmatprep.mubr.f32.mxu0 0.0
        %2344 = vmatmul.mubr.f32.gmra.mrb[0].mxu0 %v2272
        %v2345 = vpop.f32.mrb[0].mxu0
        %v2346 = vadd.f32 0.0, %v2345
        %v2347 = vpop.f32.mrb[0].mxu0
        %2348 = vdwg.mxu0
        %v2349 = vsel %vm1431, %v2341, -inf
        %2350 = vmax.xlane.f32.xlu0 %v2349
        %v2351 = vpop.xlane.xlu0 %2350
        %v2352 = vsel %vm1431, %v2346, -inf
        %2353 = vmax.xlane.f32.xlu0 %v2352
        %v2354 = vpop.xlane.xlu0 %2353
        %v2355 = vsub.f32 %v2341, %v2351
        %v2356 = vsub.f32 %v2346, %v2354
        %v2357 = vmul.f32 %v2355, 1.442695
        %v2358 = vpow.pop %v2357
        %v2359 = vmul.f32 %v2356, 1.442695
        %v2360 = vpow.pop %v2359
        %v2361 = vsel %vm1431, %v2358, 0.0
        %2362 = vadd.xlane.f32.xlu0 %v2361
        %v2363 = vpop.xlane.xlu0 %2362
        %v2364 = vsel %vm1431, %v2360, 0.0
        %2365 = vadd.xlane.f32.xlu0 %v2364
        %v2366 = vpop.xlane.xlu0 %2365
        %v2367 = vrcp.pop %v2363
        %v2368 = vrcp.pop %v2366
        %v2369 = vmul.f32 %v2358, %v2367
        %v2370 = vmul.f32 %v2360, %v2368
        %v2371 = vpack.c.bf16 %v2370, %v2369
        %s2372 = scalar_lea.vmem [#allocation4], 48
        %v2373 = vld [vmem:[%s2372] sm:$0xff]
        %v2375 = vsel %vm1431, %v2371, 0
        %2377 = vmatprep.subr.bf16.mxu0 0
        %2378 = vmatpush1.bf16.msra.mxu0 %v2373
        %2379 = vmatprep.subr.bf16.mxu0 0
        %2380 = vmatpush1.bf16.msra.mxu0 0
        %2381 = vmatprep.subr.bf16.mxu0 0
        %2382 = vmatpush1.bf16.msra.mxu0 0
        %2383 = vmatprep.subr.bf16.mxu0 0
        %2384 = vmatpush1.bf16.msra.mxu0 0
        %2385 = vmatprep.subr.bf16.mxu0 0
        %2386 = vmatpush1.bf16.msra.mxu0 0
        %2387 = vmatprep.subr.bf16.mxu0 0
        %2388 = vmatpush1.bf16.msra.mxu0 0
        %2389 = vmatprep.subr.bf16.mxu0 0
        %2390 = vmatpush1.bf16.msra.mxu0 0
        %2391 = vmatprep.subr.bf16.mxu0 0
        %2392 = vmatpush1.bf16.msra.mxu0 0
        %2393 = vmatprep.subr.bf16.mxu0 0
        %2394 = vmatpush1.bf16.msra.mxu0 0
        %2395 = vmatprep.subr.bf16.mxu0 0
        %2396 = vmatpush1.bf16.msra.mxu0 0
        %2397 = vmatprep.subr.bf16.mxu0 0
        %2398 = vmatpush1.bf16.msra.mxu0 0
        %2399 = vmatprep.subr.bf16.mxu0 0
        %2400 = vmatpush1.bf16.msra.mxu0 0
        %2401 = vmatprep.subr.bf16.mxu0 0
        %2402 = vmatpush1.bf16.msra.mxu0 0
        %2403 = vmatprep.subr.bf16.mxu0 0
        %2404 = vmatpush1.bf16.msra.mxu0 0
        %2405 = vmatprep.subr.bf16.mxu0 0
        %2406 = vmatpush1.bf16.msra.mxu0 0
        %2407 = vmatprep.subr.bf16.mxu0 0
        %2408 = vmatpush1.bf16.msra.mxu0 0
        %2409 = vmatprep.mubr.bf16.mxu0 0
        %2410 = vmatmul.mubr.bf16.gmra.mrb[0].mxu0 %v2375
        %v2411 = vpop.f32.mrb[0].mxu0
        %v2412 = vadd.f32 0.0, %v2411
        %v2413 = vpop.f32.mrb[0].mxu0
        %v2414 = vpop.f32.mrb[0].mxu0
        %v2415 = vadd.f32 0.0, %v2414
        %v2416 = vpop.f32.mrb[0].mxu0
        %2417 = vdwg.mxu0
        %v2418 = vld [vmem:[#allocation3 + $0x38] sm:$0xff]
        %2419 = vrot.lane.b32.xlu0 %v1346, 72
        %v2420 = vpop.permute.xlu0 %2419
        %2421 = vrot.lane.b32.xlu0 %v1347, 72
        %v2422 = vpop.permute.xlu0 %2421
        %v2423 = vsel %vm1349, %v2420, 0
        %v2425 = vsel %vm1349, %v2422, 0
        %2427 = vmatprep.subr.mxu0 0.0
        %2428 = vmatpush1.msra.mxu0 %v2418
        %2429 = vmatprep.subr.mxu0 0.0
        %2430 = vmatpush1.msra.mxu0 0.0
        %2431 = vmatprep.subr.mxu0 0.0
        %2432 = vmatpush1.msra.mxu0 0.0
        %2433 = vmatprep.subr.mxu0 0.0
        %2434 = vmatpush1.msra.mxu0 0.0
        %2435 = vmatprep.subr.mxu0 0.0
        %2436 = vmatpush1.msra.mxu0 0.0
        %2437 = vmatprep.subr.mxu0 0.0
        %2438 = vmatpush1.msra.mxu0 0.0
        %2439 = vmatprep.subr.mxu0 0.0
        %2440 = vmatpush1.msra.mxu0 0.0
        %2441 = vmatprep.subr.mxu0 0.0
        %2442 = vmatpush1.msra.mxu0 0.0
        %2443 = vmatprep.subr.mxu0 0.0
        %2444 = vmatpush1.msra.mxu0 0.0
        %2445 = vmatprep.subr.mxu0 0.0
        %2446 = vmatpush1.msra.mxu0 0.0
        %2447 = vmatprep.subr.mxu0 0.0
        %2448 = vmatpush1.msra.mxu0 0.0
        %2449 = vmatprep.subr.mxu0 0.0
        %2450 = vmatpush1.msra.mxu0 0.0
        %2451 = vmatprep.subr.mxu0 0.0
        %2452 = vmatpush1.msra.mxu0 0.0
        %2453 = vmatprep.subr.mxu0 0.0
        %2454 = vmatpush1.msra.mxu0 0.0
        %2455 = vmatprep.subr.mxu0 0.0
        %2456 = vmatpush1.msra.mxu0 0.0
        %2457 = vmatprep.subr.mxu0 0.0
        %2458 = vmatpush1.msra.mxu0 0.0
        %2459 = vmatprep.subr.mxu0 0.0
        %2460 = vmatpush1.msra.mxu0 0.0
        %2461 = vmatprep.subr.mxu0 0.0
        %2462 = vmatpush1.msra.mxu0 0.0
        %2463 = vmatprep.subr.mxu0 0.0
        %2464 = vmatpush1.msra.mxu0 0.0
        %2465 = vmatprep.subr.mxu0 0.0
        %2466 = vmatpush1.msra.mxu0 0.0
        %2467 = vmatprep.subr.mxu0 0.0
        %2468 = vmatpush1.msra.mxu0 0.0
        %2469 = vmatprep.subr.mxu0 0.0
        %2470 = vmatpush1.msra.mxu0 0.0
        %2471 = vmatprep.subr.mxu0 0.0
        %2472 = vmatpush1.msra.mxu0 0.0
        %2473 = vmatprep.subr.mxu0 0.0
        %2474 = vmatpush1.msra.mxu0 0.0
        %2475 = vmatprep.subr.mxu0 0.0
        %2476 = vmatpush1.msra.mxu0 0.0
        %2477 = vmatprep.subr.mxu0 0.0
        %2478 = vmatpush1.msra.mxu0 0.0
        %2479 = vmatprep.subr.mxu0 0.0
        %2480 = vmatpush1.msra.mxu0 0.0
        %2481 = vmatprep.subr.mxu0 0.0
        %2482 = vmatpush1.msra.mxu0 0.0
        %2483 = vmatprep.subr.mxu0 0.0
        %2484 = vmatpush1.msra.mxu0 0.0
        %2485 = vmatprep.subr.mxu0 0.0
        %2486 = vmatpush1.msra.mxu0 0.0
        %2487 = vmatprep.subr.mxu0 0.0
        %2488 = vmatpush1.msra.mxu0 0.0
        %2489 = vmatprep.subr.mxu0 0.0
        %2490 = vmatpush1.msra.mxu0 0.0
        %2491 = vmatprep.mubr.f32.mxu0 0.0
        %2492 = vmatmul.mubr.f32.gmra.mrb[0].mxu0 %v2423
        %v2493 = vpop.f32.mrb[0].mxu0
        %v2494 = vadd.f32 0.0, %v2493
        %v2495 = vpop.f32.mrb[0].mxu0
        %2496 = vmatprep.mubr.f32.mxu0 0.0
        %2497 = vmatmul.mubr.f32.gmra.mrb[0].mxu0 %v2425
        %v2498 = vpop.f32.mrb[0].mxu0
        %v2499 = vadd.f32 0.0, %v2498
        %v2500 = vpop.f32.mrb[0].mxu0
        %2501 = vdwg.mxu0
        %v2502 = vsel %vm1431, %v2494, -inf
        %2503 = vmax.xlane.f32.xlu0 %v2502
        %v2504 = vpop.xlane.xlu0 %2503
        %v2505 = vsel %vm1431, %v2499, -inf
        %2506 = vmax.xlane.f32.xlu0 %v2505
        %v2507 = vpop.xlane.xlu0 %2506
        %v2508 = vsub.f32 %v2494, %v2504
        %v2509 = vsub.f32 %v2499, %v2507
        %v2510 = vmul.f32 %v2508, 1.442695
        %v2511 = vpow.pop %v2510
        %v2512 = vmul.f32 %v2509, 1.442695
        %v2513 = vpow.pop %v2512
        %v2514 = vsel %vm1431, %v2511, 0.0
        %2515 = vadd.xlane.f32.xlu0 %v2514
        %v2516 = vpop.xlane.xlu0 %2515
        %v2517 = vsel %vm1431, %v2513, 0.0
        %2518 = vadd.xlane.f32.xlu0 %v2517
        %v2519 = vpop.xlane.xlu0 %2518
        %v2520 = vrcp.pop %v2516
        %v2521 = vrcp.pop %v2519
        %v2522 = vmul.f32 %v2511, %v2520
        %v2523 = vmul.f32 %v2513, %v2521
        %v2524 = vpack.c.bf16 %v2523, %v2522
        %s2525 = scalar_lea.vmem [#allocation4], 56
        %v2526 = vld [vmem:[%s2525] sm:$0xff]
        %v2528 = vsel %vm1431, %v2524, 0
        %2530 = vmatprep.subr.bf16.mxu0 0
        %2531 = vmatpush1.bf16.msra.mxu0 %v2526
        %2532 = vmatprep.subr.bf16.mxu0 0
        %2533 = vmatpush1.bf16.msra.mxu0 0
        %2534 = vmatprep.subr.bf16.mxu0 0
        %2535 = vmatpush1.bf16.msra.mxu0 0
        %2536 = vmatprep.subr.bf16.mxu0 0
        %2537 = vmatpush1.bf16.msra.mxu0 0
        %2538 = vmatprep.subr.bf16.mxu0 0
        %2539 = vmatpush1.bf16.msra.mxu0 0
        %2540 = vmatprep.subr.bf16.mxu0 0
        %2541 = vmatpush1.bf16.msra.mxu0 0
        %2542 = vmatprep.subr.bf16.mxu0 0
        %2543 = vmatpush1.bf16.msra.mxu0 0
        %2544 = vmatprep.subr.bf16.mxu0 0
        %2545 = vmatpush1.bf16.msra.mxu0 0
        %2546 = vmatprep.subr.bf16.mxu0 0
        %2547 = vmatpush1.bf16.msra.mxu0 0
        %2548 = vmatprep.subr.bf16.mxu0 0
        %2549 = vmatpush1.bf16.msra.mxu0 0
        %2550 = vmatprep.subr.bf16.mxu0 0
        %2551 = vmatpush1.bf16.msra.mxu0 0
        %2552 = vmatprep.subr.bf16.mxu0 0
        %2553 = vmatpush1.bf16.msra.mxu0 0
        %2554 = vmatprep.subr.bf16.mxu0 0
        %2555 = vmatpush1.bf16.msra.mxu0 0
        %2556 = vmatprep.subr.bf16.mxu0 0
        %2557 = vmatpush1.bf16.msra.mxu0 0
        %2558 = vmatprep.subr.bf16.mxu0 0
        %2559 = vmatpush1.bf16.msra.mxu0 0
        %2560 = vmatprep.subr.bf16.mxu0 0
        %2561 = vmatpush1.bf16.msra.mxu0 0
        %2562 = vmatprep.mubr.bf16.mxu0 0
        %2563 = vmatmul.mubr.bf16.gmra.mrb[0].mxu0 %v2528
        %v2564 = vpop.f32.mrb[0].mxu0
        %v2565 = vadd.f32 0.0, %v2564
        %v2566 = vpop.f32.mrb[0].mxu0
        %v2567 = vpop.f32.mrb[0].mxu0
        %v2568 = vadd.f32 0.0, %v2567
        %v2569 = vpop.f32.mrb[0].mxu0
        %2570 = vdwg.mxu0
        %v2571 = vld [vmem:[#allocation3 + $0x40] sm:$0xff]
        %2572 = vrot.lane.b32.xlu0 %v1346, 64
        %v2573 = vpop.permute.xlu0 %2572
        %2574 = vrot.lane.b32.xlu0 %v1347, 64
        %v2575 = vpop.permute.xlu0 %2574
        %v2576 = vsel %vm1349, %v2573, 0
        %v2578 = vsel %vm1349, %v2575, 0
        %2580 = vmatprep.subr.mxu0 0.0
        %2581 = vmatpush1.msra.mxu0 %v2571
        %2582 = vmatprep.subr.mxu0 0.0
        %2583 = vmatpush1.msra.mxu0 0.0
        %2584 = vmatprep.subr.mxu0 0.0
        %2585 = vmatpush1.msra.mxu0 0.0
        %2586 = vmatprep.subr.mxu0 0.0
        %2587 = vmatpush1.msra.mxu0 0.0
        %2588 = vmatprep.subr.mxu0 0.0
        %2589 = vmatpush1.msra.mxu0 0.0
        %2590 = vmatprep.subr.mxu0 0.0
        %2591 = vmatpush1.msra.mxu0 0.0
        %2592 = vmatprep.subr.mxu0 0.0
        %2593 = vmatpush1.msra.mxu0 0.0
        %2594 = vmatprep.subr.mxu0 0.0
        %2595 = vmatpush1.msra.mxu0 0.0
        %2596 = vmatprep.subr.mxu0 0.0
        %2597 = vmatpush1.msra.mxu0 0.0
        %2598 = vmatprep.subr.mxu0 0.0
        %2599 = vmatpush1.msra.mxu0 0.0
        %2600 = vmatprep.subr.mxu0 0.0
        %2601 = vmatpush1.msra.mxu0 0.0
        %2602 = vmatprep.subr.mxu0 0.0
        %2603 = vmatpush1.msra.mxu0 0.0
        %2604 = vmatprep.subr.mxu0 0.0
        %2605 = vmatpush1.msra.mxu0 0.0
        %2606 = vmatprep.subr.mxu0 0.0
        %2607 = vmatpush1.msra.mxu0 0.0
        %2608 = vmatprep.subr.mxu0 0.0
        %2609 = vmatpush1.msra.mxu0 0.0
        %2610 = vmatprep.subr.mxu0 0.0
        %2611 = vmatpush1.msra.mxu0 0.0
        %2612 = vmatprep.subr.mxu0 0.0
        %2613 = vmatpush1.msra.mxu0 0.0
        %2614 = vmatprep.subr.mxu0 0.0
        %2615 = vmatpush1.msra.mxu0 0.0
        %2616 = vmatprep.subr.mxu0 0.0
        %2617 = vmatpush1.msra.mxu0 0.0
        %2618 = vmatprep.subr.mxu0 0.0
        %2619 = vmatpush1.msra.mxu0 0.0
        %2620 = vmatprep.subr.mxu0 0.0
        %2621 = vmatpush1.msra.mxu0 0.0
        %2622 = vmatprep.subr.mxu0 0.0
        %2623 = vmatpush1.msra.mxu0 0.0
        %2624 = vmatprep.subr.mxu0 0.0
        %2625 = vmatpush1.msra.mxu0 0.0
        %2626 = vmatprep.subr.mxu0 0.0
        %2627 = vmatpush1.msra.mxu0 0.0
        %2628 = vmatprep.subr.mxu0 0.0
        %2629 = vmatpush1.msra.mxu0 0.0
        %2630 = vmatprep.subr.mxu0 0.0
        %2631 = vmatpush1.msra.mxu0 0.0
        %2632 = vmatprep.subr.mxu0 0.0
        %2633 = vmatpush1.msra.mxu0 0.0
        %2634 = vmatprep.subr.mxu0 0.0
        %2635 = vmatpush1.msra.mxu0 0.0
        %2636 = vmatprep.subr.mxu0 0.0
        %2637 = vmatpush1.msra.mxu0 0.0
        %2638 = vmatprep.subr.mxu0 0.0
        %2639 = vmatpush1.msra.mxu0 0.0
        %2640 = vmatprep.subr.mxu0 0.0
        %2641 = vmatpush1.msra.mxu0 0.0
        %2642 = vmatprep.subr.mxu0 0.0
        %2643 = vmatpush1.msra.mxu0 0.0
        %2644 = vmatprep.mubr.f32.mxu0 0.0
        %2645 = vmatmul.mubr.f32.gmra.mrb[0].mxu0 %v2576
        %v2646 = vpop.f32.mrb[0].mxu0
        %v2647 = vadd.f32 0.0, %v2646
        %v2648 = vpop.f32.mrb[0].mxu0
        %2649 = vmatprep.mubr.f32.mxu0 0.0
        %2650 = vmatmul.mubr.f32.gmra.mrb[0].mxu0 %v2578
        %v2651 = vpop.f32.mrb[0].mxu0
        %v2652 = vadd.f32 0.0, %v2651
        %v2653 = vpop.f32.mrb[0].mxu0
        %2654 = vdwg.mxu0
        %v2655 = vsel %vm1431, %v2647, -inf
        %2656 = vmax.xlane.f32.xlu0 %v2655
        %v2657 = vpop.xlane.xlu0 %2656
        %v2658 = vsel %vm1431, %v2652, -inf
        %2659 = vmax.xlane.f32.xlu0 %v2658
        %v2660 = vpop.xlane.xlu0 %2659
        %v2661 = vsub.f32 %v2647, %v2657
        %v2662 = vsub.f32 %v2652, %v2660
        %v2663 = vmul.f32 %v2661, 1.442695
        %v2664 = vpow.pop %v2663
        %v2665 = vmul.f32 %v2662, 1.442695
        %v2666 = vpow.pop %v2665
        %v2667 = vsel %vm1431, %v2664, 0.0
        %2668 = vadd.xlane.f32.xlu0 %v2667
        %v2669 = vpop.xlane.xlu0 %2668
        %v2670 = vsel %vm1431, %v2666, 0.0
        %2671 = vadd.xlane.f32.xlu0 %v2670
        %v2672 = vpop.xlane.xlu0 %2671
        %v2673 = vrcp.pop %v2669
        %v2674 = vrcp.pop %v2672
        %v2675 = vmul.f32 %v2664, %v2673
        %v2676 = vmul.f32 %v2666, %v2674
        %v2677 = vpack.c.bf16 %v2676, %v2675
        %s2678 = scalar_lea.vmem [#allocation4], 64
        %v2679 = vld [vmem:[%s2678] sm:$0xff]
        %v2681 = vsel %vm1431, %v2677, 0
        %2683 = vmatprep.subr.bf16.mxu0 0
        %2684 = vmatpush1.bf16.msra.mxu0 %v2679
        %2685 = vmatprep.subr.bf16.mxu0 0
        %2686 = vmatpush1.bf16.msra.mxu0 0
        %2687 = vmatprep.subr.bf16.mxu0 0
        %2688 = vmatpush1.bf16.msra.mxu0 0
        %2689 = vmatprep.subr.bf16.mxu0 0
        %2690 = vmatpush1.bf16.msra.mxu0 0
        %2691 = vmatprep.subr.bf16.mxu0 0
        %2692 = vmatpush1.bf16.msra.mxu0 0
        %2693 = vmatprep.subr.bf16.mxu0 0
        %2694 = vmatpush1.bf16.msra.mxu0 0
        %2695 = vmatprep.subr.bf16.mxu0 0
        %2696 = vmatpush1.bf16.msra.mxu0 0
        %2697 = vmatprep.subr.bf16.mxu0 0
        %2698 = vmatpush1.bf16.msra.mxu0 0
        %2699 = vmatprep.subr.bf16.mxu0 0
        %2700 = vmatpush1.bf16.msra.mxu0 0
        %2701 = vmatprep.subr.bf16.mxu0 0
        %2702 = vmatpush1.bf16.msra.mxu0 0
        %2703 = vmatprep.subr.bf16.mxu0 0
        %2704 = vmatpush1.bf16.msra.mxu0 0
        %2705 = vmatprep.subr.bf16.mxu0 0
        %2706 = vmatpush1.bf16.msra.mxu0 0
        %2707 = vmatprep.subr.bf16.mxu0 0
        %2708 = vmatpush1.bf16.msra.mxu0 0
        %2709 = vmatprep.subr.bf16.mxu0 0
        %2710 = vmatpush1.bf16.msra.mxu0 0
        %2711 = vmatprep.subr.bf16.mxu0 0
        %2712 = vmatpush1.bf16.msra.mxu0 0
        %2713 = vmatprep.subr.bf16.mxu0 0
        %2714 = vmatpush1.bf16.msra.mxu0 0
        %2715 = vmatprep.mubr.bf16.mxu0 0
        %2716 = vmatmul.mubr.bf16.gmra.mrb[0].mxu0 %v2681
        %v2717 = vpop.f32.mrb[0].mxu0
        %v2718 = vadd.f32 0.0, %v2717
        %v2719 = vpop.f32.mrb[0].mxu0
        %v2720 = vpop.f32.mrb[0].mxu0
        %v2721 = vadd.f32 0.0, %v2720
        %v2722 = vpop.f32.mrb[0].mxu0
        %2723 = vdwg.mxu0
        %v2724 = vld [vmem:[#allocation3 + $0x48] sm:$0xff]
        %2725 = vrot.lane.b32.xlu0 %v1346, 56
        %v2726 = vpop.permute.xlu0 %2725
        %2727 = vrot.lane.b32.xlu0 %v1347, 56
        %v2728 = vpop.permute.xlu0 %2727
        %v2729 = vsel %vm1349, %v2726, 0
        %v2731 = vsel %vm1349, %v2728, 0
        %2733 = vmatprep.subr.mxu0 0.0
        %2734 = vmatpush1.msra.mxu0 %v2724
        %2735 = vmatprep.subr.mxu0 0.0
        %2736 = vmatpush1.msra.mxu0 0.0
        %2737 = vmatprep.subr.mxu0 0.0
        %2738 = vmatpush1.msra.mxu0 0.0
        %2739 = vmatprep.subr.mxu0 0.0
        %2740 = vmatpush1.msra.mxu0 0.0
        %2741 = vmatprep.subr.mxu0 0.0
        %2742 = vmatpush1.msra.mxu0 0.0
        %2743 = vmatprep.subr.mxu0 0.0
        %2744 = vmatpush1.msra.mxu0 0.0
        %2745 = vmatprep.subr.mxu0 0.0
        %2746 = vmatpush1.msra.mxu0 0.0
        %2747 = vmatprep.subr.mxu0 0.0
        %2748 = vmatpush1.msra.mxu0 0.0
        %2749 = vmatprep.subr.mxu0 0.0
        %2750 = vmatpush1.msra.mxu0 0.0
        %2751 = vmatprep.subr.mxu0 0.0
        %2752 = vmatpush1.msra.mxu0 0.0
        %2753 = vmatprep.subr.mxu0 0.0
        %2754 = vmatpush1.msra.mxu0 0.0
        %2755 = vmatprep.subr.mxu0 0.0
        %2756 = vmatpush1.msra.mxu0 0.0
        %2757 = vmatprep.subr.mxu0 0.0
        %2758 = vmatpush1.msra.mxu0 0.0
        %2759 = vmatprep.subr.mxu0 0.0
        %2760 = vmatpush1.msra.mxu0 0.0
        %2761 = vmatprep.subr.mxu0 0.0
        %2762 = vmatpush1.msra.mxu0 0.0
        %2763 = vmatprep.subr.mxu0 0.0
        %2764 = vmatpush1.msra.mxu0 0.0
        %2765 = vmatprep.subr.mxu0 0.0
        %2766 = vmatpush1.msra.mxu0 0.0
        %2767 = vmatprep.subr.mxu0 0.0
        %2768 = vmatpush1.msra.mxu0 0.0
        %2769 = vmatprep.subr.mxu0 0.0
        %2770 = vmatpush1.msra.mxu0 0.0
        %2771 = vmatprep.subr.mxu0 0.0
        %2772 = vmatpush1.msra.mxu0 0.0
        %2773 = vmatprep.subr.mxu0 0.0
        %2774 = vmatpush1.msra.mxu0 0.0
        %2775 = vmatprep.subr.mxu0 0.0
        %2776 = vmatpush1.msra.mxu0 0.0
        %2777 = vmatprep.subr.mxu0 0.0
        %2778 = vmatpush1.msra.mxu0 0.0
        %2779 = vmatprep.subr.mxu0 0.0
        %2780 = vmatpush1.msra.mxu0 0.0
        %2781 = vmatprep.subr.mxu0 0.0
        %2782 = vmatpush1.msra.mxu0 0.0
        %2783 = vmatprep.subr.mxu0 0.0
        %2784 = vmatpush1.msra.mxu0 0.0
        %2785 = vmatprep.subr.mxu0 0.0
        %2786 = vmatpush1.msra.mxu0 0.0
        %2787 = vmatprep.subr.mxu0 0.0
        %2788 = vmatpush1.msra.mxu0 0.0
        %2789 = vmatprep.subr.mxu0 0.0
        %2790 = vmatpush1.msra.mxu0 0.0
        %2791 = vmatprep.subr.mxu0 0.0
        %2792 = vmatpush1.msra.mxu0 0.0
        %2793 = vmatprep.subr.mxu0 0.0
        %2794 = vmatpush1.msra.mxu0 0.0
        %2795 = vmatprep.subr.mxu0 0.0
        %2796 = vmatpush1.msra.mxu0 0.0
        %2797 = vmatprep.mubr.f32.mxu0 0.0
        %2798 = vmatmul.mubr.f32.gmra.mrb[0].mxu0 %v2729
        %v2799 = vpop.f32.mrb[0].mxu0
        %v2800 = vadd.f32 0.0, %v2799
        %v2801 = vpop.f32.mrb[0].mxu0
        %2802 = vmatprep.mubr.f32.mxu0 0.0
        %2803 = vmatmul.mubr.f32.gmra.mrb[0].mxu0 %v2731
        %v2804 = vpop.f32.mrb[0].mxu0
        %v2805 = vadd.f32 0.0, %v2804
        %v2806 = vpop.f32.mrb[0].mxu0
        %2807 = vdwg.mxu0
        %v2808 = vsel %vm1431, %v2800, -inf
        %2809 = vmax.xlane.f32.xlu0 %v2808
        %v2810 = vpop.xlane.xlu0 %2809
        %v2811 = vsel %vm1431, %v2805, -inf
        %2812 = vmax.xlane.f32.xlu0 %v2811
        %v2813 = vpop.xlane.xlu0 %2812
        %v2814 = vsub.f32 %v2800, %v2810
        %v2815 = vsub.f32 %v2805, %v2813
        %v2816 = vmul.f32 %v2814, 1.442695
        %v2817 = vpow.pop %v2816
        %v2818 = vmul.f32 %v2815, 1.442695
        %v2819 = vpow.pop %v2818
        %v2820 = vsel %vm1431, %v2817, 0.0
        %2821 = vadd.xlane.f32.xlu0 %v2820
        %v2822 = vpop.xlane.xlu0 %2821
        %v2823 = vsel %vm1431, %v2819, 0.0
        %2824 = vadd.xlane.f32.xlu0 %v2823
        %v2825 = vpop.xlane.xlu0 %2824
        %v2826 = vrcp.pop %v2822
        %v2827 = vrcp.pop %v2825
        %v2828 = vmul.f32 %v2817, %v2826
        %v2829 = vmul.f32 %v2819, %v2827
        %v2830 = vpack.c.bf16 %v2829, %v2828
        %s2831 = scalar_lea.vmem [#allocation4], 72
        %v2832 = vld [vmem:[%s2831] sm:$0xff]
        %v2834 = vsel %vm1431, %v2830, 0
        %2836 = vmatprep.subr.bf16.mxu0 0
        %2837 = vmatpush1.bf16.msra.mxu0 %v2832
        %2838 = vmatprep.subr.bf16.mxu0 0
        %2839 = vmatpush1.bf16.msra.mxu0 0
        %2840 = vmatprep.subr.bf16.mxu0 0
        %2841 = vmatpush1.bf16.msra.mxu0 0
        %2842 = vmatprep.subr.bf16.mxu0 0
        %2843 = vmatpush1.bf16.msra.mxu0 0
        %2844 = vmatprep.subr.bf16.mxu0 0
        %2845 = vmatpush1.bf16.msra.mxu0 0
        %2846 = vmatprep.subr.bf16.mxu0 0
        %2847 = vmatpush1.bf16.msra.mxu0 0
        %2848 = vmatprep.subr.bf16.mxu0 0
        %2849 = vmatpush1.bf16.msra.mxu0 0
        %2850 = vmatprep.subr.bf16.mxu0 0
        %2851 = vmatpush1.bf16.msra.mxu0 0
        %2852 = vmatprep.subr.bf16.mxu0 0
        %2853 = vmatpush1.bf16.msra.mxu0 0
        %2854 = vmatprep.subr.bf16.mxu0 0
        %2855 = vmatpush1.bf16.msra.mxu0 0
        %2856 = vmatprep.subr.bf16.mxu0 0
        %2857 = vmatpush1.bf16.msra.mxu0 0
        %2858 = vmatprep.subr.bf16.mxu0 0
        %2859 = vmatpush1.bf16.msra.mxu0 0
        %2860 = vmatprep.subr.bf16.mxu0 0
        %2861 = vmatpush1.bf16.msra.mxu0 0
        %2862 = vmatprep.subr.bf16.mxu0 0
        %2863 = vmatpush1.bf16.msra.mxu0 0
        %2864 = vmatprep.subr.bf16.mxu0 0
        %2865 = vmatpush1.bf16.msra.mxu0 0
        %2866 = vmatprep.subr.bf16.mxu0 0
        %2867 = vmatpush1.bf16.msra.mxu0 0
        %2868 = vmatprep.mubr.bf16.mxu0 0
        %2869 = vmatmul.mubr.bf16.gmra.mrb[0].mxu0 %v2834
        %v2870 = vpop.f32.mrb[0].mxu0
        %v2871 = vadd.f32 0.0, %v2870
        %v2872 = vpop.f32.mrb[0].mxu0
        %v2873 = vpop.f32.mrb[0].mxu0
        %v2874 = vadd.f32 0.0, %v2873
        %v2875 = vpop.f32.mrb[0].mxu0
        %2876 = vdwg.mxu0
        %v2877 = vld [vmem:[#allocation3 + $0x50] sm:$0xff]
        %2878 = vrot.lane.b32.xlu0 %v1346, 48
        %v2879 = vpop.permute.xlu0 %2878
        %2880 = vrot.lane.b32.xlu0 %v1347, 48
        %v2881 = vpop.permute.xlu0 %2880
        %v2882 = vsel %vm1349, %v2879, 0
        %v2884 = vsel %vm1349, %v2881, 0
        %2886 = vmatprep.subr.mxu0 0.0
        %2887 = vmatpush1.msra.mxu0 %v2877
        %2888 = vmatprep.subr.mxu0 0.0
        %2889 = vmatpush1.msra.mxu0 0.0
        %2890 = vmatprep.subr.mxu0 0.0
        %2891 = vmatpush1.msra.mxu0 0.0
        %2892 = vmatprep.subr.mxu0 0.0
        %2893 = vmatpush1.msra.mxu0 0.0
        %2894 = vmatprep.subr.mxu0 0.0
        %2895 = vmatpush1.msra.mxu0 0.0
        %2896 = vmatprep.subr.mxu0 0.0
        %2897 = vmatpush1.msra.mxu0 0.0
        %2898 = vmatprep.subr.mxu0 0.0
        %2899 = vmatpush1.msra.mxu0 0.0
        %2900 = vmatprep.subr.mxu0 0.0
        %2901 = vmatpush1.msra.mxu0 0.0
        %2902 = vmatprep.subr.mxu0 0.0
        %2903 = vmatpush1.msra.mxu0 0.0
        %2904 = vmatprep.subr.mxu0 0.0
        %2905 = vmatpush1.msra.mxu0 0.0
        %2906 = vmatprep.subr.mxu0 0.0
        %2907 = vmatpush1.msra.mxu0 0.0
        %2908 = vmatprep.subr.mxu0 0.0
        %2909 = vmatpush1.msra.mxu0 0.0
        %2910 = vmatprep.subr.mxu0 0.0
        %2911 = vmatpush1.msra.mxu0 0.0
        %2912 = vmatprep.subr.mxu0 0.0
        %2913 = vmatpush1.msra.mxu0 0.0
        %2914 = vmatprep.subr.mxu0 0.0
        %2915 = vmatpush1.msra.mxu0 0.0
        %2916 = vmatprep.subr.mxu0 0.0
        %2917 = vmatpush1.msra.mxu0 0.0
        %2918 = vmatprep.subr.mxu0 0.0
        %2919 = vmatpush1.msra.mxu0 0.0
        %2920 = vmatprep.subr.mxu0 0.0
        %2921 = vmatpush1.msra.mxu0 0.0
        %2922 = vmatprep.subr.mxu0 0.0
        %2923 = vmatpush1.msra.mxu0 0.0
        %2924 = vmatprep.subr.mxu0 0.0
        %2925 = vmatpush1.msra.mxu0 0.0
        %2926 = vmatprep.subr.mxu0 0.0
        %2927 = vmatpush1.msra.mxu0 0.0
        %2928 = vmatprep.subr.mxu0 0.0
        %2929 = vmatpush1.msra.mxu0 0.0
        %2930 = vmatprep.subr.mxu0 0.0
        %2931 = vmatpush1.msra.mxu0 0.0
        %2932 = vmatprep.subr.mxu0 0.0
        %2933 = vmatpush1.msra.mxu0 0.0
        %2934 = vmatprep.subr.mxu0 0.0
        %2935 = vmatpush1.msra.mxu0 0.0
        %2936 = vmatprep.subr.mxu0 0.0
        %2937 = vmatpush1.msra.mxu0 0.0
        %2938 = vmatprep.subr.mxu0 0.0
        %2939 = vmatpush1.msra.mxu0 0.0
        %2940 = vmatprep.subr.mxu0 0.0
        %2941 = vmatpush1.msra.mxu0 0.0
        %2942 = vmatprep.subr.mxu0 0.0
        %2943 = vmatpush1.msra.mxu0 0.0
        %2944 = vmatprep.subr.mxu0 0.0
        %2945 = vmatpush1.msra.mxu0 0.0
        %2946 = vmatprep.subr.mxu0 0.0
        %2947 = vmatpush1.msra.mxu0 0.0
        %2948 = vmatprep.subr.mxu0 0.0
        %2949 = vmatpush1.msra.mxu0 0.0
        %2950 = vmatprep.mubr.f32.mxu0 0.0
        %2951 = vmatmul.mubr.f32.gmra.mrb[0].mxu0 %v2882
        %v2952 = vpop.f32.mrb[0].mxu0
        %v2953 = vadd.f32 0.0, %v2952
        %v2954 = vpop.f32.mrb[0].mxu0
        %2955 = vmatprep.mubr.f32.mxu0 0.0
        %2956 = vmatmul.mubr.f32.gmra.mrb[0].mxu0 %v2884
        %v2957 = vpop.f32.mrb[0].mxu0
        %v2958 = vadd.f32 0.0, %v2957
        %v2959 = vpop.f32.mrb[0].mxu0
        %2960 = vdwg.mxu0
        %v2961 = vsel %vm1431, %v2953, -inf
        %2962 = vmax.xlane.f32.xlu0 %v2961
        %v2963 = vpop.xlane.xlu0 %2962
        %v2964 = vsel %vm1431, %v2958, -inf
        %2965 = vmax.xlane.f32.xlu0 %v2964
        %v2966 = vpop.xlane.xlu0 %2965
        %v2967 = vsub.f32 %v2953, %v2963
        %v2968 = vsub.f32 %v2958, %v2966
        %v2969 = vmul.f32 %v2967, 1.442695
        %v2970 = vpow.pop %v2969
        %v2971 = vmul.f32 %v2968, 1.442695
        %v2972 = vpow.pop %v2971
        %v2973 = vsel %vm1431, %v2970, 0.0
        %2974 = vadd.xlane.f32.xlu0 %v2973
        %v2975 = vpop.xlane.xlu0 %2974
        %v2976 = vsel %vm1431, %v2972, 0.0
        %2977 = vadd.xlane.f32.xlu0 %v2976
        %v2978 = vpop.xlane.xlu0 %2977
        %v2979 = vrcp.pop %v2975
        %v2980 = vrcp.pop %v2978
        %v2981 = vmul.f32 %v2970, %v2979
        %v2982 = vmul.f32 %v2972, %v2980
        %v2983 = vpack.c.bf16 %v2982, %v2981
        %s2984 = scalar_lea.vmem [#allocation4], 80
        %v2985 = vld [vmem:[%s2984] sm:$0xff]
        %v2987 = vsel %vm1431, %v2983, 0
        %2989 = vmatprep.subr.bf16.mxu0 0
        %2990 = vmatpush1.bf16.msra.mxu0 %v2985
        %2991 = vmatprep.subr.bf16.mxu0 0
        %2992 = vmatpush1.bf16.msra.mxu0 0
        %2993 = vmatprep.subr.bf16.mxu0 0
        %2994 = vmatpush1.bf16.msra.mxu0 0
        %2995 = vmatprep.subr.bf16.mxu0 0
        %2996 = vmatpush1.bf16.msra.mxu0 0
        %2997 = vmatprep.subr.bf16.mxu0 0
        %2998 = vmatpush1.bf16.msra.mxu0 0
        %2999 = vmatprep.subr.bf16.mxu0 0
        %3000 = vmatpush1.bf16.msra.mxu0 0
        %3001 = vmatprep.subr.bf16.mxu0 0
        %3002 = vmatpush1.bf16.msra.mxu0 0
        %3003 = vmatprep.subr.bf16.mxu0 0
        %3004 = vmatpush1.bf16.msra.mxu0 0
        %3005 = vmatprep.subr.bf16.mxu0 0
        %3006 = vmatpush1.bf16.msra.mxu0 0
        %3007 = vmatprep.subr.bf16.mxu0 0
        %3008 = vmatpush1.bf16.msra.mxu0 0
        %3009 = vmatprep.subr.bf16.mxu0 0
        %3010 = vmatpush1.bf16.msra.mxu0 0
        %3011 = vmatprep.subr.bf16.mxu0 0
        %3012 = vmatpush1.bf16.msra.mxu0 0
        %3013 = vmatprep.subr.bf16.mxu0 0
        %3014 = vmatpush1.bf16.msra.mxu0 0
        %3015 = vmatprep.subr.bf16.mxu0 0
        %3016 = vmatpush1.bf16.msra.mxu0 0
        %3017 = vmatprep.subr.bf16.mxu0 0
        %3018 = vmatpush1.bf16.msra.mxu0 0
        %3019 = vmatprep.subr.bf16.mxu0 0
        %3020 = vmatpush1.bf16.msra.mxu0 0
        %3021 = vmatprep.mubr.bf16.mxu0 0
        %3022 = vmatmul.mubr.bf16.gmra.mrb[0].mxu0 %v2987
        %v3023 = vpop.f32.mrb[0].mxu0
        %v3024 = vadd.f32 0.0, %v3023
        %v3025 = vpop.f32.mrb[0].mxu0
        %v3026 = vpop.f32.mrb[0].mxu0
        %v3027 = vadd.f32 0.0, %v3026
        %v3028 = vpop.f32.mrb[0].mxu0
        %3029 = vdwg.mxu0
        %v3030 = vld [vmem:[#allocation3 + $0x58] sm:$0xff]
        %3031 = vrot.lane.b32.xlu0 %v1346, 40
        %v3032 = vpop.permute.xlu0 %3031
        %3033 = vrot.lane.b32.xlu0 %v1347, 40
        %v3034 = vpop.permute.xlu0 %3033
        %v3035 = vsel %vm1349, %v3032, 0
        %v3037 = vsel %vm1349, %v3034, 0
        %3039 = vmatprep.subr.mxu0 0.0
        %3040 = vmatpush1.msra.mxu0 %v3030
        %3041 = vmatprep.subr.mxu0 0.0
        %3042 = vmatpush1.msra.mxu0 0.0
        %3043 = vmatprep.subr.mxu0 0.0
        %3044 = vmatpush1.msra.mxu0 0.0
        %3045 = vmatprep.subr.mxu0 0.0
        %3046 = vmatpush1.msra.mxu0 0.0
        %3047 = vmatprep.subr.mxu0 0.0
        %3048 = vmatpush1.msra.mxu0 0.0
        %3049 = vmatprep.subr.mxu0 0.0
        %3050 = vmatpush1.msra.mxu0 0.0
        %3051 = vmatprep.subr.mxu0 0.0
        %3052 = vmatpush1.msra.mxu0 0.0
        %3053 = vmatprep.subr.mxu0 0.0
        %3054 = vmatpush1.msra.mxu0 0.0
        %3055 = vmatprep.subr.mxu0 0.0
        %3056 = vmatpush1.msra.mxu0 0.0
        %3057 = vmatprep.subr.mxu0 0.0
        %3058 = vmatpush1.msra.mxu0 0.0
        %3059 = vmatprep.subr.mxu0 0.0
        %3060 = vmatpush1.msra.mxu0 0.0
        %3061 = vmatprep.subr.mxu0 0.0
        %3062 = vmatpush1.msra.mxu0 0.0
        %3063 = vmatprep.subr.mxu0 0.0
        %3064 = vmatpush1.msra.mxu0 0.0
        %3065 = vmatprep.subr.mxu0 0.0
        %3066 = vmatpush1.msra.mxu0 0.0
        %3067 = vmatprep.subr.mxu0 0.0
        %3068 = vmatpush1.msra.mxu0 0.0
        %3069 = vmatprep.subr.mxu0 0.0
        %3070 = vmatpush1.msra.mxu0 0.0
        %3071 = vmatprep.subr.mxu0 0.0
        %3072 = vmatpush1.msra.mxu0 0.0
        %3073 = vmatprep.subr.mxu0 0.0
        %3074 = vmatpush1.msra.mxu0 0.0
        %3075 = vmatprep.subr.mxu0 0.0
        %3076 = vmatpush1.msra.mxu0 0.0
        %3077 = vmatprep.subr.mxu0 0.0
        %3078 = vmatpush1.msra.mxu0 0.0
        %3079 = vmatprep.subr.mxu0 0.0
        %3080 = vmatpush1.msra.mxu0 0.0
        %3081 = vmatprep.subr.mxu0 0.0
        %3082 = vmatpush1.msra.mxu0 0.0
        %3083 = vmatprep.subr.mxu0 0.0
        %3084 = vmatpush1.msra.mxu0 0.0
        %3085 = vmatprep.subr.mxu0 0.0
        %3086 = vmatpush1.msra.mxu0 0.0
        %3087 = vmatprep.subr.mxu0 0.0
        %3088 = vmatpush1.msra.mxu0 0.0
        %3089 = vmatprep.subr.mxu0 0.0
        %3090 = vmatpush1.msra.mxu0 0.0
        %3091 = vmatprep.subr.mxu0 0.0
        %3092 = vmatpush1.msra.mxu0 0.0
        %3093 = vmatprep.subr.mxu0 0.0
        %3094 = vmatpush1.msra.mxu0 0.0
        %3095 = vmatprep.subr.mxu0 0.0
        %3096 = vmatpush1.msra.mxu0 0.0
        %3097 = vmatprep.subr.mxu0 0.0
        %3098 = vmatpush1.msra.mxu0 0.0
        %3099 = vmatprep.subr.mxu0 0.0
        %3100 = vmatpush1.msra.mxu0 0.0
        %3101 = vmatprep.subr.mxu0 0.0
        %3102 = vmatpush1.msra.mxu0 0.0
        %3103 = vmatprep.mubr.f32.mxu0 0.0
        %3104 = vmatmul.mubr.f32.gmra.mrb[0].mxu0 %v3035
        %v3105 = vpop.f32.mrb[0].mxu0
        %v3106 = vadd.f32 0.0, %v3105
        %v3107 = vpop.f32.mrb[0].mxu0
        %3108 = vmatprep.mubr.f32.mxu0 0.0
        %3109 = vmatmul.mubr.f32.gmra.mrb[0].mxu0 %v3037
        %v3110 = vpop.f32.mrb[0].mxu0
        %v3111 = vadd.f32 0.0, %v3110
        %v3112 = vpop.f32.mrb[0].mxu0
        %3113 = vdwg.mxu0
        %v3114 = vsel %vm1431, %v3106, -inf
        %3115 = vmax.xlane.f32.xlu0 %v3114
        %v3116 = vpop.xlane.xlu0 %3115
        %v3117 = vsel %vm1431, %v3111, -inf
        %3118 = vmax.xlane.f32.xlu0 %v3117
        %v3119 = vpop.xlane.xlu0 %3118
        %v3120 = vsub.f32 %v3106, %v3116
        %v3121 = vsub.f32 %v3111, %v3119
        %v3122 = vmul.f32 %v3120, 1.442695
        %v3123 = vpow.pop %v3122
        %v3124 = vmul.f32 %v3121, 1.442695
        %v3125 = vpow.pop %v3124
        %v3126 = vsel %vm1431, %v3123, 0.0
        %3127 = vadd.xlane.f32.xlu0 %v3126
        %v3128 = vpop.xlane.xlu0 %3127
        %v3129 = vsel %vm1431, %v3125, 0.0
        %3130 = vadd.xlane.f32.xlu0 %v3129
        %v3131 = vpop.xlane.xlu0 %3130
        %v3132 = vrcp.pop %v3128
        %v3133 = vrcp.pop %v3131
        %v3134 = vmul.f32 %v3123, %v3132
        %v3135 = vmul.f32 %v3125, %v3133
        %v3136 = vpack.c.bf16 %v3135, %v3134
        %s3137 = scalar_lea.vmem [#allocation4], 88
        %v3138 = vld [vmem:[%s3137] sm:$0xff]
        %v3140 = vsel %vm1431, %v3136, 0
        %3142 = vmatprep.subr.bf16.mxu0 0
        %3143 = vmatpush1.bf16.msra.mxu0 %v3138
        %3144 = vmatprep.subr.bf16.mxu0 0
        %3145 = vmatpush1.bf16.msra.mxu0 0
        %3146 = vmatprep.subr.bf16.mxu0 0
        %3147 = vmatpush1.bf16.msra.mxu0 0
        %3148 = vmatprep.subr.bf16.mxu0 0
        %3149 = vmatpush1.bf16.msra.mxu0 0
        %3150 = vmatprep.subr.bf16.mxu0 0
        %3151 = vmatpush1.bf16.msra.mxu0 0
        %3152 = vmatprep.subr.bf16.mxu0 0
        %3153 = vmatpush1.bf16.msra.mxu0 0
        %3154 = vmatprep.subr.bf16.mxu0 0
        %3155 = vmatpush1.bf16.msra.mxu0 0
        %3156 = vmatprep.subr.bf16.mxu0 0
        %3157 = vmatpush1.bf16.msra.mxu0 0
        %3158 = vmatprep.subr.bf16.mxu0 0
        %3159 = vmatpush1.bf16.msra.mxu0 0
        %3160 = vmatprep.subr.bf16.mxu0 0
        %3161 = vmatpush1.bf16.msra.mxu0 0
        %3162 = vmatprep.subr.bf16.mxu0 0
        %3163 = vmatpush1.bf16.msra.mxu0 0
        %3164 = vmatprep.subr.bf16.mxu0 0
        %3165 = vmatpush1.bf16.msra.mxu0 0
        %3166 = vmatprep.subr.bf16.mxu0 0
        %3167 = vmatpush1.bf16.msra.mxu0 0
        %3168 = vmatprep.subr.bf16.mxu0 0
        %3169 = vmatpush1.bf16.msra.mxu0 0
        %3170 = vmatprep.subr.bf16.mxu0 0
        %3171 = vmatpush1.bf16.msra.mxu0 0
        %3172 = vmatprep.subr.bf16.mxu0 0
        %3173 = vmatpush1.bf16.msra.mxu0 0
        %3174 = vmatprep.mubr.bf16.mxu0 0
        %3175 = vmatmul.mubr.bf16.gmra.mrb[0].mxu0 %v3140
        %v3176 = vpop.f32.mrb[0].mxu0
        %v3177 = vadd.f32 0.0, %v3176
        %v3178 = vpop.f32.mrb[0].mxu0
        %v3179 = vpop.f32.mrb[0].mxu0
        %v3180 = vadd.f32 0.0, %v3179
        %v3181 = vpop.f32.mrb[0].mxu0
        %3182 = vdwg.mxu0
        %3185 = vrot.lane.b32.xlu0 %v1647, 8
        %v3186 = vpop.permute.xlu0 %3185
        %3187 = vrot.lane.b32.xlu0 %v1650, 8
        %v3188 = vpop.permute.xlu0 %3187
        %3193 = vrot.lane.b32.xlu0 %v1800, 16
        %v3194 = vpop.permute.xlu0 %3193
        %3195 = vrot.lane.b32.xlu0 %v1803, 16
        %v3196 = vpop.permute.xlu0 %3195
        %3201 = vrot.lane.b32.xlu0 %v1953, 24
        %v3202 = vpop.permute.xlu0 %3201
        %3203 = vrot.lane.b32.xlu0 %v1956, 24
        %v3204 = vpop.permute.xlu0 %3203
        %3209 = vrot.lane.b32.xlu0 %v2106, 32
        %v3210 = vpop.permute.xlu0 %3209
        %3211 = vrot.lane.b32.xlu0 %v2109, 32
        %v3212 = vpop.permute.xlu0 %3211
        %3217 = vrot.lane.b32.xlu0 %v2259, 40
        %v3218 = vpop.permute.xlu0 %3217
        %3219 = vrot.lane.b32.xlu0 %v2262, 40
        %v3220 = vpop.permute.xlu0 %3219
        %3225 = vrot.lane.b32.xlu0 %v2412, 48
        %v3226 = vpop.permute.xlu0 %3225
        %3227 = vrot.lane.b32.xlu0 %v2415, 48
        %v3228 = vpop.permute.xlu0 %3227
        %3233 = vrot.lane.b32.xlu0 %v2565, 56
        %v3234 = vpop.permute.xlu0 %3233
        %3235 = vrot.lane.b32.xlu0 %v2568, 56
        %v3236 = vpop.permute.xlu0 %3235
        %3241 = vrot.lane.b32.xlu0 %v2718, 64
        %v3242 = vpop.permute.xlu0 %3241
        %3243 = vrot.lane.b32.xlu0 %v2721, 64
        %v3244 = vpop.permute.xlu0 %3243
        %3249 = vrot.lane.b32.xlu0 %v2871, 72
        %v3250 = vpop.permute.xlu0 %3249
        %3251 = vrot.lane.b32.xlu0 %v2874, 72
        %v3252 = vpop.permute.xlu0 %3251
        %3257 = vrot.lane.b32.xlu0 %v3024, 80
        %v3258 = vpop.permute.xlu0 %3257
        %3259 = vrot.lane.b32.xlu0 %v3027, 80
        %v3260 = vpop.permute.xlu0 %3259
        %3265 = vrot.lane.b32.xlu0 %v3177, 88
        %v3266 = vpop.permute.xlu0 %3265
        %3267 = vrot.lane.b32.xlu0 %v3180, 88
        %v3268 = vpop.permute.xlu0 %3267
        %v3271 = vsel %vm1349, %v1494, %v3186
        %v3272 = vsel %vm1349, %v1497, %v3188
        %v3273 = vsel %vm1431, %v3271, %v3194
        %v3274 = vsel %vm1431, %v3272, %v3196
        %vm3275 = vcmask 195584
        %v3276 = vsel %vm3275, %v3273, %v3202
        %v3277 = vsel %vm3275, %v3274, %v3204
        %vm3278 = vcmask 261120
        %v3279 = vsel %vm3278, %v3276, %v3210
        %v3280 = vsel %vm3278, %v3277, %v3212
        %vm3281 = vcmask 326656
        %v3282 = vsel %vm3281, %v3279, %v3218
        %v3283 = vsel %vm3281, %v3280, %v3220
        %vm3284 = vcmask 392192
        %v3285 = vsel %vm3284, %v3282, %v3226
        %v3286 = vsel %vm3284, %v3283, %v3228
        %vm3287 = vcmask 457728
        %v3288 = vsel %vm3287, %v3285, %v3234
        %v3289 = vsel %vm3287, %v3286, %v3236
        %vm3290 = vcmask 523264
        %v3291 = vsel %vm3290, %v3288, %v3242
        %v3292 = vsel %vm3290, %v3289, %v3244
        %vm3293 = vcmask 588800
        %v3294 = vsel %vm3293, %v3291, %v3250
        %v3295 = vsel %vm3293, %v3292, %v3252
        %vm3296 = vcmask 654336
        %v3297 = vsel %vm3296, %v3294, %v3258
        %v3298 = vsel %vm3296, %v3295, %v3260
        %vm3299 = vcmask 719872
        %v3300 = vsel %vm3299, %v3297, %v3266
        %v3301 = vsel %vm3299, %v3298, %v3268
        %v3302 = vpack.c.bf16 %v3301, %v3300
        %v3303 = vld [vmem:[%s750] sm:$0xf]
        %v3304 = vld [vmem:[%s750 + $0x4] sm:$0xf]
        %v3305 = vld [vmem:[%s750 + $0x8] sm:$0xf]
        %v3306 = vld [vmem:[%s750 + $0xc] sm:$0xf]
        %v3307 = vld [vmem:[%s750 + $0x10] sm:$0xf]
        %v3308 = vld [vmem:[%s750 + $0x14] sm:$0xf]
        %v3309 = vld [vmem:[%s750 + $0x18] sm:$0xf]
        %v3310 = vld [vmem:[%s750 + $0x1c] sm:$0xf]
        %v3311 = vld [vmem:[%s750 + $0x20] sm:$0xf]
        %v3312 = vld [vmem:[%s750 + $0x24] sm:$0xf]
        %v3313 = vld [vmem:[%s750 + $0x28] sm:$0xf]
        %v3314 = vld [vmem:[%s750 + $0x2c] sm:$0xf]
        %v3315 = vld [vmem:[%s890] sm:$0x1]
        %v3317 = vlaneseq
        %v3318 = vshrl.u32 %v3317, 7
        %v3319 = vsub.s32 0, %v3318
        %v3320 = vrot.slane %v3315, %v3319
        %v3334 = vunpack.c.l.b16 %v3303
        %v3335 = vunpack.c.l.b16 %v3304
        %v3336 = vunpack.c.l.b16 %v3305
        %v3337 = vunpack.c.l.b16 %v3306
        %v3338 = vunpack.c.l.b16 %v3307
        %v3339 = vunpack.c.l.b16 %v3308
        %v3340 = vunpack.c.l.b16 %v3309
        %v3341 = vunpack.c.l.b16 %v3310
        %v3342 = vunpack.c.l.b16 %v3311
        %v3343 = vunpack.c.l.b16 %v3312
        %v3344 = vunpack.c.l.b16 %v3313
        %v3345 = vunpack.c.l.b16 %v3314
        %v3346 = vpack.c.b16 %v3335, %v3334
        %v3347 = vpack.c.b16 %v3337, %v3336
        %v3348 = vpack.c.b16 %v3339, %v3338
        %v3349 = vpack.c.b16 %v3341, %v3340
        %v3350 = vpack.c.b16 %v3343, %v3342
        %v3351 = vpack.c.b16 %v3345, %v3344
        %v3359 = vsel %vm1301, %v3302, 0
        %3361 = vmatprep.subr.bf16.mxu0 0
        %3362 = vmatpush1.bf16.msra.mxu0 %v3346
        %3363 = vmatprep.subr.bf16.mxu0 0
        %3364 = vmatpush1.bf16.msra.mxu0 %v3347
        %3365 = vmatprep.subr.bf16.mxu0 0
        %3366 = vmatpush1.bf16.msra.mxu0 %v3348
        %3367 = vmatprep.subr.bf16.mxu0 0
        %3368 = vmatpush1.bf16.msra.mxu0 %v3349
        %3369 = vmatprep.subr.bf16.mxu0 0
        %3370 = vmatpush1.bf16.msra.mxu0 %v3350
        %3371 = vmatprep.subr.bf16.mxu0 0
        %3372 = vmatpush1.bf16.msra.mxu0 %v3351
        %3373 = vmatprep.subr.bf16.mxu0 0
        %3374 = vmatpush1.bf16.msra.mxu0 0
        %3375 = vmatprep.subr.bf16.mxu0 0
        %3376 = vmatpush1.bf16.msra.mxu0 0
        %3377 = vmatprep.subr.bf16.mxu0 0
        %3378 = vmatpush1.bf16.msra.mxu0 0
        %3379 = vmatprep.subr.bf16.mxu0 0
        %3380 = vmatpush1.bf16.msra.mxu0 0
        %3381 = vmatprep.subr.bf16.mxu0 0
        %3382 = vmatpush1.bf16.msra.mxu0 0
        %3383 = vmatprep.subr.bf16.mxu0 0
        %3384 = vmatpush1.bf16.msra.mxu0 0
        %3385 = vmatprep.subr.bf16.mxu0 0
        %3386 = vmatpush1.bf16.msra.mxu0 0
        %3387 = vmatprep.subr.bf16.mxu0 0
        %3388 = vmatpush1.bf16.msra.mxu0 0
        %3389 = vmatprep.subr.bf16.mxu0 0
        %3390 = vmatpush1.bf16.msra.mxu0 0
        %3391 = vmatprep.subr.bf16.mxu0 0
        %3392 = vmatpush1.bf16.msra.mxu0 0
        %3393 = vmatprep.mubr.bf16.mxu0 0
        %3394 = vmatmul.mubr.bf16.gmra.mrb[0].mxu0 %v3359
        %v3395 = vpop.f32.mrb[0].mxu0
        %v3396 = vadd.f32 %v3320, %v3395
        %v3397 = vpop.f32.mrb[0].mxu0
        %v3398 = vpop.f32.mrb[0].mxu0
        %v3399 = vadd.f32 %v3320, %v3398
        %v3400 = vpop.f32.mrb[0].mxu0
        %3401 = vdwg.mxu0
        %v3402 = vadd.f32 %v1243, %v3396
        %v3403 = vadd.f32 %v1244, %v3399
        %v3404 = vld [vmem:[%s893] sm:$0x1]
        %v3405 = vld [vmem:[%s896] sm:$0x1]
        %v3406 = vsel %vm1301, %v3402, 0.0
        %3407 = vadd.xlane.f32.xlu0 %v3406
        %v3408 = vpop.xlane.xlu0 %3407
        %v3409 = vsel %vm1301, %v3403, 0.0
        %3410 = vadd.xlane.f32.xlu0 %v3409
        %v3411 = vpop.xlane.xlu0 %3410
        %v3412 = vrcp.pop 96.0
        %v3413 = vmul.f32 %v3408, %v3412
        %v3414 = vmul.f32 %v3411, %v3412
        %v3415 = vsub.f32 %v3402, %v3413
        %v3416 = vsub.f32 %v3403, %v3414
        %v3417 = vmul.f32 %v3415, %v3415
        %v3418 = vmul.f32 %v3416, %v3416
        %v3419 = vsel %vm1301, %v3417, 0.0
        %3420 = vadd.xlane.f32.xlu0 %v3419
        %v3421 = vpop.xlane.xlu0 %3420
        %v3422 = vsel %vm1301, %v3418, 0.0
        %3423 = vadd.xlane.f32.xlu0 %v3422
        %v3424 = vpop.xlane.xlu0 %3423
        %v3425 = vmul.f32 %v3421, %v3412
        %v3426 = vmul.f32 %v3424, %v3412
        %v3427 = vadd.f32 %v3425, 1e-05
        %v3428 = vadd.f32 %v3426, 1e-05
        %v3429 = vrsqrt.pop %v3427
        %v3430 = vrsqrt.pop %v3428
        %v3431 = vmul.f32 %v3415, %v3429
        %v3432 = vmul.f32 %v3416, %v3430
        %v3434 = vlaneseq
        %v3435 = vshrl.u32 %v3434, 7
        %v3436 = vsub.s32 0, %v3435
        %v3437 = vrot.slane %v3404, %v3436
        %v3439 = vmul.f32 %v3431, %v3437
        %v3440 = vmul.f32 %v3432, %v3437
        %v3442 = vlaneseq
        %v3443 = vshrl.u32 %v3442, 7
        %v3444 = vsub.s32 0, %v3443
        %v3445 = vrot.slane %v3405, %v3444
        %v3447 = vadd.f32 %v3439, %v3445
        %v3448 = vadd.f32 %v3440, %v3445
        %v3449 = vpack.c.bf16 %v3448, %v3447
        %v3450 = vld [vmem:[%s907] sm:$0xff]
        %v3451 = vld [vmem:[%s907 + $0x8] sm:$0xff]
        %v3452 = vld [vmem:[%s907 + $0x10] sm:$0xff]
        %v3453 = vld [vmem:[%s907 + $0x18] sm:$0xff]
        %v3454 = vld [vmem:[%s907 + $0x20] sm:$0xff]
        %v3455 = vld [vmem:[%s907 + $0x28] sm:$0xff]
        %v3456 = vld [vmem:[%s907 + $0x30] sm:$0xff]
        %v3457 = vld [vmem:[%s907 + $0x38] sm:$0xff]
        %v3458 = vld [vmem:[%s907 + $0x40] sm:$0xff]
        %v3459 = vld [vmem:[%s907 + $0x48] sm:$0xff]
        %v3460 = vld [vmem:[%s907 + $0x50] sm:$0xff]
        %v3461 = vld [vmem:[%s907 + $0x58] sm:$0xff]
        %v3462 = vld [vmem:[%s911] sm:$0x3]
        %v3464 = vlaneseq
        %v3465 = vshrl.u32 %v3464, 7
        %v3466 = vsub.s32 0, %v3465
        %v3467 = vrot.slane %v3462, %v3466
        %v3468 = vlaneseq
        %v3469 = vshrl.u32 %v3468, 7
        %v3470 = vsub.s32 1, %v3469
        %v3471 = vrot.slane %v3462, %v3470
        %v3486 = vunpack.c.l.b16 %v3450
        %v3487 = vunpack.c.h.b16 %v3450
        %v3488 = vunpack.c.l.b16 %v3451
        %v3489 = vunpack.c.h.b16 %v3451
        %v3490 = vunpack.c.l.b16 %v3452
        %v3491 = vunpack.c.h.b16 %v3452
        %v3492 = vunpack.c.l.b16 %v3453
        %v3493 = vunpack.c.h.b16 %v3453
        %v3494 = vunpack.c.l.b16 %v3454
        %v3495 = vunpack.c.h.b16 %v3454
        %v3496 = vunpack.c.l.b16 %v3455
        %v3497 = vunpack.c.h.b16 %v3455
        %v3498 = vunpack.c.l.b16 %v3456
        %v3499 = vunpack.c.h.b16 %v3456
        %v3500 = vunpack.c.l.b16 %v3457
        %v3501 = vunpack.c.h.b16 %v3457
        %v3502 = vunpack.c.l.b16 %v3458
        %v3503 = vunpack.c.h.b16 %v3458
        %v3504 = vunpack.c.l.b16 %v3459
        %v3505 = vunpack.c.h.b16 %v3459
        %v3506 = vunpack.c.l.b16 %v3460
        %v3507 = vunpack.c.h.b16 %v3460
        %v3508 = vunpack.c.l.b16 %v3461
        %v3509 = vunpack.c.h.b16 %v3461
        %v3510 = vpack.c.b16 %v3488, %v3486
        %v3511 = vpack.c.b16 %v3489, %v3487
        %v3512 = vpack.c.b16 %v3492, %v3490
        %v3513 = vpack.c.b16 %v3493, %v3491
        %v3514 = vpack.c.b16 %v3496, %v3494
        %v3515 = vpack.c.b16 %v3497, %v3495
        %v3516 = vpack.c.b16 %v3500, %v3498
        %v3517 = vpack.c.b16 %v3501, %v3499
        %v3518 = vpack.c.b16 %v3504, %v3502
        %v3519 = vpack.c.b16 %v3505, %v3503
        %v3520 = vpack.c.b16 %v3508, %v3506
        %v3521 = vpack.c.b16 %v3509, %v3507
        %v3535 = vsel %vm1301, %v3449, 0
        %3537 = vmatprep.subr.bf16.mxu0 %v3511
        %3538 = vmatpush1.bf16.msra.mxu0 %v3510
        %3539 = vmatprep.subr.bf16.mxu0 %v3513
        %3540 = vmatpush1.bf16.msra.mxu0 %v3512
        %3541 = vmatprep.subr.bf16.mxu0 %v3515
        %3542 = vmatpush1.bf16.msra.mxu0 %v3514
        %3543 = vmatprep.subr.bf16.mxu0 %v3517
        %3544 = vmatpush1.bf16.msra.mxu0 %v3516
        %3545 = vmatprep.subr.bf16.mxu0 %v3519
        %3546 = vmatpush1.bf16.msra.mxu0 %v3518
        %3547 = vmatprep.subr.bf16.mxu0 %v3521
        %3548 = vmatpush1.bf16.msra.mxu0 %v3520
        %3549 = vmatprep.subr.bf16.mxu0 0
        %3550 = vmatpush1.bf16.msra.mxu0 0
        %3551 = vmatprep.subr.bf16.mxu0 0
        %3552 = vmatpush1.bf16.msra.mxu0 0
        %3553 = vmatprep.subr.bf16.mxu0 0
        %3554 = vmatpush1.bf16.msra.mxu0 0
        %3555 = vmatprep.subr.bf16.mxu0 0
        %3556 = vmatpush1.bf16.msra.mxu0 0
        %3557 = vmatprep.subr.bf16.mxu0 0
        %3558 = vmatpush1.bf16.msra.mxu0 0
        %3559 = vmatprep.subr.bf16.mxu0 0
        %3560 = vmatpush1.bf16.msra.mxu0 0
        %3561 = vmatprep.subr.bf16.mxu0 0
        %3562 = vmatpush1.bf16.msra.mxu0 0
        %3563 = vmatprep.subr.bf16.mxu0 0
        %3564 = vmatpush1.bf16.msra.mxu0 0
        %3565 = vmatprep.subr.bf16.mxu0 0
        %3566 = vmatpush1.bf16.msra.mxu0 0
        %3567 = vmatprep.subr.bf16.mxu0 0
        %3568 = vmatpush1.bf16.msra.mxu0 0
        %3569 = vmatprep.mubr.bf16.mxu0 0
        %3570 = vmatmul.mubr.bf16.gmra.mrb[0].mxu0 %v3535
        %v3571 = vpop.f32.mrb[0].mxu0
        %v3572 = vadd.f32 %v3467, %v3571
        %v3573 = vpop.f32.mrb[0].mxu0
        %v3574 = vadd.f32 %v3471, %v3573
        %v3575 = vpop.f32.mrb[0].mxu0
        %v3576 = vadd.f32 %v3467, %v3575
        %v3577 = vpop.f32.mrb[0].mxu0
        %v3578 = vadd.f32 %v3471, %v3577
        %3579 = vdwg.mxu0
        %v3580 = vmax.f32 %v3572, 0.0
        %v3581 = vmax.f32 %v3574, 0.0
        %v3582 = vmax.f32 %v3576, 0.0
        %v3583 = vmax.f32 %v3578, 0.0
        %v3584 = vpack.c.bf16 %v3582, %v3580
        %v3585 = vpack.c.bf16 %v3583, %v3581
        %v3586 = vld [vmem:[%s916] sm:$0xf]
        %v3587 = vld [vmem:[%s916 + $0x4] sm:$0xf]
        %v3588 = vld [vmem:[%s916 + $0x8] sm:$0xf]
        %v3589 = vld [vmem:[%s916 + $0xc] sm:$0xf]
        %v3590 = vld [vmem:[%s916 + $0x10] sm:$0xf]
        %v3591 = vld [vmem:[%s916 + $0x14] sm:$0xf]
        %v3592 = vld [vmem:[%s916 + $0x18] sm:$0xf]
        %v3593 = vld [vmem:[%s916 + $0x1c] sm:$0xf]
        %v3594 = vld [vmem:[%s916 + $0x20] sm:$0xf]
        %v3595 = vld [vmem:[%s916 + $0x24] sm:$0xf]
        %v3596 = vld [vmem:[%s916 + $0x28] sm:$0xf]
        %v3597 = vld [vmem:[%s916 + $0x2c] sm:$0xf]
        %v3598 = vld [vmem:[%s916 + $0x30] sm:$0xf]
        %v3599 = vld [vmem:[%s916 + $0x34] sm:$0xf]
        %v3600 = vld [vmem:[%s916 + $0x38] sm:$0xf]
        %v3601 = vld [vmem:[%s916 + $0x3c] sm:$0xf]
        %v3602 = vld [vmem:[%s916 + $0x40] sm:$0xf]
        %v3603 = vld [vmem:[%s916 + $0x44] sm:$0xf]
        %v3604 = vld [vmem:[%s916 + $0x48] sm:$0xf]
        %v3605 = vld [vmem:[%s916 + $0x4c] sm:$0xf]
        %v3606 = vld [vmem:[%s916 + $0x50] sm:$0xf]
        %v3607 = vld [vmem:[%s916 + $0x54] sm:$0xf]
        %v3608 = vld [vmem:[%s916 + $0x58] sm:$0xf]
        %v3609 = vld [vmem:[%s916 + $0x5c] sm:$0xf]
        %v3610 = vld [vmem:[%s916 + $0x60] sm:$0xf]
        %v3611 = vld [vmem:[%s916 + $0x64] sm:$0xf]
        %v3612 = vld [vmem:[%s916 + $0x68] sm:$0xf]
        %v3613 = vld [vmem:[%s916 + $0x6c] sm:$0xf]
        %v3614 = vld [vmem:[%s916 + $0x70] sm:$0xf]
        %v3615 = vld [vmem:[%s916 + $0x74] sm:$0xf]
        %v3616 = vld [vmem:[%s916 + $0x78] sm:$0xf]
        %v3617 = vld [vmem:[%s916 + $0x7c] sm:$0xf]
        %v3618 = vld [vmem:[%s919] sm:$0x1]
        %v3620 = vlaneseq
        %v3621 = vshrl.u32 %v3620, 7
        %v3622 = vsub.s32 0, %v3621
        %v3623 = vrot.slane %v3618, %v3622
        %v3657 = vunpack.c.l.b16 %v3586
        %v3658 = vunpack.c.l.b16 %v3587
        %v3659 = vunpack.c.l.b16 %v3588
        %v3660 = vunpack.c.l.b16 %v3589
        %v3661 = vunpack.c.l.b16 %v3590
        %v3662 = vunpack.c.l.b16 %v3591
        %v3663 = vunpack.c.l.b16 %v3592
        %v3664 = vunpack.c.l.b16 %v3593
        %v3665 = vunpack.c.l.b16 %v3594
        %v3666 = vunpack.c.l.b16 %v3595
        %v3667 = vunpack.c.l.b16 %v3596
        %v3668 = vunpack.c.l.b16 %v3597
        %v3669 = vunpack.c.l.b16 %v3598
        %v3670 = vunpack.c.l.b16 %v3599
        %v3671 = vunpack.c.l.b16 %v3600
        %v3672 = vunpack.c.l.b16 %v3601
        %v3673 = vunpack.c.l.b16 %v3602
        %v3674 = vunpack.c.l.b16 %v3603
        %v3675 = vunpack.c.l.b16 %v3604
        %v3676 = vunpack.c.l.b16 %v3605
        %v3677 = vunpack.c.l.b16 %v3606
        %v3678 = vunpack.c.l.b16 %v3607
        %v3679 = vunpack.c.l.b16 %v3608
        %v3680 = vunpack.c.l.b16 %v3609
        %v3681 = vunpack.c.l.b16 %v3610
        %v3682 = vunpack.c.l.b16 %v3611
        %v3683 = vunpack.c.l.b16 %v3612
        %v3684 = vunpack.c.l.b16 %v3613
        %v3685 = vunpack.c.l.b16 %v3614
        %v3686 = vunpack.c.l.b16 %v3615
        %v3687 = vunpack.c.l.b16 %v3616
        %v3688 = vunpack.c.l.b16 %v3617
        %v3689 = vpack.c.b16 %v3658, %v3657
        %v3690 = vpack.c.b16 %v3660, %v3659
        %v3691 = vpack.c.b16 %v3662, %v3661
        %v3692 = vpack.c.b16 %v3664, %v3663
        %v3693 = vpack.c.b16 %v3666, %v3665
        %v3694 = vpack.c.b16 %v3668, %v3667
        %v3695 = vpack.c.b16 %v3670, %v3669
        %v3696 = vpack.c.b16 %v3672, %v3671
        %v3697 = vpack.c.b16 %v3674, %v3673
        %v3698 = vpack.c.b16 %v3676, %v3675
        %v3699 = vpack.c.b16 %v3678, %v3677
        %v3700 = vpack.c.b16 %v3680, %v3679
        %v3701 = vpack.c.b16 %v3682, %v3681
        %v3702 = vpack.c.b16 %v3684, %v3683
        %v3703 = vpack.c.b16 %v3686, %v3685
        %v3704 = vpack.c.b16 %v3688, %v3687
        %3721 = vmatprep.subr.bf16.mxu0 0
        %3722 = vmatpush1.bf16.msra.mxu0 %v3689
        %3723 = vmatprep.subr.bf16.mxu0 0
        %3724 = vmatpush1.bf16.msra.mxu0 %v3690
        %3725 = vmatprep.subr.bf16.mxu0 0
        %3726 = vmatpush1.bf16.msra.mxu0 %v3691
        %3727 = vmatprep.subr.bf16.mxu0 0
        %3728 = vmatpush1.bf16.msra.mxu0 %v3692
        %3729 = vmatprep.subr.bf16.mxu0 0
        %3730 = vmatpush1.bf16.msra.mxu0 %v3693
        %3731 = vmatprep.subr.bf16.mxu0 0
        %3732 = vmatpush1.bf16.msra.mxu0 %v3694
        %3733 = vmatprep.subr.bf16.mxu0 0
        %3734 = vmatpush1.bf16.msra.mxu0 %v3695
        %3735 = vmatprep.subr.bf16.mxu0 0
        %3736 = vmatpush1.bf16.msra.mxu0 %v3696
        %3737 = vmatprep.subr.bf16.mxu0 0
        %3738 = vmatpush1.bf16.msra.mxu0 %v3697
        %3739 = vmatprep.subr.bf16.mxu0 0
        %3740 = vmatpush1.bf16.msra.mxu0 %v3698
        %3741 = vmatprep.subr.bf16.mxu0 0
        %3742 = vmatpush1.bf16.msra.mxu0 %v3699
        %3743 = vmatprep.subr.bf16.mxu0 0
        %3744 = vmatpush1.bf16.msra.mxu0 %v3700
        %3745 = vmatprep.subr.bf16.mxu0 0
        %3746 = vmatpush1.bf16.msra.mxu0 %v3701
        %3747 = vmatprep.subr.bf16.mxu0 0
        %3748 = vmatpush1.bf16.msra.mxu0 %v3702
        %3749 = vmatprep.subr.bf16.mxu0 0
        %3750 = vmatpush1.bf16.msra.mxu0 %v3703
        %3751 = vmatprep.subr.bf16.mxu0 0
        %3752 = vmatpush1.bf16.msra.mxu0 %v3704
        %3753 = vmatprep.mubr.bf16.mxu0 %v3585
        %3754 = vmatmul.mubr.bf16.gmra.mrb[0].mxu0 %v3584
        %v3755 = vpop.f32.mrb[0].mxu0
        %v3756 = vadd.f32 %v3623, %v3755
        %v3757 = vpop.f32.mrb[0].mxu0
        %v3758 = vpop.f32.mrb[0].mxu0
        %v3759 = vadd.f32 %v3623, %v3758
        %v3760 = vpop.f32.mrb[0].mxu0
        %3761 = vdwg.mxu0
        %v3762 = vadd.f32 %v3447, %v3756
        %v3763 = vadd.f32 %v3448, %v3759
        %v3764 = vld [vmem:[%s899] sm:$0x1]
        %v3765 = vld [vmem:[%s902] sm:$0x1]
        %v3766 = vsel %vm1301, %v3762, 0.0
        %3767 = vadd.xlane.f32.xlu0 %v3766
        %v3768 = vpop.xlane.xlu0 %3767
        %v3769 = vsel %vm1301, %v3763, 0.0
        %3770 = vadd.xlane.f32.xlu0 %v3769
        %v3771 = vpop.xlane.xlu0 %3770
        %v3772 = vmul.f32 %v3768, %v3412
        %v3773 = vmul.f32 %v3771, %v3412
        %v3774 = vsub.f32 %v3762, %v3772
        %v3775 = vsub.f32 %v3763, %v3773
        %v3776 = vmul.f32 %v3774, %v3774
        %v3777 = vmul.f32 %v3775, %v3775
        %v3778 = vsel %vm1301, %v3776, 0.0
        %3779 = vadd.xlane.f32.xlu0 %v3778
        %v3780 = vpop.xlane.xlu0 %3779
        %v3781 = vsel %vm1301, %v3777, 0.0
        %3782 = vadd.xlane.f32.xlu0 %v3781
        %v3783 = vpop.xlane.xlu0 %3782
        %v3784 = vmul.f32 %v3780, %v3412
        %v3785 = vmul.f32 %v3783, %v3412
        %v3786 = vadd.f32 %v3784, 1e-05
        %v3787 = vadd.f32 %v3785, 1e-05
        %v3788 = vrsqrt.pop %v3786
        %v3789 = vrsqrt.pop %v3787
        %v3790 = vmul.f32 %v3774, %v3788
        %v3791 = vmul.f32 %v3775, %v3789
        %v3793 = vlaneseq
        %v3794 = vshrl.u32 %v3793, 7
        %v3795 = vsub.s32 0, %v3794
        %v3796 = vrot.slane %v3764, %v3795
        %v3798 = vmul.f32 %v3790, %v3796
        %v3799 = vmul.f32 %v3791, %v3796
        %v3801 = vlaneseq
        %v3802 = vshrl.u32 %v3801, 7
        %v3803 = vsub.s32 0, %v3802
        %v3804 = vrot.slane %v3765, %v3803
        %v3806 = vadd.f32 %v3798, %v3804
        %v3807 = vadd.f32 %v3799, %v3804
        %3808 = vst.msk [vmem:[%s1242] sm:$0xff] %vm1301, %v3806
        %3809 = vst.msk [vmem:[%s1242 + $0x8] sm:$0xff] %vm1301, %v3807
        %p3810 = scmp.eq.s32.totalorder %s44, 3
        %p3811 = pnand %p3810, %p925
        %p3812 = pneg %p3811
        // Predicated region
        $region113: #{tpu_custom_call.1} parent=95 // pred_check
          _
        $region114: #{tpu_custom_call.1} parent=95 // pred_check_branch
          %3814 = sbr.rel (%p3811) target = $region116
        $region115: #{tpu_custom_call.1} parent=95 // pred_region
          %v3815 = vld [vmem:[#allocation2] sm:$0xff]
          %v3816 = vld [vmem:[#allocation2 + $0x8] sm:$0xff]
          %v3817 = vsel %vm1301, %v3815, 0.0
          %v3818 = vsel %vm1301, %v3816, 0.0
          %v3819 = vadd.f32 %v3817, %v3818
          %v3820 = vrot.slane %v3819, 4
          %v3821 = vadd.f32 %v3819, %v3820
          %v3822 = vrot.slane %v3821, 2
          %v3823 = vadd.f32 %v3821, %v3822
          %v3824 = vrot.slane %v3823, 1
          %v3825 = vadd.f32 %v3823, %v3824
          %v3826 = vrcp.pop 16.0
          %v3827 = vmul.f32 %v3825, %v3826
          %v3828 = vld [vmem:[%s17] sm:$0x1]
          %v3829 = vmul.f32 %v3827, %v3828
          %vm3830 = vcmask 778240
          %v3831 = vsel %vm3830, %v3829, 0.0
          %3832 = vadd.xlane.f32.xlu0 %v3831
          %v3833 = vpop.xlane.xlu0 %3832
          %v3834 = vld [vmem:[#allocation5] sm:$0x1]
          %v3835 = vadd.f32 %v3833, %v3834
          %vm3836 = vcmask 0
          %3837 = vst.msk [vmem:[%s922] sm:$0x1] %vm3836, %v3835
        $region116: #{tpu_custom_call.1} parent=95 // pred_fallthru
          _
        %p3838 = scmp.lt.s32.totalorder %s43, 1
        %s3839 = scalar_select %p3838, %s43, 1
        %s3840 = scalar_lea.vmem %s19, %s3839
        // Predicated region
        $region117: #{tpu_custom_call.1} parent=95 // pred_check
          %p3841 = pneg %p559
        $region118: #{tpu_custom_call.1} parent=95 // pred_check_branch
          %3843 = sbr.rel (%p3841) target = $region120
        $region119: #{tpu_custom_call.1} parent=95 // pred_region
          _
        $region120: #{tpu_custom_call.1} parent=95 // pred_fallthru
          _
      $region96: #{tpu_custom_call.1} parent=5 // pred_fallthru
        _
      %p3844 = scmp.le.s32.totalorder 2, %s33
      // Predicated region
      $region121: #{tpu_custom_call.1} parent=5 // pred_check
        %p3845 = pneg %p3844
      $region122: #{tpu_custom_call.1} parent=5 // pred_check_branch
        %3847 = sbr.rel (%p3845) target = $region124
      $region123: #{tpu_custom_call.1} parent=5 // pred_region
        %s3848 = ssub.s32 %s33, 2
        // Predicated region
        $region125: #{tpu_custom_call.1} parent=123 // pred_check
          %p3849 = pneg %p565
        $region126: #{tpu_custom_call.1} parent=123 // pred_check_branch
          %3851 = sbr.rel (%p3849) target = $region128
        $region127: #{tpu_custom_call.1} parent=123 // pred_region
          %p3852 = scmp.lt.s32.totalorder %s46, 1
          %s3853 = scalar_select %p3852, %s46, 1
          %s3854 = scalar_lea.vmem %s19, %s3853
        $region128: #{tpu_custom_call.1} parent=123 // pred_fallthru
          _
      $region124: #{tpu_custom_call.1} parent=5 // pred_fallthru
        _
    $region6: #{tpu_custom_call.1} parent=1 // loop_footer
      %s37 = sadd.s32 1, %s33
    $region7: #{tpu_custom_call.1} parent=1 // loop_footer_branch
      %32 = sbr.rel target = $region3
    $region8: #{tpu_custom_call.1} parent=1 // loop_exit
      _
    %3855 = vsyncpa [#allocation7], 1
    %s3856 = scalar_lea.sflag [#allocation7], 1
    %3857 = vsyncpa %s3856, 1
    %3858 = vsyncpa [#allocation9], 1
    %s3859 = scalar_lea.sflag [#allocation9], 1
    %3860 = vsyncpa %s3859, 1

</llo_original>
